<compile_context>
chip_gen: v5e
topology: v5e:2x2
jax: 0.10.0
libtpu: 0.0.40
codegen_flags: <defaults>
</compile_context>

<pallas_src>
import functools

import jax
import jax.numpy as jnp
from jax.experimental import pallas as pl
from jax.experimental.pallas import tpu as pltpu


_LANES = 128   # vreg lane width / MXU-friendly channel granularity
_LPAD = 8      # sublane-aligned left pad of the W axis inside the VMEM scratch


def _round_up(x, m):
    return (x + m - 1) // m * m


def _device_kind():
    try:
        return jax.devices()[0].device_kind.lower()
    except Exception:  # pragma: no cover - CPU/interpret fallback
        return ""


# --------------------------------------------------------------------------
# Fused Pallas kernel: conv1+bn1+relu -> conv2+bn2+residual+relu
# --------------------------------------------------------------------------
def _basic_block_kernel(x_ref, w1_ref, w2_ref, bias_ref, o_ref, xp_ref, mid_ref,
                        *, fuse_kw):
    """One batch image per grid step.

    x_ref   : (H, W, C)            input image (true channel count C)
    w1_ref  : fused: (3*C,  3*Cp)  | unfused: (3, 3*C,  Cp)   BN1-scaled conv1
    w2_ref  : fused: (3*Cp, 3*Cp)  | unfused: (3, 3*Cp, Cp)   BN2-scaled conv2
    bias_ref: (2, Cp) f32          rows = [bias1, bias2] (folded BN bias)
    o_ref   : (H, W, C)            output image
    xp_ref  : (H+2, wpad, C)       compute-dtype scratch (zero-halo conv1 input)
    mid_ref : (H+2, wpad, Cp)      compute-dtype scratch (zero-halo conv2 input)
    """
    H, W, C = x_ref.shape
    Cp = mid_ref.shape[-1]

    def zero_halo(ref):
        # Interior [1:H+1, _LPAD:_LPAD+W, :] is fully overwritten every step;
        # only the halo needs (re)zeroing.  8-wide column strips keep the
        # stores sublane-aligned.  (Done every step, not only at program_id 0,
        # because with megacore sharding each core owns a private scratch.)
        h2, wp, c = ref.shape
        zr = jnp.zeros((1, wp, c), ref.dtype)
        ref[0:1, :, :] = zr
        ref[h2 - 1:h2, :, :] = zr
        zc = jnp.zeros((h2, _LPAD, c), ref.dtype)
        ref[:, 0:_LPAD, :] = zc
        ref[:, wp - _LPAD:wp, :] = zc

    def conv3x3(src_ref, w_ref, bias):
        # src_ref: (H+2, wpad, K0) zero-halo activations -> (H, W, Cp) f32.
        k0 = src_ref.shape[-1]
        wpad = src_ref.shape[1]
        xv = src_ref[...]                                     # compute dtype
        # Contraction depth K = 3*K0: concat the 3 kh-shifted row windows.
        x_cat = jnp.concatenate([xv[0:H], xv[1:H + 1], xv[2:H + 2]], axis=-1)
        x_flat = x_cat.reshape(H * wpad, 3 * k0)
        if fuse_kw:
            # One (M, K) x (K, 3*Cp) matmul fills the 256-wide MXU on v6e/v7x;
            # slice each kw tap's Cp column block at its kw offset and add.
            r = jnp.dot(x_flat, w_ref[...],
                        preferred_element_type=jnp.float32
                        ).reshape(H, wpad, 3 * Cp)
            acc = (r[:, _LPAD - 1:_LPAD - 1 + W, 0:Cp]
                   + r[:, _LPAD:_LPAD + W, Cp:2 * Cp]
                   + r[:, _LPAD + 1:_LPAD + 1 + W, 2 * Cp:3 * Cp])
        else:
            # v5e path: 3 matmuls (N=128 already fills the 128-wide MXU);
            # slice to W columns and accumulate in-loop (no full-width temps).
            acc = None
            for kw in range(3):
                off = _LPAD - 1 + kw
                p = jnp.dot(x_flat, w_ref[kw],
                            preferred_element_type=jnp.float32
                            ).reshape(H, wpad, Cp)[:, off:off + W, :]
                acc = p if acc is None else acc + p
        return acc + bias

    b1 = bias_ref[0:1, :].reshape(1, 1, Cp)
    b2 = bias_ref[1:2, :].reshape(1, 1, Cp)

    x_in = x_ref[...]                                         # (H, W, C), VMEM

    # Stage the input into the compute-dtype scratch (aligned interior).
    zero_halo(xp_ref)
    xp_ref[1:H + 1, _LPAD:_LPAD + W, :] = x_in.astype(xp_ref.dtype)

    # conv1 (BN1 scale folded into weights) + bias + relu; stays VMEM-resident.
    a1 = jnp.maximum(conv3x3(xp_ref, w1_ref, b1), 0.0)        # (H, W, Cp) f32
    zero_halo(mid_ref)
    mid_ref[1:H + 1, _LPAD:_LPAD + W, :] = a1.astype(mid_ref.dtype)

    # conv2 (BN2 scale folded) + bias + residual + relu.
    a2 = conv3x3(mid_ref, w2_ref, b2)                         # (H, W, Cp) f32
    out = jnp.maximum(a2[:, :, 0:C] + x_in.astype(jnp.float32), 0.0)
    o_ref[...] = out.astype(o_ref.dtype)


# --------------------------------------------------------------------------
# Wrappers
# --------------------------------------------------------------------------
def _fold_bn(gamma, beta, mean, var, eps=1e-5):
    scale = gamma / jnp.sqrt(var + eps)
    bias = beta - mean * scale
    return scale, bias


def _prep_conv_weights(w, bn_scale, cin_pad, cout_pad, dtype, fuse_kw):
    """HWIO (3,3,Cin,Cout) with BN scale folded per output channel.

    fuse_kw=True  -> (3*cin_pad, 3*cout_pad), columns grouped by kw tap.
    fuse_kw=False -> (3, 3*cin_pad, cout_pad), leading axis = kw tap.
    In both layouts row index = kh*cin_pad + ci (matches x_cat row order).
    """
    _, _, cin, cout = w.shape
    w = w * bn_scale                         # fold BN scale (free, host/XLA)
    wp = jnp.pad(w, ((0, 0), (0, 0), (0, cin_pad - cin), (0, cout_pad - cout)))
    if fuse_kw:
        # (kh, kw, ci, co) -> (kh, ci, kw, co) -> (3*cin_pad, 3*cout_pad)
        return (jnp.transpose(wp, (0, 2, 1, 3))
                .reshape(3 * cin_pad, 3 * cout_pad).astype(dtype))
    # (kh, kw, ci, co) -> (kw, kh, ci, co) -> (3, 3*cin_pad, cout_pad)
    return (jnp.transpose(wp, (1, 0, 2, 3))
            .reshape(3, 3 * cin_pad, cout_pad).astype(dtype))


@functools.partial(jax.jit,
                   static_argnames=("compute_dtype", "fuse_kw", "vmem_cap_bytes"))
def _basic_block_forward_impl(x_nchw, params, compute_dtype, fuse_kw,
                              vmem_cap_bytes):
    N, C, H, W = x_nchw.shape
    cin, cout = params["w1"].shape[2], params["w2"].shape[3]
    if not (cin == C and cout == C):
        # TODO(synk): stride != 1 / downsample branch not implemented.
        raise ValueError("only stride=1, downsample=None (inplanes==planes)")

    # One-time layout change NCHW -> NHWC.
    # TODO(synk): accept/return NHWC (Cp-padded) end-to-end to drop this HBM pass.
    x = jnp.transpose(x_nchw, (0, 2, 3, 1))

    Cp = _round_up(C, _LANES)                      # lane-dense channel width
    s1, b1 = _fold_bn(params["g1"], params["b1"], params["m1"], params["v1"])
    s2, b2 = _fold_bn(params["g2"], params["b2"], params["m2"], params["v2"])

    w1c = _prep_conv_weights(params["w1"], s1, C, Cp, compute_dtype, fuse_kw)
    w2c = _prep_conv_weights(params["w2"], s2, Cp, Cp, compute_dtype, fuse_kw)
    pad_c = ((0, Cp - C),)
    bias_tab = jnp.stack([jnp.pad(b1, pad_c),
                          jnp.pad(b2, pad_c)]).astype(jnp.float32)   # (2, Cp)

    wpad = 2 * _LPAD + W                           # aligned scratch width

    if fuse_kw:
        w_specs = [pl.BlockSpec((3 * C, 3 * Cp), lambda n: (0, 0)),
                   pl.BlockSpec((3 * Cp, 3 * Cp), lambda n: (0, 0))]
    else:
        w_specs = [pl.BlockSpec((3, 3 * C, Cp), lambda n: (0, 0, 0)),
                   pl.BlockSpec((3, 3 * Cp, Cp), lambda n: (0, 0, 0))]

    # Scoped-VMEM budget from the actual footprint (defaults are 16-32 MiB,
    # far below physical); capped per device generation with headroom.
    cd_bytes = jnp.dtype(compute_dtype).itemsize
    in_bytes = x.dtype.itemsize
    est = (
        4 * H * W * C * in_bytes                          # dbl-buffered in/out
        + 2 * (w1c.size + w2c.size) * cd_bytes            # dbl-buffered weights
        + 2 * bias_tab.size * 4
        + (H + 2) * wpad * C * cd_bytes                   # xp scratch
        + (H + 2) * wpad * Cp * cd_bytes                  # mid scratch
        + H * wpad * 3 * Cp * cd_bytes                    # x_cat temp (conv2)
        + H * wpad * (3 * Cp if fuse_kw else Cp) * 4      # matmul result (f32)
        + 3 * H * W * Cp * 4                              # acc / a1 / a2 temps
    )
    vmem_limit = int(max(32 * 1024 * 1024, min(est * 3 // 2, vmem_cap_bytes)))

    kernel = functools.partial(_basic_block_kernel, fuse_kw=fuse_kw)

    out = pl.pallas_call(
        kernel,
        out_shape=jax.ShapeDtypeStruct((N, H, W, C), x.dtype),
        grid_spec=pltpu.PrefetchScalarGridSpec(
            num_scalar_prefetch=0,
            grid=(N,),
            in_specs=[pl.BlockSpec((None, H, W, C), lambda n: (n, 0, 0, 0))]
                     + w_specs
                     + [pl.BlockSpec((2, Cp), lambda n: (0, 0))],
            out_specs=pl.BlockSpec((None, H, W, C), lambda n: (n, 0, 0, 0)),
            scratch_shapes=[
                pltpu.VMEM((H + 2, wpad, C), compute_dtype),
                pltpu.VMEM((H + 2, wpad, Cp), compute_dtype),
            ],
        ),
        compiler_params=pltpu.CompilerParams(
            dimension_semantics=("parallel",),
            vmem_limit_bytes=vmem_limit,
        ),
    )(x, w1c, w2c, bias_tab)

    return jnp.transpose(out, (0, 3, 1, 2))        # NHWC -> NCHW


def basic_block_forward(x_nchw, params, compute_dtype=jnp.bfloat16, fuse_kw=None):
    """BasicBlock forward, NCHW in / NCHW out (stride=1, downsample=None)."""
    kind = _device_kind()
    if fuse_kw is None:
        # One fused (K, 3*Cp) matmul fills the 256-wide MXU on v6e/v7x; keep
        # the 3-matmul (N=128) path on v5-generation chips (128-wide MXU).
        fuse_kw = "v5" not in kind
    vmem_cap = (56 if "v7" in kind else 100) * 1024 * 1024
    return _basic_block_forward_impl(x_nchw, params, compute_dtype,
                                     bool(fuse_kw), int(vmem_cap))


def init_basic_block_params(key, inplanes, planes):
    """Deterministic parameter init matching BasicBlock(inplanes, planes)."""
    k1, k2, k3, k4 = jax.random.split(key, 4)
    return {
        # conv weights in HWIO layout (3, 3, Cin, Cout), no bias (conv3x3).
        "w1": jax.random.normal(k1, (3, 3, inplanes, planes), jnp.float32) * 0.1,
        "w2": jax.random.normal(k2, (3, 3, planes, planes), jnp.float32) * 0.1,
        # BN1 / BN2 (inference-style: gamma, beta, running mean/var).
        "g1": jnp.ones((planes,), jnp.float32) * 1.1,
        "b1": jax.random.normal(k3, (planes,), jnp.float32) * 0.05,
        "m1": jnp.zeros((planes,), jnp.float32) + 0.02,
        "v1": jnp.ones((planes,), jnp.float32) * 0.9,
        "g2": jnp.ones((planes,), jnp.float32) * 0.95,
        "b2": jax.random.normal(k4, (planes,), jnp.float32) * 0.05,
        "m2": jnp.zeros((planes,), jnp.float32) - 0.01,
        "v2": jnp.ones((planes,), jnp.float32) * 1.05,
    }


# --------------------------------------------------------------------------
# Pure-JAX reference (for correctness check)
# --------------------------------------------------------------------------
def _ref_forward(x_nchw, params):
    x = jnp.transpose(x_nchw, (0, 2, 3, 1))

    def conv(inp, w):
        return jax.lax.conv_general_dilated(
            inp, w, (1, 1), "SAME",
            dimension_numbers=("NHWC", "HWIO", "NHWC"))

    s1, b1 = _fold_bn(params["g1"], params["b1"], params["m1"], params["v1"])
    s2, b2 = _fold_bn(params["g2"], params["b2"], params["m2"], params["v2"])
    out = jnp.maximum(conv(x, params["w1"]) * s1 + b1, 0.0)
    out = conv(out, params["w2"]) * s2 + b2 + x
    out = jnp.maximum(out, 0.0)
    return jnp.transpose(out, (0, 3, 1, 2))


# --------------------------------------------------------------------------
if __name__ == "__main__":
    key = jax.random.PRNGKey(0)
    kx, kp = jax.random.split(key)

    N, C, H, W = 2, 4, 16, 16          # inplanes = planes = 4, stride = 1
    x = jax.random.normal(kx, (N, C, H, W), jnp.float32)
    params = init_basic_block_params(kp, C, C)

    ref = _ref_forward(x, params)

    # f32 compute path (device-default kw fusion): tight numerical check.
    out_f32 = jax.block_until_ready(
        basic_block_forward(x, params, compute_dtype=jnp.float32))
    assert out_f32.shape == (N, C, H, W)
    assert jnp.allclose(out_f32, ref, atol=1e-4, rtol=1e-4), "f32 mismatch"

    # bf16 matmul path (MXU-friendly on v6e/v7x): loose check.
    out_bf16 = jax.block_until_ready(
        basic_block_forward(x, params, compute_dtype=jnp.bfloat16))
    assert out_bf16.shape == (N, C, H, W)
    assert jnp.allclose(out_bf16, ref, atol=1e-1, rtol=1e-1), "bf16 mismatch"

    # Explicitly exercise the unfused (v5e-style) 3-matmul path for coverage.
    out_unf = jax.block_until_ready(
        basic_block_forward(x, params, compute_dtype=jnp.float32, fuse_kw=False))
    assert jnp.allclose(out_unf, ref, atol=1e-4, rtol=1e-4), "unfused mismatch"

    print("KERNEL_OK")
</pallas_src>

<mosaic_0001>
module attributes {stable_mosaic.version = 11 : i64} {
  func.func @_basic_block_kernel(%arg0: i32, %arg1: memref<1x16x16x4xf32, #tpu.memory_space<vmem>>, %arg2: memref<12x384xf32, #tpu.memory_space<vmem>>, %arg3: memref<384x384xf32, #tpu.memory_space<vmem>>, %arg4: memref<2x128xf32, #tpu.memory_space<vmem>>, %arg5: memref<1x16x16x4xf32, #tpu.memory_space<vmem>>, %arg6: memref<18x32x4xf32, #tpu.memory_space<vmem>>, %arg7: memref<18x32x128xf32, #tpu.memory_space<vmem>>) attributes {dimension_semantics = [#tpu.dimension_semantics<parallel>], iteration_bounds = array<i64: 2>, scalar_prefetch = 0 : i64, scratch_operands = 2 : i64, tpu.core_type = #tpu.core_type<tc>, window_params = [{transform_indices = @transform_0, window_bounds = array<i64: 1, 16, 16, 4>}, {pipeline_mode = #tpu.pipeline_mode<synchronous>, transform_indices = @transform_1, window_bounds = array<i64: 12, 384>}, {pipeline_mode = #tpu.pipeline_mode<synchronous>, transform_indices = @transform_2, window_bounds = array<i64: 384, 384>}, {pipeline_mode = #tpu.pipeline_mode<synchronous>, transform_indices = @transform_3, window_bounds = array<i64: 2, 128>}, {transform_indices = @transform_4, window_bounds = array<i64: 1, 16, 16, 4>}]} {
    %c0 = arith.constant 0 : index
    %c0_0 = arith.constant 0 : index
    %0 = vector.load %arg4[%c0, %c0_0] : memref<2x128xf32, #tpu.memory_space<vmem>>, vector<1x128xf32>
    %1 = vector.shape_cast %0 : vector<1x128xf32> to vector<1x1x128xf32>
    %c1 = arith.constant 1 : index
    %c0_1 = arith.constant 0 : index
    %2 = vector.load %arg4[%c1, %c0_1] : memref<2x128xf32, #tpu.memory_space<vmem>>, vector<1x128xf32>
    %3 = vector.shape_cast %2 : vector<1x128xf32> to vector<1x1x128xf32>
    %c0_2 = arith.constant 0 : index
    %c0_3 = arith.constant 0 : index
    %c0_4 = arith.constant 0 : index
    %c0_5 = arith.constant 0 : index
    %4 = vector.load %arg1[%c0_2, %c0_3, %c0_4, %c0_5] : memref<1x16x16x4xf32, #tpu.memory_space<vmem>>, vector<1x16x16x4xf32>
    %5 = vector.shape_cast %4 : vector<1x16x16x4xf32> to vector<16x16x4xf32>
    %cst = arith.constant 0.000000e+00 : f32
    %6 = vector.broadcast %cst : f32 to vector<1x32x4xf32>
    %c0_6 = arith.constant 0 : index
    %c0_7 = arith.constant 0 : index
    %c0_8 = arith.constant 0 : index
    %7 = vector.load %arg6[%c0_6, %c0_7, %c0_8] : memref<18x32x4xf32, #tpu.memory_space<vmem>>, vector<1x32x4xf32>
    tpu.vector_store %arg6[%c0_6, %c0_7, %c0_8], %6 {strides = array<i32>} : memref<18x32x4xf32, #tpu.memory_space<vmem>>, vector<1x32x4xf32>,
    %c17 = arith.constant 17 : index
    %c0_9 = arith.constant 0 : index
    %c0_10 = arith.constant 0 : index
    %8 = vector.load %arg6[%c17, %c0_9, %c0_10] : memref<18x32x4xf32, #tpu.memory_space<vmem>>, vector<1x32x4xf32>
    tpu.vector_store %arg6[%c17, %c0_9, %c0_10], %6 {strides = array<i32>} : memref<18x32x4xf32, #tpu.memory_space<vmem>>, vector<1x32x4xf32>,
    %cst_11 = arith.constant 0.000000e+00 : f32
    %9 = vector.broadcast %cst_11 : f32 to vector<18x8x4xf32>
    %c0_12 = arith.constant 0 : index
    %c0_13 = arith.constant 0 : index
    %c0_14 = arith.constant 0 : index
    %10 = vector.load %arg6[%c0_12, %c0_13, %c0_14] : memref<18x32x4xf32, #tpu.memory_space<vmem>>, vector<18x8x4xf32>
    tpu.vector_store %arg6[%c0_12, %c0_13, %c0_14], %9 {strides = array<i32>} : memref<18x32x4xf32, #tpu.memory_space<vmem>>, vector<18x8x4xf32>,
    %c0_15 = arith.constant 0 : index
    %c24 = arith.constant 24 : index
    %c0_16 = arith.constant 0 : index
    %11 = vector.load %arg6[%c0_15, %c24, %c0_16] : memref<18x32x4xf32, #tpu.memory_space<vmem>>, vector<18x8x4xf32>
    tpu.vector_store %arg6[%c0_15, %c24, %c0_16], %9 {strides = array<i32>} : memref<18x32x4xf32, #tpu.memory_space<vmem>>, vector<18x8x4xf32>,
    %c1_17 = arith.constant 1 : index
    %c8 = arith.constant 8 : index
    %c0_18 = arith.constant 0 : index
    %12 = vector.load %arg6[%c1_17, %c8, %c0_18] : memref<18x32x4xf32, #tpu.memory_space<vmem>>, vector<16x16x4xf32>
    tpu.vector_store %arg6[%c1_17, %c8, %c0_18], %5 {strides = array<i32>} : memref<18x32x4xf32, #tpu.memory_space<vmem>>, vector<16x16x4xf32>,
    %c0_19 = arith.constant 0 : index
    %c0_20 = arith.constant 0 : index
    %c0_21 = arith.constant 0 : index
    %13 = vector.load %arg6[%c0_19, %c0_20, %c0_21] : memref<18x32x4xf32, #tpu.memory_space<vmem>>, vector<18x32x4xf32>
    %14 = vector.extract_strided_slice %13 {offsets = [0, 0, 0], sizes = [16, 32, 4], strides = [1, 1, 1]} : vector<18x32x4xf32> to vector<16x32x4xf32>
    %15 = vector.extract_strided_slice %13 {offsets = [1, 0, 0], sizes = [16, 32, 4], strides = [1, 1, 1]} : vector<18x32x4xf32> to vector<16x32x4xf32>
    %16 = vector.extract_strided_slice %13 {offsets = [2, 0, 0], sizes = [16, 32, 4], strides = [1, 1, 1]} : vector<18x32x4xf32> to vector<16x32x4xf32>
    %17 = tpu.concatenate %14, %15, %16 in 2 : vector<16x32x4xf32>, vector<16x32x4xf32>, vector<16x32x4xf32> -> vector<16x32x12xf32>
    %18 = vector.shape_cast %17 : vector<16x32x12xf32> to vector<512x12xf32>
    %c0_22 = arith.constant 0 : index
    %c0_23 = arith.constant 0 : index
    %19 = vector.load %arg2[%c0_22, %c0_23] : memref<12x384xf32, #tpu.memory_space<vmem>>, vector<12x384xf32>
    %cst_24 = arith.constant dense<0.000000e+00> : vector<512x384xf32>
    %20 = tpu.matmul %18, %19, %cst_24 {dimension_numbers = #tpu.dot_dimension_numbers<[1], [0], [0], [1], [0, 0, 1, 1], [], []>} : vector<512x12xf32>, vector<12x384xf32>, vector<512x384xf32> -> vector<512x384xf32>
    %21 = vector.shape_cast %20 : vector<512x384xf32> to vector<16x32x384xf32>
    %22 = vector.extract_strided_slice %21 {offsets = [0, 7, 0], sizes = [16, 16, 128], strides = [1, 1, 1]} : vector<16x32x384xf32> to vector<16x16x128xf32>
    %23 = vector.extract_strided_slice %21 {offsets = [0, 8, 128], sizes = [16, 16, 128], strides = [1, 1, 1]} : vector<16x32x384xf32> to vector<16x16x128xf32>
    %24 = arith.addf %22, %23 : vector<16x16x128xf32>
    %25 = vector.extract_strided_slice %21 {offsets = [0, 9, 256], sizes = [16, 16, 128], strides = [1, 1, 1]} : vector<16x32x384xf32> to vector<16x16x128xf32>
    %26 = arith.addf %24, %25 : vector<16x16x128xf32>
    %27 = vector.broadcast %1 : vector<1x1x128xf32> to vector<16x16x128xf32>
    %28 = arith.addf %26, %27 : vector<16x16x128xf32>
    %cst_25 = arith.constant 0.000000e+00 : f32
    %29 = vector.broadcast %cst_25 : f32 to vector<16x16x128xf32>
    %30 = arith.maximumf %28, %29 : vector<16x16x128xf32>
    %cst_26 = arith.constant 0.000000e+00 : f32
    %31 = vector.broadcast %cst_26 : f32 to vector<1x32x128xf32>
    %c0_27 = arith.constant 0 : index
    %c0_28 = arith.constant 0 : index
    %c0_29 = arith.constant 0 : index
    %32 = vector.load %arg7[%c0_27, %c0_28, %c0_29] : memref<18x32x128xf32, #tpu.memory_space<vmem>>, vector<1x32x128xf32>
    tpu.vector_store %arg7[%c0_27, %c0_28, %c0_29], %31 {strides = array<i32>} : memref<18x32x128xf32, #tpu.memory_space<vmem>>, vector<1x32x128xf32>,
    %c17_30 = arith.constant 17 : index
    %c0_31 = arith.constant 0 : index
    %c0_32 = arith.constant 0 : index
    %33 = vector.load %arg7[%c17_30, %c0_31, %c0_32] : memref<18x32x128xf32, #tpu.memory_space<vmem>>, vector<1x32x128xf32>
    tpu.vector_store %arg7[%c17_30, %c0_31, %c0_32], %31 {strides = array<i32>} : memref<18x32x128xf32, #tpu.memory_space<vmem>>, vector<1x32x128xf32>,
    %cst_33 = arith.constant 0.000000e+00 : f32
    %34 = vector.broadcast %cst_33 : f32 to vector<18x8x128xf32>
    %c0_34 = arith.constant 0 : index
    %c0_35 = arith.constant 0 : index
    %c0_36 = arith.constant 0 : index
    %35 = vector.load %arg7[%c0_34, %c0_35, %c0_36] : memref<18x32x128xf32, #tpu.memory_space<vmem>>, vector<18x8x128xf32>
    tpu.vector_store %arg7[%c0_34, %c0_35, %c0_36], %34 {strides = array<i32>} : memref<18x32x128xf32, #tpu.memory_space<vmem>>, vector<18x8x128xf32>,
    %c0_37 = arith.constant 0 : index
    %c24_38 = arith.constant 24 : index
    %c0_39 = arith.constant 0 : index
    %36 = vector.load %arg7[%c0_37, %c24_38, %c0_39] : memref<18x32x128xf32, #tpu.memory_space<vmem>>, vector<18x8x128xf32>
    tpu.vector_store %arg7[%c0_37, %c24_38, %c0_39], %34 {strides = array<i32>} : memref<18x32x128xf32, #tpu.memory_space<vmem>>, vector<18x8x128xf32>,
    %c1_40 = arith.constant 1 : index
    %c8_41 = arith.constant 8 : index
    %c0_42 = arith.constant 0 : index
    %37 = vector.load %arg7[%c1_40, %c8_41, %c0_42] : memref<18x32x128xf32, #tpu.memory_space<vmem>>, vector<16x16x128xf32>
    tpu.vector_store %arg7[%c1_40, %c8_41, %c0_42], %30 {strides = array<i32>} : memref<18x32x128xf32, #tpu.memory_space<vmem>>, vector<16x16x128xf32>,
    %c0_43 = arith.constant 0 : index
    %c0_44 = arith.constant 0 : index
    %c0_45 = arith.constant 0 : index
    %38 = vector.load %arg7[%c0_43, %c0_44, %c0_45] : memref<18x32x128xf32, #tpu.memory_space<vmem>>, vector<18x32x128xf32>
    %39 = vector.extract_strided_slice %38 {offsets = [0, 0, 0], sizes = [16, 32, 128], strides = [1, 1, 1]} : vector<18x32x128xf32> to vector<16x32x128xf32>
    %40 = vector.extract_strided_slice %38 {offsets = [1, 0, 0], sizes = [16, 32, 128], strides = [1, 1, 1]} : vector<18x32x128xf32> to vector<16x32x128xf32>
    %41 = vector.extract_strided_slice %38 {offsets = [2, 0, 0], sizes = [16, 32, 128], strides = [1, 1, 1]} : vector<18x32x128xf32> to vector<16x32x128xf32>
    %42 = tpu.concatenate %39, %40, %41 in 2 : vector<16x32x128xf32>, vector<16x32x128xf32>, vector<16x32x128xf32> -> vector<16x32x384xf32>
    %43 = vector.shape_cast %42 : vector<16x32x384xf32> to vector<512x384xf32>
    %c0_46 = arith.constant 0 : index
    %c0_47 = arith.constant 0 : index
    %44 = vector.load %arg3[%c0_46, %c0_47] : memref<384x384xf32, #tpu.memory_space<vmem>>, vector<384x384xf32>
    %cst_48 = arith.constant dense<0.000000e+00> : vector<512x384xf32>
    %45 = tpu.matmul %43, %44, %cst_48 {dimension_numbers = #tpu.dot_dimension_numbers<[1], [0], [0], [1], [0, 0, 1, 1], [], []>} : vector<512x384xf32>, vector<384x384xf32>, vector<512x384xf32> -> vector<512x384xf32>
    %46 = vector.shape_cast %45 : vector<512x384xf32> to vector<16x32x384xf32>
    %47 = vector.extract_strided_slice %46 {offsets = [0, 7, 0], sizes = [16, 16, 128], strides = [1, 1, 1]} : vector<16x32x384xf32> to vector<16x16x128xf32>
    %48 = vector.extract_strided_slice %46 {offsets = [0, 8, 128], sizes = [16, 16, 128], strides = [1, 1, 1]} : vector<16x32x384xf32> to vector<16x16x128xf32>
    %49 = arith.addf %47, %48 : vector<16x16x128xf32>
    %50 = vector.extract_strided_slice %46 {offsets = [0, 9, 256], sizes = [16, 16, 128], strides = [1, 1, 1]} : vector<16x32x384xf32> to vector<16x16x128xf32>
    %51 = arith.addf %49, %50 : vector<16x16x128xf32>
    %52 = vector.broadcast %3 : vector<1x1x128xf32> to vector<16x16x128xf32>
    %53 = arith.addf %51, %52 : vector<16x16x128xf32>
    %54 = vector.extract_strided_slice %53 {offsets = [0, 0, 0], sizes = [16, 16, 4], strides = [1, 1, 1]} : vector<16x16x128xf32> to vector<16x16x4xf32>
    %55 = arith.addf %54, %5 : vector<16x16x4xf32>
    %cst_49 = arith.constant 0.000000e+00 : f32
    %56 = vector.broadcast %cst_49 : f32 to vector<16x16x4xf32>
    %57 = arith.maximumf %55, %56 : vector<16x16x4xf32>
    %c0_50 = arith.constant 0 : index
    %c0_51 = arith.constant 0 : index
    %c0_52 = arith.constant 0 : index
    %c0_53 = arith.constant 0 : index
    %58 = vector.load %arg5[%c0_50, %c0_51, %c0_52, %c0_53] : memref<1x16x16x4xf32, #tpu.memory_space<vmem>>, vector<1x16x16x4xf32>
    %59 = vector.shape_cast %58 : vector<1x16x16x4xf32> to vector<16x16x4xf32>
    %60 = vector.shape_cast %57 : vector<16x16x4xf32> to vector<1x16x16x4xf32>
    tpu.vector_store %arg5[%c0_50, %c0_51, %c0_52, %c0_53], %60 {strides = array<i32>} : memref<1x16x16x4xf32, #tpu.memory_space<vmem>>, vector<1x16x16x4xf32>,
    return
  }
  func.func @transform_0(%arg0: i32) -> (i32, i32, i32, i32) {
    %c0_i32 = arith.constant 0 : i32
    %c0_i32_0 = arith.constant 0 : i32
    %c0_i32_1 = arith.constant 0 : i32
    %c0_i32_2 = arith.constant 0 : i32
    return %arg0, %c0_i32, %c0_i32_0, %c0_i32_1 : i32, i32, i32, i32
  }
  func.func @transform_1(%arg0: i32) -> (i32, i32) {
    %c0_i32 = arith.constant 0 : i32
    %c0_i32_0 = arith.constant 0 : i32
    %c0_i32_1 = arith.constant 0 : i32
    return %c0_i32, %c0_i32_0 : i32, i32
  }
  func.func @transform_2(%arg0: i32) -> (i32, i32) {
    %c0_i32 = arith.constant 0 : i32
    %c0_i32_0 = arith.constant 0 : i32
    %c0_i32_1 = arith.constant 0 : i32
    return %c0_i32, %c0_i32_0 : i32, i32
  }
  func.func @transform_3(%arg0: i32) -> (i32, i32) {
    %c0_i32 = arith.constant 0 : i32
    %c0_i32_0 = arith.constant 0 : i32
    %c0_i32_1 = arith.constant 0 : i32
    return %c0_i32, %c0_i32_0 : i32, i32
  }
  func.func @transform_4(%arg0: i32) -> (i32, i32, i32, i32) {
    %c0_i32 = arith.constant 0 : i32
    %c0_i32_0 = arith.constant 0 : i32
    %c0_i32_1 = arith.constant 0 : i32
    %c0_i32_2 = arith.constant 0 : i32
    return %arg0, %c0_i32, %c0_i32_0, %c0_i32_1 : i32, i32, i32, i32
  }
}

</mosaic_0001>

<llo_original>
// kernel: _basic_block_forward_impl.1
$region0: #{_basic_block_forward_impl.1}
  #allocation0 [shape = 'u32[]', space=smem, size = 0x4, offset = 0x4, fixed_abs, tag = 'smem constant byte address 0x4 - core index']
  #allocation1 [shape = 'u32[72,128]{1,0:T(1,128)}', space=vmem, size = 0x9000, scoped, tag = 'internal scratch']
  #allocation2 [shape = 'f32[18,32,4]{2,1,0:T(8,128)}', space=vmem, size = 0x48000, scoped, tag = 'scratch operand']
  #allocation3 [shape = 'f32[18,32,128]{2,1,0:T(8,128)}', space=vmem, size = 0x48000, scoped, tag = 'scratch operand']
  %s0 = inlined_call_operand.vmem [shape: f32[2,16,16,4], index: 0, kind: input, shape index: {}]
  %s1 = inlined_call_operand.vmem [shape: f32[12,384], index: 1, kind: input, shape index: {}]
  %s2 = inlined_call_operand.vmem [shape: f32[384,384], index: 2, kind: input, shape index: {}]
  %s3 = inlined_call_operand.vmem [shape: f32[2,128], index: 3, kind: input, shape index: {}]
  %s4 = inlined_call_operand.vmem [shape: f32[2,16,16,4], index: 4, kind: output, shape index: {}]
  %s5 = sld [smem:[#allocation0]]
  $region49: #{_basic_block_forward_impl.1} parent=0
    _
  %s7 = ssub.s32 1, %s5
  %s8 = scalar_select 0, %s7, %s5
  loop: start=0, step=1, limit=4
  $region2: #{_basic_block_forward_impl.1} parent=0 // loop_pre_header
    _
  $region3: #{_basic_block_forward_impl.1} parent=0 // loop_header
    %s10 = sphi 0, %s14
    %p11 = scmp.ge.s32.totalorder %s10, 4
    %s20 = sphi 0, %s22
    %s23 = sphi 0, %s20
    %s24 = sphi 0, %s23
    %s40 = sphi 0, %s24
    %s44 = sphi 0, %s44
    %s46 = sphi 0, %s44
    %s47 = sphi 0, %s46
    %s61 = sphi 0, %s47
    %s65 = sphi 0, %s65
    %s67 = sphi 0, %s65
    %s68 = sphi 0, %s67
    %s82 = sphi 0, %s68
    %s86 = sphi 0, %s86
    %s88 = sphi 0, %s86
    %s89 = sphi 0, %s88
    %s103 = sphi 0, %s89
    %s109 = sphi 0, %s111
    %s112 = sphi 0, %s109
    %s113 = sphi 0, %s112
    %s129 = sphi 0, %s113
  $region4: #{_basic_block_forward_impl.1} parent=0 // loop_header_branch
    %13 = sbr.rel (%p11) target = $region8
  $region5: #{_basic_block_forward_impl.1} parent=0 // loop_body
    %s15 = ssub.s32 %s10, 1
    %s16 = ssub.s32 %s10, 2
    %s17 = sadd.s32 %s10, 1
    %s18 = ssub.s32 %s10, %s17
    %p19 = scmp.eq.s32.totalorder %s18, 0
    %s21 = sadd.s32 %s20, 1
    %s22 = scalar_select %p19, %s20, %s21
    %p25 = pneg %p19
    %p26 = scmp.eq.s32.totalorder %s10, 1
    %p27 = por %p25, %p26
    %p28 = scmp.ne.s32.totalorder %s20, %s23
    %p29 = scmp.eq.s32.totalorder %s10, 0
    %p30 = por %p28, %p29
    %p31 = scmp.ne.s32.totalorder %s20, %s23
    %p32 = scmp.eq.s32.totalorder %s15, 1
    %p33 = por %p31, %p32
    %p34 = scmp.ne.s32.totalorder %s23, %s24
    %p35 = scmp.eq.s32.totalorder %s15, 0
    %p36 = por %p34, %p35
    %p37 = scmp.ne.s32.totalorder %s23, %s24
    %p38 = scmp.eq.s32.totalorder %s16, 1
    %p39 = por %p37, %p38
    %p41 = scmp.ne.s32.totalorder %s24, %s40
    %p42 = scmp.eq.s32.totalorder %s16, 0
    %p43 = por %p41, %p42
    %s45 = sadd.s32 %s44, 1
    %p48 = scmp.eq.s32.totalorder %s10, 1
    %p49 = scmp.ne.s32.totalorder %s44, %s46
    %p50 = scmp.eq.s32.totalorder %s10, 0
    %p51 = por %p49, %p50
    %p52 = scmp.ne.s32.totalorder %s44, %s46
    %p53 = scmp.eq.s32.totalorder %s15, 1
    %p54 = por %p52, %p53
    %p55 = scmp.ne.s32.totalorder %s46, %s47
    %p56 = scmp.eq.s32.totalorder %s15, 0
    %p57 = por %p55, %p56
    %p58 = scmp.ne.s32.totalorder %s46, %s47
    %p59 = scmp.eq.s32.totalorder %s16, 1
    %p60 = por %p58, %p59
    %p62 = scmp.ne.s32.totalorder %s47, %s61
    %p63 = scmp.eq.s32.totalorder %s16, 0
    %p64 = por %p62, %p63
    %s66 = sadd.s32 %s65, 1
    %p69 = scmp.eq.s32.totalorder %s10, 1
    %p70 = scmp.ne.s32.totalorder %s65, %s67
    %p71 = scmp.eq.s32.totalorder %s10, 0
    %p72 = por %p70, %p71
    %p73 = scmp.ne.s32.totalorder %s65, %s67
    %p74 = scmp.eq.s32.totalorder %s15, 1
    %p75 = por %p73, %p74
    %p76 = scmp.ne.s32.totalorder %s67, %s68
    %p77 = scmp.eq.s32.totalorder %s15, 0
    %p78 = por %p76, %p77
    %p79 = scmp.ne.s32.totalorder %s67, %s68
    %p80 = scmp.eq.s32.totalorder %s16, 1
    %p81 = por %p79, %p80
    %p83 = scmp.ne.s32.totalorder %s68, %s82
    %p84 = scmp.eq.s32.totalorder %s16, 0
    %p85 = por %p83, %p84
    %s87 = sadd.s32 %s86, 1
    %p90 = scmp.eq.s32.totalorder %s10, 1
    %p91 = scmp.ne.s32.totalorder %s86, %s88
    %p92 = scmp.eq.s32.totalorder %s10, 0
    %p93 = por %p91, %p92
    %p94 = scmp.ne.s32.totalorder %s86, %s88
    %p95 = scmp.eq.s32.totalorder %s15, 1
    %p96 = por %p94, %p95
    %p97 = scmp.ne.s32.totalorder %s88, %s89
    %p98 = scmp.eq.s32.totalorder %s15, 0
    %p99 = por %p97, %p98
    %p100 = scmp.ne.s32.totalorder %s88, %s89
    %p101 = scmp.eq.s32.totalorder %s16, 1
    %p102 = por %p100, %p101
    %p104 = scmp.ne.s32.totalorder %s89, %s103
    %p105 = scmp.eq.s32.totalorder %s16, 0
    %p106 = por %p104, %p105
    %s107 = ssub.s32 %s10, %s17
    %p108 = scmp.eq.s32.totalorder %s107, 0
    %s110 = sadd.s32 %s109, 1
    %s111 = scalar_select %p108, %s109, %s110
    %p114 = pneg %p108
    %p115 = scmp.eq.s32.totalorder %s10, 1
    %p116 = por %p114, %p115
    %p117 = scmp.ne.s32.totalorder %s109, %s112
    %p118 = scmp.eq.s32.totalorder %s10, 0
    %p119 = por %p117, %p118
    %p120 = scmp.ne.s32.totalorder %s109, %s112
    %p121 = scmp.eq.s32.totalorder %s15, 1
    %p122 = por %p120, %p121
    %p123 = scmp.ne.s32.totalorder %s112, %s113
    %p124 = scmp.eq.s32.totalorder %s15, 0
    %p125 = por %p123, %p124
    %p126 = scmp.ne.s32.totalorder %s112, %s113
    %p127 = scmp.eq.s32.totalorder %s16, 1
    %p128 = por %p126, %p127
    %p130 = scmp.ne.s32.totalorder %s113, %s129
    %p131 = scmp.eq.s32.totalorder %s16, 0
    %p132 = por %p130, %p131
    %p133 = scmp.le.s32.totalorder 1, %s10
    %p134 = scmp.lt.s32.totalorder %s10, 3
    %p135 = pnand %p133, %p134
    %p136 = pneg %p135
    // Predicated region
    $region9: #{_basic_block_forward_impl.1} parent=5 // pred_check
      _
    $region10: #{_basic_block_forward_impl.1} parent=5 // pred_check_branch
      %138 = sbr.rel (%p135) target = $region12
    $region11: #{_basic_block_forward_impl.1} parent=5 // pred_region
      %s139 = ssub.s32 %s10, 1
      // Predicated region
      $region13: #{_basic_block_forward_impl.1} parent=11 // pred_check
        %p140 = pneg %p57
      $region14: #{_basic_block_forward_impl.1} parent=11 // pred_check_branch
        %142 = sbr.rel (%p140) target = $region16
      $region15: #{_basic_block_forward_impl.1} parent=11 // pred_region
        _
      $region16: #{_basic_block_forward_impl.1} parent=11 // pred_fallthru
        _
      // Predicated region
      $region17: #{_basic_block_forward_impl.1} parent=11 // pred_check
        %p143 = pneg %p78
      $region18: #{_basic_block_forward_impl.1} parent=11 // pred_check_branch
        %145 = sbr.rel (%p143) target = $region20
      $region19: #{_basic_block_forward_impl.1} parent=11 // pred_region
        _
      $region20: #{_basic_block_forward_impl.1} parent=11 // pred_fallthru
        _
      // Predicated region
      $region21: #{_basic_block_forward_impl.1} parent=11 // pred_check
        %p146 = pneg %p99
      $region22: #{_basic_block_forward_impl.1} parent=11 // pred_check_branch
        %148 = sbr.rel (%p146) target = $region24
      $region23: #{_basic_block_forward_impl.1} parent=11 // pred_region
        _
      $region24: #{_basic_block_forward_impl.1} parent=11 // pred_fallthru
        _
    $region12: #{_basic_block_forward_impl.1} parent=5 // pred_fallthru
      _
    %p149 = scmp.lt.s32.totalorder %s10, 2
    // Predicated region
    $region25: #{_basic_block_forward_impl.1} parent=5 // pred_check
      %p150 = pneg %p149
    $region26: #{_basic_block_forward_impl.1} parent=5 // pred_check_branch
      %152 = sbr.rel (%p150) target = $region28
    $region27: #{_basic_block_forward_impl.1} parent=5 // pred_region
      // Predicated region
      $region29: #{_basic_block_forward_impl.1} parent=27 // pred_check
        %p153 = pneg %p30
      $region30: #{_basic_block_forward_impl.1} parent=27 // pred_check_branch
        %155 = sbr.rel (%p153) target = $region32
      $region31: #{_basic_block_forward_impl.1} parent=27 // pred_region
        %p156 = scmp.lt.s32.totalorder %s10, 1
        %s157 = scalar_select %p156, %s10, 1
        %s158 = smul.addr %s157, 32
        %s159 = smul.addr %s158, 8
        %s160 = scalar_lea.vmem %s0, %s159
      $region32: #{_basic_block_forward_impl.1} parent=27 // pred_fallthru
        _
    $region28: #{_basic_block_forward_impl.1} parent=5 // pred_fallthru
      _
    %p161 = scmp.le.s32.totalorder 1, %s10
    %p162 = scmp.lt.s32.totalorder %s10, 3
    %p163 = pnand %p161, %p162
    %p164 = pneg %p163
    // Predicated region
    $region33: #{_basic_block_forward_impl.1} parent=5 // pred_check
      _
    $region34: #{_basic_block_forward_impl.1} parent=5 // pred_check_branch
      %166 = sbr.rel (%p163) target = $region36
    $region35: #{_basic_block_forward_impl.1} parent=5 // pred_region
      %s167 = ssub.s32 %s10, 1
      %p168 = scmp.lt.s32.totalorder %s15, 1
      %s169 = scalar_select %p168, %s15, 1
      %s170 = smul.addr %s169, 32
      %s171 = smul.addr %s170, 8
      %s172 = scalar_lea.vmem %s0, %s171
      %p173 = pneg %p36
      %p174 = pneg %p33
      %p175 = pneg %p57
      %p176 = pneg %p54
      %p177 = pneg %p78
      %p178 = pneg %p75
      %p179 = pneg %p99
      %p180 = pneg %p96
      %p181 = pneg %p125
      %p182 = pneg %p122
      %p183 = scmp.lt.s32.totalorder %s15, 1
      %s184 = scalar_select %p183, %s15, 1
      %s185 = smul.addr %s184, 32
      %s186 = smul.addr %s185, 8
      %s187 = scalar_lea.vmem %s4, %s186
      %p188 = scmp.lt.s32.totalorder %s15, 1
      %s189 = scalar_select %p188, %s15, 1
      %s190 = smul.addr %s189, 32
      %s191 = smul.addr %s190, 8
      %s192 = scalar_lea.vmem %s0, %s191
      %p193 = scmp.lt.s32.totalorder %s15, 1
      %s194 = scalar_select %p193, %s15, 1
      %s195 = smul.addr %s194, 32
      %s196 = smul.addr %s195, 8
      %s197 = scalar_lea.vmem %s4, %s196
      %v198 = vld [vmem:[%s3] sm:$0x1]
      %v199 = vld [vmem:[%s3 + $0x1] sm:$0x1]
      %v200 = vld [vmem:[%s192] sm:$0xff]
      %v201 = vld [vmem:[%s192 + $0x8] sm:$0xff]
      %v202 = vld [vmem:[%s192 + $0x10] sm:$0xff]
      %v203 = vld [vmem:[%s192 + $0x18] sm:$0xff]
      %v204 = vld [vmem:[%s192 + $0x20] sm:$0xff]
      %v205 = vld [vmem:[%s192 + $0x28] sm:$0xff]
      %v206 = vld [vmem:[%s192 + $0x30] sm:$0xff]
      %v207 = vld [vmem:[%s192 + $0x38] sm:$0xff]
      %v208 = vld [vmem:[%s192 + $0x40] sm:$0xff]
      %v209 = vld [vmem:[%s192 + $0x48] sm:$0xff]
      %v210 = vld [vmem:[%s192 + $0x50] sm:$0xff]
      %v211 = vld [vmem:[%s192 + $0x58] sm:$0xff]
      %v212 = vld [vmem:[%s192 + $0x60] sm:$0xff]
      %v213 = vld [vmem:[%s192 + $0x68] sm:$0xff]
      %v214 = vld [vmem:[%s192 + $0x70] sm:$0xff]
      %v215 = vld [vmem:[%s192 + $0x78] sm:$0xff]
      %v216 = vld [vmem:[%s192 + $0x80] sm:$0xff]
      %v217 = vld [vmem:[%s192 + $0x88] sm:$0xff]
      %v218 = vld [vmem:[%s192 + $0x90] sm:$0xff]
      %v219 = vld [vmem:[%s192 + $0x98] sm:$0xff]
      %v220 = vld [vmem:[%s192 + $0xa0] sm:$0xff]
      %v221 = vld [vmem:[%s192 + $0xa8] sm:$0xff]
      %v222 = vld [vmem:[%s192 + $0xb0] sm:$0xff]
      %v223 = vld [vmem:[%s192 + $0xb8] sm:$0xff]
      %v224 = vld [vmem:[%s192 + $0xc0] sm:$0xff]
      %v225 = vld [vmem:[%s192 + $0xc8] sm:$0xff]
      %v226 = vld [vmem:[%s192 + $0xd0] sm:$0xff]
      %v227 = vld [vmem:[%s192 + $0xd8] sm:$0xff]
      %v228 = vld [vmem:[%s192 + $0xe0] sm:$0xff]
      %v229 = vld [vmem:[%s192 + $0xe8] sm:$0xff]
      %v230 = vld [vmem:[%s192 + $0xf0] sm:$0xff]
      %v231 = vld [vmem:[%s192 + $0xf8] sm:$0xff]
      %vm232 = vcmask 31744
      %233 = vst.msk [vmem:[#allocation2] sm:$0xff] %vm232, 0.0
      %234 = vst.msk [vmem:[#allocation2 + $0x8] sm:$0xff] %vm232, 0.0
      %235 = vst.msk [vmem:[#allocation2 + $0x10] sm:$0xff] %vm232, 0.0
      %236 = vst.msk [vmem:[#allocation2 + $0x18] sm:$0xff] %vm232, 0.0
      %s237 = scalar_lea.vmem [#allocation2], 544
      %238 = vst.msk [vmem:[%s237] sm:$0xff] %vm232, 0.0
      %239 = vst.msk [vmem:[%s237 + $0x8] sm:$0xff] %vm232, 0.0
      %240 = vst.msk [vmem:[%s237 + $0x10] sm:$0xff] %vm232, 0.0
      %241 = vst.msk [vmem:[%s237 + $0x18] sm:$0xff] %vm232, 0.0
      %242 = vst.msk [vmem:[#allocation2] sm:$0xff] %vm232, 0.0
      %243 = vst.msk [vmem:[#allocation2 + $0x20] sm:$0xff] %vm232, 0.0
      %244 = vst.msk [vmem:[#allocation2 + $0x40] sm:$0xff] %vm232, 0.0
      %245 = vst.msk [vmem:[#allocation2 + $0x60] sm:$0xff] %vm232, 0.0
      %246 = vst.msk [vmem:[#allocation2 + $0x80] sm:$0xff] %vm232, 0.0
      %247 = vst.msk [vmem:[#allocation2 + $0xa0] sm:$0xff] %vm232, 0.0
      %248 = vst.msk [vmem:[#allocation2 + $0xc0] sm:$0xff] %vm232, 0.0
      %249 = vst.msk [vmem:[#allocation2 + $0xe0] sm:$0xff] %vm232, 0.0
      %250 = vst.msk [vmem:[#allocation2 + $0x100] sm:$0xff] %vm232, 0.0
      %251 = vst.msk [vmem:[#allocation2 + $0x120] sm:$0xff] %vm232, 0.0
      %252 = vst.msk [vmem:[#allocation2 + $0x140] sm:$0xff] %vm232, 0.0
      %253 = vst.msk [vmem:[#allocation2 + $0x160] sm:$0xff] %vm232, 0.0
      %254 = vst.msk [vmem:[#allocation2 + $0x180] sm:$0xff] %vm232, 0.0
      %255 = vst.msk [vmem:[#allocation2 + $0x1a0] sm:$0xff] %vm232, 0.0
      %256 = vst.msk [vmem:[#allocation2 + $0x1c0] sm:$0xff] %vm232, 0.0
      %257 = vst.msk [vmem:[#allocation2 + $0x1e0] sm:$0xff] %vm232, 0.0
      %258 = vst.msk [vmem:[#allocation2 + $0x200] sm:$0xff] %vm232, 0.0
      %259 = vst.msk [vmem:[#allocation2 + $0x220] sm:$0xff] %vm232, 0.0
      %260 = vst.msk [vmem:[#allocation2 + $0x18] sm:$0xff] %vm232, 0.0
      %261 = vst.msk [vmem:[#allocation2 + $0x38] sm:$0xff] %vm232, 0.0
      %262 = vst.msk [vmem:[#allocation2 + $0x58] sm:$0xff] %vm232, 0.0
      %263 = vst.msk [vmem:[#allocation2 + $0x78] sm:$0xff] %vm232, 0.0
      %264 = vst.msk [vmem:[#allocation2 + $0x98] sm:$0xff] %vm232, 0.0
      %265 = vst.msk [vmem:[#allocation2 + $0xb8] sm:$0xff] %vm232, 0.0
      %266 = vst.msk [vmem:[#allocation2 + $0xd8] sm:$0xff] %vm232, 0.0
      %267 = vst.msk [vmem:[#allocation2 + $0xf8] sm:$0xff] %vm232, 0.0
      %268 = vst.msk [vmem:[#allocation2 + $0x118] sm:$0xff] %vm232, 0.0
      %269 = vst.msk [vmem:[#allocation2 + $0x138] sm:$0xff] %vm232, 0.0
      %270 = vst.msk [vmem:[#allocation2 + $0x158] sm:$0xff] %vm232, 0.0
      %271 = vst.msk [vmem:[#allocation2 + $0x178] sm:$0xff] %vm232, 0.0
      %272 = vst.msk [vmem:[#allocation2 + $0x198] sm:$0xff] %vm232, 0.0
      %273 = vst.msk [vmem:[#allocation2 + $0x1b8] sm:$0xff] %vm232, 0.0
      %274 = vst.msk [vmem:[#allocation2 + $0x1d8] sm:$0xff] %vm232, 0.0
      %275 = vst.msk [vmem:[#allocation2 + $0x1f8] sm:$0xff] %vm232, 0.0
      %276 = vst.msk [vmem:[#allocation2 + $0x218] sm:$0xff] %vm232, 0.0
      %277 = vst.msk [vmem:[#allocation2 + $0x238] sm:$0xff] %vm232, 0.0
      %s278 = scalar_lea.vmem [#allocation2], 32
      %279 = vst.msk [vmem:[%s278 + $0x8] sm:$0xff] %vm232, %v200
      %280 = vst.msk [vmem:[%s278 + $0x10] sm:$0xff] %vm232, %v201
      %281 = vst.msk [vmem:[%s278 + $0x28] sm:$0xff] %vm232, %v202
      %282 = vst.msk [vmem:[%s278 + $0x30] sm:$0xff] %vm232, %v203
      %283 = vst.msk [vmem:[%s278 + $0x48] sm:$0xff] %vm232, %v204
      %284 = vst.msk [vmem:[%s278 + $0x50] sm:$0xff] %vm232, %v205
      %285 = vst.msk [vmem:[%s278 + $0x68] sm:$0xff] %vm232, %v206
      %286 = vst.msk [vmem:[%s278 + $0x70] sm:$0xff] %vm232, %v207
      %287 = vst.msk [vmem:[%s278 + $0x88] sm:$0xff] %vm232, %v208
      %288 = vst.msk [vmem:[%s278 + $0x90] sm:$0xff] %vm232, %v209
      %289 = vst.msk [vmem:[%s278 + $0xa8] sm:$0xff] %vm232, %v210
      %290 = vst.msk [vmem:[%s278 + $0xb0] sm:$0xff] %vm232, %v211
      %291 = vst.msk [vmem:[%s278 + $0xc8] sm:$0xff] %vm232, %v212
      %292 = vst.msk [vmem:[%s278 + $0xd0] sm:$0xff] %vm232, %v213
      %293 = vst.msk [vmem:[%s278 + $0xe8] sm:$0xff] %vm232, %v214
      %294 = vst.msk [vmem:[%s278 + $0xf0] sm:$0xff] %vm232, %v215
      %295 = vst.msk [vmem:[%s278 + $0x108] sm:$0xff] %vm232, %v216
      %296 = vst.msk [vmem:[%s278 + $0x110] sm:$0xff] %vm232, %v217
      %297 = vst.msk [vmem:[%s278 + $0x128] sm:$0xff] %vm232, %v218
      %298 = vst.msk [vmem:[%s278 + $0x130] sm:$0xff] %vm232, %v219
      %299 = vst.msk [vmem:[%s278 + $0x148] sm:$0xff] %vm232, %v220
      %300 = vst.msk [vmem:[%s278 + $0x150] sm:$0xff] %vm232, %v221
      %301 = vst.msk [vmem:[%s278 + $0x168] sm:$0xff] %vm232, %v222
      %302 = vst.msk [vmem:[%s278 + $0x170] sm:$0xff] %vm232, %v223
      %303 = vst.msk [vmem:[%s278 + $0x188] sm:$0xff] %vm232, %v224
      %304 = vst.msk [vmem:[%s278 + $0x190] sm:$0xff] %vm232, %v225
      %305 = vst.msk [vmem:[%s278 + $0x1a8] sm:$0xff] %vm232, %v226
      %306 = vst.msk [vmem:[%s278 + $0x1b0] sm:$0xff] %vm232, %v227
      %307 = vst.msk [vmem:[%s278 + $0x1c8] sm:$0xff] %vm232, %v228
      %308 = vst.msk [vmem:[%s278 + $0x1d0] sm:$0xff] %vm232, %v229
      %309 = vst.msk [vmem:[%s278 + $0x1e8] sm:$0xff] %vm232, %v230
      %310 = vst.msk [vmem:[%s278 + $0x1f0] sm:$0xff] %vm232, %v231
      %v311 = vld [vmem:[#allocation2] sm:$0xff]
      %v312 = vld [vmem:[#allocation2 + $0x8] sm:$0xff]
      %v313 = vld [vmem:[#allocation2 + $0x10] sm:$0xff]
      %v314 = vld [vmem:[#allocation2 + $0x18] sm:$0xff]
      %v315 = vld [vmem:[#allocation2 + $0x20] sm:$0xff]
      %v316 = vld [vmem:[#allocation2 + $0x28] sm:$0xff]
      %v317 = vld [vmem:[#allocation2 + $0x30] sm:$0xff]
      %v318 = vld [vmem:[#allocation2 + $0x38] sm:$0xff]
      %v319 = vld [vmem:[#allocation2 + $0x40] sm:$0xff]
      %v320 = vld [vmem:[#allocation2 + $0x48] sm:$0xff]
      %v321 = vld [vmem:[#allocation2 + $0x50] sm:$0xff]
      %v322 = vld [vmem:[#allocation2 + $0x58] sm:$0xff]
      %v323 = vld [vmem:[#allocation2 + $0x60] sm:$0xff]
      %v324 = vld [vmem:[#allocation2 + $0x68] sm:$0xff]
      %v325 = vld [vmem:[#allocation2 + $0x70] sm:$0xff]
      %v326 = vld [vmem:[#allocation2 + $0x78] sm:$0xff]
      %v327 = vld [vmem:[#allocation2 + $0x80] sm:$0xff]
      %v328 = vld [vmem:[#allocation2 + $0x88] sm:$0xff]
      %v329 = vld [vmem:[#allocation2 + $0x90] sm:$0xff]
      %v330 = vld [vmem:[#allocation2 + $0x98] sm:$0xff]
      %v331 = vld [vmem:[#allocation2 + $0xa0] sm:$0xff]
      %v332 = vld [vmem:[#allocation2 + $0xa8] sm:$0xff]
      %v333 = vld [vmem:[#allocation2 + $0xb0] sm:$0xff]
      %v334 = vld [vmem:[#allocation2 + $0xb8] sm:$0xff]
      %v335 = vld [vmem:[#allocation2 + $0xc0] sm:$0xff]
      %v336 = vld [vmem:[#allocation2 + $0xc8] sm:$0xff]
      %v337 = vld [vmem:[#allocation2 + $0xd0] sm:$0xff]
      %v338 = vld [vmem:[#allocation2 + $0xd8] sm:$0xff]
      %v339 = vld [vmem:[#allocation2 + $0xe0] sm:$0xff]
      %v340 = vld [vmem:[#allocation2 + $0xe8] sm:$0xff]
      %v341 = vld [vmem:[#allocation2 + $0xf0] sm:$0xff]
      %v342 = vld [vmem:[#allocation2 + $0xf8] sm:$0xff]
      %v343 = vld [vmem:[#allocation2 + $0x100] sm:$0xff]
      %v344 = vld [vmem:[#allocation2 + $0x108] sm:$0xff]
      %v345 = vld [vmem:[#allocation2 + $0x110] sm:$0xff]
      %v346 = vld [vmem:[#allocation2 + $0x118] sm:$0xff]
      %v347 = vld [vmem:[#allocation2 + $0x120] sm:$0xff]
      %v348 = vld [vmem:[#allocation2 + $0x128] sm:$0xff]
      %v349 = vld [vmem:[#allocation2 + $0x130] sm:$0xff]
      %v350 = vld [vmem:[#allocation2 + $0x138] sm:$0xff]
      %v351 = vld [vmem:[#allocation2 + $0x140] sm:$0xff]
      %v352 = vld [vmem:[#allocation2 + $0x148] sm:$0xff]
      %v353 = vld [vmem:[#allocation2 + $0x150] sm:$0xff]
      %v354 = vld [vmem:[#allocation2 + $0x158] sm:$0xff]
      %v355 = vld [vmem:[#allocation2 + $0x160] sm:$0xff]
      %v356 = vld [vmem:[#allocation2 + $0x168] sm:$0xff]
      %v357 = vld [vmem:[#allocation2 + $0x170] sm:$0xff]
      %v358 = vld [vmem:[#allocation2 + $0x178] sm:$0xff]
      %v359 = vld [vmem:[#allocation2 + $0x180] sm:$0xff]
      %v360 = vld [vmem:[#allocation2 + $0x188] sm:$0xff]
      %v361 = vld [vmem:[#allocation2 + $0x190] sm:$0xff]
      %v362 = vld [vmem:[#allocation2 + $0x198] sm:$0xff]
      %v363 = vld [vmem:[#allocation2 + $0x1a0] sm:$0xff]
      %v364 = vld [vmem:[#allocation2 + $0x1a8] sm:$0xff]
      %v365 = vld [vmem:[#allocation2 + $0x1b0] sm:$0xff]
      %v366 = vld [vmem:[#allocation2 + $0x1b8] sm:$0xff]
      %v367 = vld [vmem:[#allocation2 + $0x1c0] sm:$0xff]
      %v368 = vld [vmem:[#allocation2 + $0x1c8] sm:$0xff]
      %v369 = vld [vmem:[#allocation2 + $0x1d0] sm:$0xff]
      %v370 = vld [vmem:[#allocation2 + $0x1d8] sm:$0xff]
      %v371 = vld [vmem:[#allocation2 + $0x1e0] sm:$0xff]
      %v372 = vld [vmem:[#allocation2 + $0x1e8] sm:$0xff]
      %v373 = vld [vmem:[#allocation2 + $0x1f0] sm:$0xff]
      %v374 = vld [vmem:[#allocation2 + $0x1f8] sm:$0xff]
      %v375 = vld [vmem:[#allocation2 + $0x200] sm:$0xff]
      %v376 = vld [vmem:[#allocation2 + $0x208] sm:$0xff]
      %v377 = vld [vmem:[#allocation2 + $0x210] sm:$0xff]
      %v378 = vld [vmem:[#allocation2 + $0x218] sm:$0xff]
      %v379 = vld [vmem:[#allocation2 + $0x220] sm:$0xff]
      %v380 = vld [vmem:[#allocation2 + $0x228] sm:$0xff]
      %v381 = vld [vmem:[#allocation2 + $0x230] sm:$0xff]
      %v382 = vld [vmem:[#allocation2 + $0x238] sm:$0xff]
      %447 = vrot.lane.b32.xlu0 %v315, 4
      %v448 = vpop.permute.xlu0 %447
      %449 = vrot.lane.b32.xlu0 %v316, 4
      %v450 = vpop.permute.xlu0 %449
      %451 = vrot.lane.b32.xlu0 %v317, 4
      %v452 = vpop.permute.xlu0 %451
      %453 = vrot.lane.b32.xlu0 %v318, 4
      %v454 = vpop.permute.xlu0 %453
      %455 = vrot.lane.b32.xlu0 %v319, 4
      %v456 = vpop.permute.xlu0 %455
      %457 = vrot.lane.b32.xlu0 %v320, 4
      %v458 = vpop.permute.xlu0 %457
      %459 = vrot.lane.b32.xlu0 %v321, 4
      %v460 = vpop.permute.xlu0 %459
      %461 = vrot.lane.b32.xlu0 %v322, 4
      %v462 = vpop.permute.xlu0 %461
      %463 = vrot.lane.b32.xlu0 %v323, 4
      %v464 = vpop.permute.xlu0 %463
      %465 = vrot.lane.b32.xlu0 %v324, 4
      %v466 = vpop.permute.xlu0 %465
      %467 = vrot.lane.b32.xlu0 %v325, 4
      %v468 = vpop.permute.xlu0 %467
      %469 = vrot.lane.b32.xlu0 %v326, 4
      %v470 = vpop.permute.xlu0 %469
      %471 = vrot.lane.b32.xlu0 %v327, 4
      %v472 = vpop.permute.xlu0 %471
      %473 = vrot.lane.b32.xlu0 %v328, 4
      %v474 = vpop.permute.xlu0 %473
      %475 = vrot.lane.b32.xlu0 %v329, 4
      %v476 = vpop.permute.xlu0 %475
      %477 = vrot.lane.b32.xlu0 %v330, 4
      %v478 = vpop.permute.xlu0 %477
      %479 = vrot.lane.b32.xlu0 %v331, 4
      %v480 = vpop.permute.xlu0 %479
      %481 = vrot.lane.b32.xlu0 %v332, 4
      %v482 = vpop.permute.xlu0 %481
      %483 = vrot.lane.b32.xlu0 %v333, 4
      %v484 = vpop.permute.xlu0 %483
      %485 = vrot.lane.b32.xlu0 %v334, 4
      %v486 = vpop.permute.xlu0 %485
      %487 = vrot.lane.b32.xlu0 %v335, 4
      %v488 = vpop.permute.xlu0 %487
      %489 = vrot.lane.b32.xlu0 %v336, 4
      %v490 = vpop.permute.xlu0 %489
      %491 = vrot.lane.b32.xlu0 %v337, 4
      %v492 = vpop.permute.xlu0 %491
      %493 = vrot.lane.b32.xlu0 %v338, 4
      %v494 = vpop.permute.xlu0 %493
      %495 = vrot.lane.b32.xlu0 %v339, 4
      %v496 = vpop.permute.xlu0 %495
      %497 = vrot.lane.b32.xlu0 %v340, 4
      %v498 = vpop.permute.xlu0 %497
      %499 = vrot.lane.b32.xlu0 %v341, 4
      %v500 = vpop.permute.xlu0 %499
      %501 = vrot.lane.b32.xlu0 %v342, 4
      %v502 = vpop.permute.xlu0 %501
      %503 = vrot.lane.b32.xlu0 %v343, 4
      %v504 = vpop.permute.xlu0 %503
      %505 = vrot.lane.b32.xlu0 %v344, 4
      %v506 = vpop.permute.xlu0 %505
      %507 = vrot.lane.b32.xlu0 %v345, 4
      %v508 = vpop.permute.xlu0 %507
      %509 = vrot.lane.b32.xlu0 %v346, 4
      %v510 = vpop.permute.xlu0 %509
      %511 = vrot.lane.b32.xlu0 %v347, 4
      %v512 = vpop.permute.xlu0 %511
      %513 = vrot.lane.b32.xlu0 %v348, 4
      %v514 = vpop.permute.xlu0 %513
      %515 = vrot.lane.b32.xlu0 %v349, 4
      %v516 = vpop.permute.xlu0 %515
      %517 = vrot.lane.b32.xlu0 %v350, 4
      %v518 = vpop.permute.xlu0 %517
      %519 = vrot.lane.b32.xlu0 %v351, 4
      %v520 = vpop.permute.xlu0 %519
      %521 = vrot.lane.b32.xlu0 %v352, 4
      %v522 = vpop.permute.xlu0 %521
      %523 = vrot.lane.b32.xlu0 %v353, 4
      %v524 = vpop.permute.xlu0 %523
      %525 = vrot.lane.b32.xlu0 %v354, 4
      %v526 = vpop.permute.xlu0 %525
      %527 = vrot.lane.b32.xlu0 %v355, 4
      %v528 = vpop.permute.xlu0 %527
      %529 = vrot.lane.b32.xlu0 %v356, 4
      %v530 = vpop.permute.xlu0 %529
      %531 = vrot.lane.b32.xlu0 %v357, 4
      %v532 = vpop.permute.xlu0 %531
      %533 = vrot.lane.b32.xlu0 %v358, 4
      %v534 = vpop.permute.xlu0 %533
      %535 = vrot.lane.b32.xlu0 %v359, 4
      %v536 = vpop.permute.xlu0 %535
      %537 = vrot.lane.b32.xlu0 %v360, 4
      %v538 = vpop.permute.xlu0 %537
      %539 = vrot.lane.b32.xlu0 %v361, 4
      %v540 = vpop.permute.xlu0 %539
      %541 = vrot.lane.b32.xlu0 %v362, 4
      %v542 = vpop.permute.xlu0 %541
      %543 = vrot.lane.b32.xlu0 %v363, 4
      %v544 = vpop.permute.xlu0 %543
      %545 = vrot.lane.b32.xlu0 %v364, 4
      %v546 = vpop.permute.xlu0 %545
      %547 = vrot.lane.b32.xlu0 %v365, 4
      %v548 = vpop.permute.xlu0 %547
      %549 = vrot.lane.b32.xlu0 %v366, 4
      %v550 = vpop.permute.xlu0 %549
      %551 = vrot.lane.b32.xlu0 %v367, 4
      %v552 = vpop.permute.xlu0 %551
      %553 = vrot.lane.b32.xlu0 %v368, 4
      %v554 = vpop.permute.xlu0 %553
      %555 = vrot.lane.b32.xlu0 %v369, 4
      %v556 = vpop.permute.xlu0 %555
      %557 = vrot.lane.b32.xlu0 %v370, 4
      %v558 = vpop.permute.xlu0 %557
      %559 = vrot.lane.b32.xlu0 %v371, 4
      %v560 = vpop.permute.xlu0 %559
      %561 = vrot.lane.b32.xlu0 %v372, 4
      %v562 = vpop.permute.xlu0 %561
      %563 = vrot.lane.b32.xlu0 %v373, 4
      %v564 = vpop.permute.xlu0 %563
      %565 = vrot.lane.b32.xlu0 %v374, 4
      %v566 = vpop.permute.xlu0 %565
      %567 = vrot.lane.b32.xlu0 %v375, 4
      %v568 = vpop.permute.xlu0 %567
      %569 = vrot.lane.b32.xlu0 %v376, 4
      %v570 = vpop.permute.xlu0 %569
      %571 = vrot.lane.b32.xlu0 %v377, 4
      %v572 = vpop.permute.xlu0 %571
      %573 = vrot.lane.b32.xlu0 %v378, 4
      %v574 = vpop.permute.xlu0 %573
      %643 = vrot.lane.b32.xlu0 %v319, 8
      %v644 = vpop.permute.xlu0 %643
      %645 = vrot.lane.b32.xlu0 %v320, 8
      %v646 = vpop.permute.xlu0 %645
      %647 = vrot.lane.b32.xlu0 %v321, 8
      %v648 = vpop.permute.xlu0 %647
      %649 = vrot.lane.b32.xlu0 %v322, 8
      %v650 = vpop.permute.xlu0 %649
      %651 = vrot.lane.b32.xlu0 %v323, 8
      %v652 = vpop.permute.xlu0 %651
      %653 = vrot.lane.b32.xlu0 %v324, 8
      %v654 = vpop.permute.xlu0 %653
      %655 = vrot.lane.b32.xlu0 %v325, 8
      %v656 = vpop.permute.xlu0 %655
      %657 = vrot.lane.b32.xlu0 %v326, 8
      %v658 = vpop.permute.xlu0 %657
      %659 = vrot.lane.b32.xlu0 %v327, 8
      %v660 = vpop.permute.xlu0 %659
      %661 = vrot.lane.b32.xlu0 %v328, 8
      %v662 = vpop.permute.xlu0 %661
      %663 = vrot.lane.b32.xlu0 %v329, 8
      %v664 = vpop.permute.xlu0 %663
      %665 = vrot.lane.b32.xlu0 %v330, 8
      %v666 = vpop.permute.xlu0 %665
      %667 = vrot.lane.b32.xlu0 %v331, 8
      %v668 = vpop.permute.xlu0 %667
      %669 = vrot.lane.b32.xlu0 %v332, 8
      %v670 = vpop.permute.xlu0 %669
      %671 = vrot.lane.b32.xlu0 %v333, 8
      %v672 = vpop.permute.xlu0 %671
      %673 = vrot.lane.b32.xlu0 %v334, 8
      %v674 = vpop.permute.xlu0 %673
      %675 = vrot.lane.b32.xlu0 %v335, 8
      %v676 = vpop.permute.xlu0 %675
      %677 = vrot.lane.b32.xlu0 %v336, 8
      %v678 = vpop.permute.xlu0 %677
      %679 = vrot.lane.b32.xlu0 %v337, 8
      %v680 = vpop.permute.xlu0 %679
      %681 = vrot.lane.b32.xlu0 %v338, 8
      %v682 = vpop.permute.xlu0 %681
      %683 = vrot.lane.b32.xlu0 %v339, 8
      %v684 = vpop.permute.xlu0 %683
      %685 = vrot.lane.b32.xlu0 %v340, 8
      %v686 = vpop.permute.xlu0 %685
      %687 = vrot.lane.b32.xlu0 %v341, 8
      %v688 = vpop.permute.xlu0 %687
      %689 = vrot.lane.b32.xlu0 %v342, 8
      %v690 = vpop.permute.xlu0 %689
      %691 = vrot.lane.b32.xlu0 %v343, 8
      %v692 = vpop.permute.xlu0 %691
      %693 = vrot.lane.b32.xlu0 %v344, 8
      %v694 = vpop.permute.xlu0 %693
      %695 = vrot.lane.b32.xlu0 %v345, 8
      %v696 = vpop.permute.xlu0 %695
      %697 = vrot.lane.b32.xlu0 %v346, 8
      %v698 = vpop.permute.xlu0 %697
      %699 = vrot.lane.b32.xlu0 %v347, 8
      %v700 = vpop.permute.xlu0 %699
      %701 = vrot.lane.b32.xlu0 %v348, 8
      %v702 = vpop.permute.xlu0 %701
      %703 = vrot.lane.b32.xlu0 %v349, 8
      %v704 = vpop.permute.xlu0 %703
      %705 = vrot.lane.b32.xlu0 %v350, 8
      %v706 = vpop.permute.xlu0 %705
      %707 = vrot.lane.b32.xlu0 %v351, 8
      %v708 = vpop.permute.xlu0 %707
      %709 = vrot.lane.b32.xlu0 %v352, 8
      %v710 = vpop.permute.xlu0 %709
      %711 = vrot.lane.b32.xlu0 %v353, 8
      %v712 = vpop.permute.xlu0 %711
      %713 = vrot.lane.b32.xlu0 %v354, 8
      %v714 = vpop.permute.xlu0 %713
      %715 = vrot.lane.b32.xlu0 %v355, 8
      %v716 = vpop.permute.xlu0 %715
      %717 = vrot.lane.b32.xlu0 %v356, 8
      %v718 = vpop.permute.xlu0 %717
      %719 = vrot.lane.b32.xlu0 %v357, 8
      %v720 = vpop.permute.xlu0 %719
      %721 = vrot.lane.b32.xlu0 %v358, 8
      %v722 = vpop.permute.xlu0 %721
      %723 = vrot.lane.b32.xlu0 %v359, 8
      %v724 = vpop.permute.xlu0 %723
      %725 = vrot.lane.b32.xlu0 %v360, 8
      %v726 = vpop.permute.xlu0 %725
      %727 = vrot.lane.b32.xlu0 %v361, 8
      %v728 = vpop.permute.xlu0 %727
      %729 = vrot.lane.b32.xlu0 %v362, 8
      %v730 = vpop.permute.xlu0 %729
      %731 = vrot.lane.b32.xlu0 %v363, 8
      %v732 = vpop.permute.xlu0 %731
      %733 = vrot.lane.b32.xlu0 %v364, 8
      %v734 = vpop.permute.xlu0 %733
      %735 = vrot.lane.b32.xlu0 %v365, 8
      %v736 = vpop.permute.xlu0 %735
      %737 = vrot.lane.b32.xlu0 %v366, 8
      %v738 = vpop.permute.xlu0 %737
      %739 = vrot.lane.b32.xlu0 %v367, 8
      %v740 = vpop.permute.xlu0 %739
      %741 = vrot.lane.b32.xlu0 %v368, 8
      %v742 = vpop.permute.xlu0 %741
      %743 = vrot.lane.b32.xlu0 %v369, 8
      %v744 = vpop.permute.xlu0 %743
      %745 = vrot.lane.b32.xlu0 %v370, 8
      %v746 = vpop.permute.xlu0 %745
      %747 = vrot.lane.b32.xlu0 %v371, 8
      %v748 = vpop.permute.xlu0 %747
      %749 = vrot.lane.b32.xlu0 %v372, 8
      %v750 = vpop.permute.xlu0 %749
      %751 = vrot.lane.b32.xlu0 %v373, 8
      %v752 = vpop.permute.xlu0 %751
      %753 = vrot.lane.b32.xlu0 %v374, 8
      %v754 = vpop.permute.xlu0 %753
      %755 = vrot.lane.b32.xlu0 %v375, 8
      %v756 = vpop.permute.xlu0 %755
      %757 = vrot.lane.b32.xlu0 %v376, 8
      %v758 = vpop.permute.xlu0 %757
      %759 = vrot.lane.b32.xlu0 %v377, 8
      %v760 = vpop.permute.xlu0 %759
      %761 = vrot.lane.b32.xlu0 %v378, 8
      %v762 = vpop.permute.xlu0 %761
      %763 = vrot.lane.b32.xlu0 %v379, 8
      %v764 = vpop.permute.xlu0 %763
      %765 = vrot.lane.b32.xlu0 %v380, 8
      %v766 = vpop.permute.xlu0 %765
      %767 = vrot.lane.b32.xlu0 %v381, 8
      %v768 = vpop.permute.xlu0 %767
      %769 = vrot.lane.b32.xlu0 %v382, 8
      %v770 = vpop.permute.xlu0 %769
      %v835 = vsel %vm232, %v311, %v448
      %v836 = vsel %vm232, %v312, %v450
      %v837 = vsel %vm232, %v313, %v452
      %v838 = vsel %vm232, %v314, %v454
      %v839 = vsel %vm232, %v315, %v456
      %v840 = vsel %vm232, %v316, %v458
      %v841 = vsel %vm232, %v317, %v460
      %v842 = vsel %vm232, %v318, %v462
      %v843 = vsel %vm232, %v319, %v464
      %v844 = vsel %vm232, %v320, %v466
      %v845 = vsel %vm232, %v321, %v468
      %v846 = vsel %vm232, %v322, %v470
      %v847 = vsel %vm232, %v323, %v472
      %v848 = vsel %vm232, %v324, %v474
      %v849 = vsel %vm232, %v325, %v476
      %v850 = vsel %vm232, %v326, %v478
      %v851 = vsel %vm232, %v327, %v480
      %v852 = vsel %vm232, %v328, %v482
      %v853 = vsel %vm232, %v329, %v484
      %v854 = vsel %vm232, %v330, %v486
      %v855 = vsel %vm232, %v331, %v488
      %v856 = vsel %vm232, %v332, %v490
      %v857 = vsel %vm232, %v333, %v492
      %v858 = vsel %vm232, %v334, %v494
      %v859 = vsel %vm232, %v335, %v496
      %v860 = vsel %vm232, %v336, %v498
      %v861 = vsel %vm232, %v337, %v500
      %v862 = vsel %vm232, %v338, %v502
      %v863 = vsel %vm232, %v339, %v504
      %v864 = vsel %vm232, %v340, %v506
      %v865 = vsel %vm232, %v341, %v508
      %v866 = vsel %vm232, %v342, %v510
      %v867 = vsel %vm232, %v343, %v512
      %v868 = vsel %vm232, %v344, %v514
      %v869 = vsel %vm232, %v345, %v516
      %v870 = vsel %vm232, %v346, %v518
      %v871 = vsel %vm232, %v347, %v520
      %v872 = vsel %vm232, %v348, %v522
      %v873 = vsel %vm232, %v349, %v524
      %v874 = vsel %vm232, %v350, %v526
      %v875 = vsel %vm232, %v351, %v528
      %v876 = vsel %vm232, %v352, %v530
      %v877 = vsel %vm232, %v353, %v532
      %v878 = vsel %vm232, %v354, %v534
      %v879 = vsel %vm232, %v355, %v536
      %v880 = vsel %vm232, %v356, %v538
      %v881 = vsel %vm232, %v357, %v540
      %v882 = vsel %vm232, %v358, %v542
      %v883 = vsel %vm232, %v359, %v544
      %v884 = vsel %vm232, %v360, %v546
      %v885 = vsel %vm232, %v361, %v548
      %v886 = vsel %vm232, %v362, %v550
      %v887 = vsel %vm232, %v363, %v552
      %v888 = vsel %vm232, %v364, %v554
      %v889 = vsel %vm232, %v365, %v556
      %v890 = vsel %vm232, %v366, %v558
      %v891 = vsel %vm232, %v367, %v560
      %v892 = vsel %vm232, %v368, %v562
      %v893 = vsel %vm232, %v369, %v564
      %v894 = vsel %vm232, %v370, %v566
      %v895 = vsel %vm232, %v371, %v568
      %v896 = vsel %vm232, %v372, %v570
      %v897 = vsel %vm232, %v373, %v572
      %v898 = vsel %vm232, %v374, %v574
      %vm899 = vcmask 64512
      %v900 = vsel %vm899, %v835, %v644
      %v901 = vsel %vm899, %v836, %v646
      %v902 = vsel %vm899, %v837, %v648
      %v903 = vsel %vm899, %v838, %v650
      %v904 = vsel %vm899, %v839, %v652
      %v905 = vsel %vm899, %v840, %v654
      %v906 = vsel %vm899, %v841, %v656
      %v907 = vsel %vm899, %v842, %v658
      %v908 = vsel %vm899, %v843, %v660
      %v909 = vsel %vm899, %v844, %v662
      %v910 = vsel %vm899, %v845, %v664
      %v911 = vsel %vm899, %v846, %v666
      %v912 = vsel %vm899, %v847, %v668
      %v913 = vsel %vm899, %v848, %v670
      %v914 = vsel %vm899, %v849, %v672
      %v915 = vsel %vm899, %v850, %v674
      %v916 = vsel %vm899, %v851, %v676
      %v917 = vsel %vm899, %v852, %v678
      %v918 = vsel %vm899, %v853, %v680
      %v919 = vsel %vm899, %v854, %v682
      %v920 = vsel %vm899, %v855, %v684
      %v921 = vsel %vm899, %v856, %v686
      %v922 = vsel %vm899, %v857, %v688
      %v923 = vsel %vm899, %v858, %v690
      %v924 = vsel %vm899, %v859, %v692
      %v925 = vsel %vm899, %v860, %v694
      %v926 = vsel %vm899, %v861, %v696
      %v927 = vsel %vm899, %v862, %v698
      %v928 = vsel %vm899, %v863, %v700
      %v929 = vsel %vm899, %v864, %v702
      %v930 = vsel %vm899, %v865, %v704
      %v931 = vsel %vm899, %v866, %v706
      %v932 = vsel %vm899, %v867, %v708
      %v933 = vsel %vm899, %v868, %v710
      %v934 = vsel %vm899, %v869, %v712
      %v935 = vsel %vm899, %v870, %v714
      %v936 = vsel %vm899, %v871, %v716
      %v937 = vsel %vm899, %v872, %v718
      %v938 = vsel %vm899, %v873, %v720
      %v939 = vsel %vm899, %v874, %v722
      %v940 = vsel %vm899, %v875, %v724
      %v941 = vsel %vm899, %v876, %v726
      %v942 = vsel %vm899, %v877, %v728
      %v943 = vsel %vm899, %v878, %v730
      %v944 = vsel %vm899, %v879, %v732
      %v945 = vsel %vm899, %v880, %v734
      %v946 = vsel %vm899, %v881, %v736
      %v947 = vsel %vm899, %v882, %v738
      %v948 = vsel %vm899, %v883, %v740
      %v949 = vsel %vm899, %v884, %v742
      %v950 = vsel %vm899, %v885, %v744
      %v951 = vsel %vm899, %v886, %v746
      %v952 = vsel %vm899, %v887, %v748
      %v953 = vsel %vm899, %v888, %v750
      %v954 = vsel %vm899, %v889, %v752
      %v955 = vsel %vm899, %v890, %v754
      %v956 = vsel %vm899, %v891, %v756
      %v957 = vsel %vm899, %v892, %v758
      %v958 = vsel %vm899, %v893, %v760
      %v959 = vsel %vm899, %v894, %v762
      %v960 = vsel %vm899, %v895, %v764
      %v961 = vsel %vm899, %v896, %v766
      %v962 = vsel %vm899, %v897, %v768
      %v963 = vsel %vm899, %v898, %v770
      %v964 = vld [vmem:[%s1] sm:$0xff]
      %v965 = vld [vmem:[%s1 + $0x8] sm:$0xff]
      %v966 = vld [vmem:[%s1 + $0x10] sm:$0xff]
      %v967 = vld [vmem:[%s1 + $0x18] sm:$0xf]
      %v968 = vld [vmem:[%s1 + $0x20] sm:$0xf]
      %v969 = vld [vmem:[%s1 + $0x28] sm:$0xf]
      %vm970 = vcmask 97280
      %v972 = vsel %vm970, %v900, 0
      %v975 = vsel %vm970, %v901, 0
      %v978 = vsel %vm970, %v902, 0
      %v981 = vsel %vm970, %v903, 0
      %v984 = vsel %vm970, %v904, 0
      %v987 = vsel %vm970, %v905, 0
      %v990 = vsel %vm970, %v906, 0
      %v993 = vsel %vm970, %v907, 0
      %v996 = vsel %vm970, %v908, 0
      %v999 = vsel %vm970, %v909, 0
      %v1002 = vsel %vm970, %v910, 0
      %v1005 = vsel %vm970, %v911, 0
      %v1008 = vsel %vm970, %v912, 0
      %v1011 = vsel %vm970, %v913, 0
      %v1014 = vsel %vm970, %v914, 0
      %v1017 = vsel %vm970, %v915, 0
      %v1020 = vsel %vm970, %v916, 0
      %v1023 = vsel %vm970, %v917, 0
      %v1026 = vsel %vm970, %v918, 0
      %v1029 = vsel %vm970, %v919, 0
      %v1032 = vsel %vm970, %v920, 0
      %v1035 = vsel %vm970, %v921, 0
      %v1038 = vsel %vm970, %v922, 0
      %v1041 = vsel %vm970, %v923, 0
      %v1044 = vsel %vm970, %v924, 0
      %v1047 = vsel %vm970, %v925, 0
      %v1050 = vsel %vm970, %v926, 0
      %v1053 = vsel %vm970, %v927, 0
      %v1056 = vsel %vm970, %v928, 0
      %v1059 = vsel %vm970, %v929, 0
      %v1062 = vsel %vm970, %v930, 0
      %v1065 = vsel %vm970, %v931, 0
      %v1068 = vsel %vm970, %v932, 0
      %v1071 = vsel %vm970, %v933, 0
      %v1074 = vsel %vm970, %v934, 0
      %v1077 = vsel %vm970, %v935, 0
      %v1080 = vsel %vm970, %v936, 0
      %v1083 = vsel %vm970, %v937, 0
      %v1086 = vsel %vm970, %v938, 0
      %v1089 = vsel %vm970, %v939, 0
      %v1092 = vsel %vm970, %v940, 0
      %v1095 = vsel %vm970, %v941, 0
      %v1098 = vsel %vm970, %v942, 0
      %v1101 = vsel %vm970, %v943, 0
      %v1104 = vsel %vm970, %v944, 0
      %v1107 = vsel %vm970, %v945, 0
      %v1110 = vsel %vm970, %v946, 0
      %v1113 = vsel %vm970, %v947, 0
      %v1116 = vsel %vm970, %v948, 0
      %v1119 = vsel %vm970, %v949, 0
      %v1122 = vsel %vm970, %v950, 0
      %v1125 = vsel %vm970, %v951, 0
      %v1128 = vsel %vm970, %v952, 0
      %v1131 = vsel %vm970, %v953, 0
      %v1134 = vsel %vm970, %v954, 0
      %v1137 = vsel %vm970, %v955, 0
      %v1140 = vsel %vm970, %v956, 0
      %v1143 = vsel %vm970, %v957, 0
      %v1146 = vsel %vm970, %v958, 0
      %v1149 = vsel %vm970, %v959, 0
      %v1152 = vsel %vm970, %v960, 0
      %v1155 = vsel %vm970, %v961, 0
      %v1158 = vsel %vm970, %v962, 0
      %v1161 = vsel %vm970, %v963, 0
      %vm1163 = vcmask 1043456
      %v1165 = vsel %vm1163, %v967, 0
      %v1168 = vsel %vm1163, %v968, 0
      %v1171 = vsel %vm1163, %v969, 0
      %1173 = vmatpush.msra.mxu0 0.0
      %1174 = vmatpush.msra.mxu0 0.0
      %1175 = vmatpush.msra.mxu0 0.0
      %1176 = vmatpush.msra.mxu0 0.0
      %1177 = vmatpush.msra.mxu0 0.0
      %1178 = vmatpush.msra.mxu0 0.0
      %1179 = vmatpush.msra.mxu0 0.0
      %1180 = vmatpush.msra.mxu0 0.0
      %1181 = vmatpush.msra.mxu0 0.0
      %1182 = vmatpush.msra.mxu0 0.0
      %1183 = vmatpush.msra.mxu0 0.0
      %1184 = vmatpush.msra.mxu0 0.0
      %1185 = vmatpush.msra.mxu0 0.0
      %1186 = vmatpush.msra.mxu0 0.0
      %1187 = vmatpush.msra.mxu0 %v1165
      %1188 = vmatpush.msra.mxu0 %v964
      %1189 = vmatmul.f32.gmra.mxu0 %v972
      %v1190 = vpop.f32.mrf.mxu0
      %v1191 = vadd.f32 0.0, %v1190
      %1192 = vmatmul.f32.gmra.mxu0 %v975
      %v1193 = vpop.f32.mrf.mxu0
      %v1194 = vadd.f32 0.0, %v1193
      %1195 = vmatmul.f32.gmra.mxu0 %v978
      %v1196 = vpop.f32.mrf.mxu0
      %v1197 = vadd.f32 0.0, %v1196
      %1198 = vmatmul.f32.gmra.mxu0 %v981
      %v1199 = vpop.f32.mrf.mxu0
      %1200 = vmatmul.f32.gmra.mxu0 %v984
      %v1201 = vpop.f32.mrf.mxu0
      %v1202 = vadd.f32 0.0, %v1201
      %1203 = vmatmul.f32.gmra.mxu0 %v987
      %v1204 = vpop.f32.mrf.mxu0
      %v1205 = vadd.f32 0.0, %v1204
      %1206 = vmatmul.f32.gmra.mxu0 %v990
      %v1207 = vpop.f32.mrf.mxu0
      %v1208 = vadd.f32 0.0, %v1207
      %1209 = vmatmul.f32.gmra.mxu0 %v993
      %v1210 = vpop.f32.mrf.mxu0
      %1211 = vmatmul.f32.gmra.mxu0 %v996
      %v1212 = vpop.f32.mrf.mxu0
      %v1213 = vadd.f32 0.0, %v1212
      %1214 = vmatmul.f32.gmra.mxu0 %v999
      %v1215 = vpop.f32.mrf.mxu0
      %v1216 = vadd.f32 0.0, %v1215
      %1217 = vmatmul.f32.gmra.mxu0 %v1002
      %v1218 = vpop.f32.mrf.mxu0
      %v1219 = vadd.f32 0.0, %v1218
      %1220 = vmatmul.f32.gmra.mxu0 %v1005
      %v1221 = vpop.f32.mrf.mxu0
      %1222 = vmatmul.f32.gmra.mxu0 %v1008
      %v1223 = vpop.f32.mrf.mxu0
      %v1224 = vadd.f32 0.0, %v1223
      %1225 = vmatmul.f32.gmra.mxu0 %v1011
      %v1226 = vpop.f32.mrf.mxu0
      %v1227 = vadd.f32 0.0, %v1226
      %1228 = vmatmul.f32.gmra.mxu0 %v1014
      %v1229 = vpop.f32.mrf.mxu0
      %v1230 = vadd.f32 0.0, %v1229
      %1231 = vmatmul.f32.gmra.mxu0 %v1017
      %v1232 = vpop.f32.mrf.mxu0
      %1233 = vmatmul.f32.gmra.mxu0 %v1020
      %v1234 = vpop.f32.mrf.mxu0
      %v1235 = vadd.f32 0.0, %v1234
      %1236 = vmatmul.f32.gmra.mxu0 %v1023
      %v1237 = vpop.f32.mrf.mxu0
      %v1238 = vadd.f32 0.0, %v1237
      %1239 = vmatmul.f32.gmra.mxu0 %v1026
      %v1240 = vpop.f32.mrf.mxu0
      %v1241 = vadd.f32 0.0, %v1240
      %1242 = vmatmul.f32.gmra.mxu0 %v1029
      %v1243 = vpop.f32.mrf.mxu0
      %1244 = vmatmul.f32.gmra.mxu0 %v1032
      %v1245 = vpop.f32.mrf.mxu0
      %v1246 = vadd.f32 0.0, %v1245
      %1247 = vmatmul.f32.gmra.mxu0 %v1035
      %v1248 = vpop.f32.mrf.mxu0
      %v1249 = vadd.f32 0.0, %v1248
      %1250 = vmatmul.f32.gmra.mxu0 %v1038
      %v1251 = vpop.f32.mrf.mxu0
      %v1252 = vadd.f32 0.0, %v1251
      %1253 = vmatmul.f32.gmra.mxu0 %v1041
      %v1254 = vpop.f32.mrf.mxu0
      %1255 = vmatmul.f32.gmra.mxu0 %v1044
      %v1256 = vpop.f32.mrf.mxu0
      %v1257 = vadd.f32 0.0, %v1256
      %1258 = vmatmul.f32.gmra.mxu0 %v1047
      %v1259 = vpop.f32.mrf.mxu0
      %v1260 = vadd.f32 0.0, %v1259
      %1261 = vmatmul.f32.gmra.mxu0 %v1050
      %v1262 = vpop.f32.mrf.mxu0
      %v1263 = vadd.f32 0.0, %v1262
      %1264 = vmatmul.f32.gmra.mxu0 %v1053
      %v1265 = vpop.f32.mrf.mxu0
      %1266 = vmatmul.f32.gmra.mxu0 %v1056
      %v1267 = vpop.f32.mrf.mxu0
      %v1268 = vadd.f32 0.0, %v1267
      %1269 = vmatmul.f32.gmra.mxu0 %v1059
      %v1270 = vpop.f32.mrf.mxu0
      %v1271 = vadd.f32 0.0, %v1270
      %1272 = vmatmul.f32.gmra.mxu0 %v1062
      %v1273 = vpop.f32.mrf.mxu0
      %v1274 = vadd.f32 0.0, %v1273
      %1275 = vmatmul.f32.gmra.mxu0 %v1065
      %v1276 = vpop.f32.mrf.mxu0
      %1277 = vmatmul.f32.gmra.mxu0 %v1068
      %v1278 = vpop.f32.mrf.mxu0
      %v1279 = vadd.f32 0.0, %v1278
      %1280 = vmatmul.f32.gmra.mxu0 %v1071
      %v1281 = vpop.f32.mrf.mxu0
      %v1282 = vadd.f32 0.0, %v1281
      %1283 = vmatmul.f32.gmra.mxu0 %v1074
      %v1284 = vpop.f32.mrf.mxu0
      %v1285 = vadd.f32 0.0, %v1284
      %1286 = vmatmul.f32.gmra.mxu0 %v1077
      %v1287 = vpop.f32.mrf.mxu0
      %1288 = vmatmul.f32.gmra.mxu0 %v1080
      %v1289 = vpop.f32.mrf.mxu0
      %v1290 = vadd.f32 0.0, %v1289
      %1291 = vmatmul.f32.gmra.mxu0 %v1083
      %v1292 = vpop.f32.mrf.mxu0
      %v1293 = vadd.f32 0.0, %v1292
      %1294 = vmatmul.f32.gmra.mxu0 %v1086
      %v1295 = vpop.f32.mrf.mxu0
      %v1296 = vadd.f32 0.0, %v1295
      %1297 = vmatmul.f32.gmra.mxu0 %v1089
      %v1298 = vpop.f32.mrf.mxu0
      %1299 = vmatmul.f32.gmra.mxu0 %v1092
      %v1300 = vpop.f32.mrf.mxu0
      %v1301 = vadd.f32 0.0, %v1300
      %1302 = vmatmul.f32.gmra.mxu0 %v1095
      %v1303 = vpop.f32.mrf.mxu0
      %v1304 = vadd.f32 0.0, %v1303
      %1305 = vmatmul.f32.gmra.mxu0 %v1098
      %v1306 = vpop.f32.mrf.mxu0
      %v1307 = vadd.f32 0.0, %v1306
      %1308 = vmatmul.f32.gmra.mxu0 %v1101
      %v1309 = vpop.f32.mrf.mxu0
      %1310 = vmatmul.f32.gmra.mxu0 %v1104
      %v1311 = vpop.f32.mrf.mxu0
      %v1312 = vadd.f32 0.0, %v1311
      %1313 = vmatmul.f32.gmra.mxu0 %v1107
      %v1314 = vpop.f32.mrf.mxu0
      %v1315 = vadd.f32 0.0, %v1314
      %1316 = vmatmul.f32.gmra.mxu0 %v1110
      %v1317 = vpop.f32.mrf.mxu0
      %v1318 = vadd.f32 0.0, %v1317
      %1319 = vmatmul.f32.gmra.mxu0 %v1113
      %v1320 = vpop.f32.mrf.mxu0
      %1321 = vmatmul.f32.gmra.mxu0 %v1116
      %v1322 = vpop.f32.mrf.mxu0
      %v1323 = vadd.f32 0.0, %v1322
      %1324 = vmatmul.f32.gmra.mxu0 %v1119
      %v1325 = vpop.f32.mrf.mxu0
      %v1326 = vadd.f32 0.0, %v1325
      %1327 = vmatmul.f32.gmra.mxu0 %v1122
      %v1328 = vpop.f32.mrf.mxu0
      %v1329 = vadd.f32 0.0, %v1328
      %1330 = vmatmul.f32.gmra.mxu0 %v1125
      %v1331 = vpop.f32.mrf.mxu0
      %1332 = vmatmul.f32.gmra.mxu0 %v1128
      %v1333 = vpop.f32.mrf.mxu0
      %v1334 = vadd.f32 0.0, %v1333
      %1335 = vmatmul.f32.gmra.mxu0 %v1131
      %v1336 = vpop.f32.mrf.mxu0
      %v1337 = vadd.f32 0.0, %v1336
      %1338 = vmatmul.f32.gmra.mxu0 %v1134
      %v1339 = vpop.f32.mrf.mxu0
      %v1340 = vadd.f32 0.0, %v1339
      %1341 = vmatmul.f32.gmra.mxu0 %v1137
      %v1342 = vpop.f32.mrf.mxu0
      %1343 = vmatmul.f32.gmra.mxu0 %v1140
      %v1344 = vpop.f32.mrf.mxu0
      %v1345 = vadd.f32 0.0, %v1344
      %1346 = vmatmul.f32.gmra.mxu0 %v1143
      %v1347 = vpop.f32.mrf.mxu0
      %v1348 = vadd.f32 0.0, %v1347
      %1349 = vmatmul.f32.gmra.mxu0 %v1146
      %v1350 = vpop.f32.mrf.mxu0
      %v1351 = vadd.f32 0.0, %v1350
      %1352 = vmatmul.f32.gmra.mxu0 %v1149
      %v1353 = vpop.f32.mrf.mxu0
      %1354 = vmatmul.f32.gmra.mxu0 %v1152
      %v1355 = vpop.f32.mrf.mxu0
      %v1356 = vadd.f32 0.0, %v1355
      %1357 = vmatmul.f32.gmra.mxu0 %v1155
      %v1358 = vpop.f32.mrf.mxu0
      %v1359 = vadd.f32 0.0, %v1358
      %1360 = vmatmul.f32.gmra.mxu0 %v1158
      %v1361 = vpop.f32.mrf.mxu0
      %v1362 = vadd.f32 0.0, %v1361
      %1363 = vmatmul.f32.gmra.mxu0 %v1161
      %v1364 = vpop.f32.mrf.mxu0
      %1365 = vdwg.mxu0
      %1366 = vmatpush.msra.mxu0 0.0
      %1367 = vmatpush.msra.mxu0 0.0
      %1368 = vmatpush.msra.mxu0 0.0
      %1369 = vmatpush.msra.mxu0 0.0
      %1370 = vmatpush.msra.mxu0 0.0
      %1371 = vmatpush.msra.mxu0 0.0
      %1372 = vmatpush.msra.mxu0 0.0
      %1373 = vmatpush.msra.mxu0 0.0
      %1374 = vmatpush.msra.mxu0 0.0
      %1375 = vmatpush.msra.mxu0 0.0
      %1376 = vmatpush.msra.mxu0 0.0
      %1377 = vmatpush.msra.mxu0 0.0
      %1378 = vmatpush.msra.mxu0 0.0
      %1379 = vmatpush.msra.mxu0 0.0
      %1380 = vmatpush.msra.mxu0 %v1168
      %1381 = vmatpush.msra.mxu0 %v965
      %1382 = vmatmul.f32.gmra.mxu0 %v972
      %v1383 = vpop.f32.mrf.mxu0
      %1384 = vmatmul.f32.gmra.mxu0 %v975
      %v1385 = vpop.f32.mrf.mxu0
      %v1386 = vadd.f32 0.0, %v1385
      %1387 = vmatmul.f32.gmra.mxu0 %v978
      %v1388 = vpop.f32.mrf.mxu0
      %v1389 = vadd.f32 0.0, %v1388
      %1390 = vmatmul.f32.gmra.mxu0 %v981
      %v1391 = vpop.f32.mrf.mxu0
      %1392 = vmatmul.f32.gmra.mxu0 %v984
      %v1393 = vpop.f32.mrf.mxu0
      %1394 = vmatmul.f32.gmra.mxu0 %v987
      %v1395 = vpop.f32.mrf.mxu0
      %v1396 = vadd.f32 0.0, %v1395
      %1397 = vmatmul.f32.gmra.mxu0 %v990
      %v1398 = vpop.f32.mrf.mxu0
      %v1399 = vadd.f32 0.0, %v1398
      %1400 = vmatmul.f32.gmra.mxu0 %v993
      %v1401 = vpop.f32.mrf.mxu0
      %1402 = vmatmul.f32.gmra.mxu0 %v996
      %v1403 = vpop.f32.mrf.mxu0
      %1404 = vmatmul.f32.gmra.mxu0 %v999
      %v1405 = vpop.f32.mrf.mxu0
      %v1406 = vadd.f32 0.0, %v1405
      %1407 = vmatmul.f32.gmra.mxu0 %v1002
      %v1408 = vpop.f32.mrf.mxu0
      %v1409 = vadd.f32 0.0, %v1408
      %1410 = vmatmul.f32.gmra.mxu0 %v1005
      %v1411 = vpop.f32.mrf.mxu0
      %1412 = vmatmul.f32.gmra.mxu0 %v1008
      %v1413 = vpop.f32.mrf.mxu0
      %1414 = vmatmul.f32.gmra.mxu0 %v1011
      %v1415 = vpop.f32.mrf.mxu0
      %v1416 = vadd.f32 0.0, %v1415
      %1417 = vmatmul.f32.gmra.mxu0 %v1014
      %v1418 = vpop.f32.mrf.mxu0
      %v1419 = vadd.f32 0.0, %v1418
      %1420 = vmatmul.f32.gmra.mxu0 %v1017
      %v1421 = vpop.f32.mrf.mxu0
      %1422 = vmatmul.f32.gmra.mxu0 %v1020
      %v1423 = vpop.f32.mrf.mxu0
      %1424 = vmatmul.f32.gmra.mxu0 %v1023
      %v1425 = vpop.f32.mrf.mxu0
      %v1426 = vadd.f32 0.0, %v1425
      %1427 = vmatmul.f32.gmra.mxu0 %v1026
      %v1428 = vpop.f32.mrf.mxu0
      %v1429 = vadd.f32 0.0, %v1428
      %1430 = vmatmul.f32.gmra.mxu0 %v1029
      %v1431 = vpop.f32.mrf.mxu0
      %1432 = vmatmul.f32.gmra.mxu0 %v1032
      %v1433 = vpop.f32.mrf.mxu0
      %1434 = vmatmul.f32.gmra.mxu0 %v1035
      %v1435 = vpop.f32.mrf.mxu0
      %v1436 = vadd.f32 0.0, %v1435
      %1437 = vmatmul.f32.gmra.mxu0 %v1038
      %v1438 = vpop.f32.mrf.mxu0
      %v1439 = vadd.f32 0.0, %v1438
      %1440 = vmatmul.f32.gmra.mxu0 %v1041
      %v1441 = vpop.f32.mrf.mxu0
      %1442 = vmatmul.f32.gmra.mxu0 %v1044
      %v1443 = vpop.f32.mrf.mxu0
      %1444 = vmatmul.f32.gmra.mxu0 %v1047
      %v1445 = vpop.f32.mrf.mxu0
      %v1446 = vadd.f32 0.0, %v1445
      %1447 = vmatmul.f32.gmra.mxu0 %v1050
      %v1448 = vpop.f32.mrf.mxu0
      %v1449 = vadd.f32 0.0, %v1448
      %1450 = vmatmul.f32.gmra.mxu0 %v1053
      %v1451 = vpop.f32.mrf.mxu0
      %1452 = vmatmul.f32.gmra.mxu0 %v1056
      %v1453 = vpop.f32.mrf.mxu0
      %1454 = vmatmul.f32.gmra.mxu0 %v1059
      %v1455 = vpop.f32.mrf.mxu0
      %v1456 = vadd.f32 0.0, %v1455
      %1457 = vmatmul.f32.gmra.mxu0 %v1062
      %v1458 = vpop.f32.mrf.mxu0
      %v1459 = vadd.f32 0.0, %v1458
      %1460 = vmatmul.f32.gmra.mxu0 %v1065
      %v1461 = vpop.f32.mrf.mxu0
      %1462 = vmatmul.f32.gmra.mxu0 %v1068
      %v1463 = vpop.f32.mrf.mxu0
      %1464 = vmatmul.f32.gmra.mxu0 %v1071
      %v1465 = vpop.f32.mrf.mxu0
      %v1466 = vadd.f32 0.0, %v1465
      %1467 = vmatmul.f32.gmra.mxu0 %v1074
      %v1468 = vpop.f32.mrf.mxu0
      %v1469 = vadd.f32 0.0, %v1468
      %1470 = vmatmul.f32.gmra.mxu0 %v1077
      %v1471 = vpop.f32.mrf.mxu0
      %1472 = vmatmul.f32.gmra.mxu0 %v1080
      %v1473 = vpop.f32.mrf.mxu0
      %1474 = vmatmul.f32.gmra.mxu0 %v1083
      %v1475 = vpop.f32.mrf.mxu0
      %v1476 = vadd.f32 0.0, %v1475
      %1477 = vmatmul.f32.gmra.mxu0 %v1086
      %v1478 = vpop.f32.mrf.mxu0
      %v1479 = vadd.f32 0.0, %v1478
      %1480 = vmatmul.f32.gmra.mxu0 %v1089
      %v1481 = vpop.f32.mrf.mxu0
      %1482 = vmatmul.f32.gmra.mxu0 %v1092
      %v1483 = vpop.f32.mrf.mxu0
      %1484 = vmatmul.f32.gmra.mxu0 %v1095
      %v1485 = vpop.f32.mrf.mxu0
      %v1486 = vadd.f32 0.0, %v1485
      %1487 = vmatmul.f32.gmra.mxu0 %v1098
      %v1488 = vpop.f32.mrf.mxu0
      %v1489 = vadd.f32 0.0, %v1488
      %1490 = vmatmul.f32.gmra.mxu0 %v1101
      %v1491 = vpop.f32.mrf.mxu0
      %1492 = vmatmul.f32.gmra.mxu0 %v1104
      %v1493 = vpop.f32.mrf.mxu0
      %1494 = vmatmul.f32.gmra.mxu0 %v1107
      %v1495 = vpop.f32.mrf.mxu0
      %v1496 = vadd.f32 0.0, %v1495
      %1497 = vmatmul.f32.gmra.mxu0 %v1110
      %v1498 = vpop.f32.mrf.mxu0
      %v1499 = vadd.f32 0.0, %v1498
      %1500 = vmatmul.f32.gmra.mxu0 %v1113
      %v1501 = vpop.f32.mrf.mxu0
      %1502 = vmatmul.f32.gmra.mxu0 %v1116
      %v1503 = vpop.f32.mrf.mxu0
      %1504 = vmatmul.f32.gmra.mxu0 %v1119
      %v1505 = vpop.f32.mrf.mxu0
      %v1506 = vadd.f32 0.0, %v1505
      %1507 = vmatmul.f32.gmra.mxu0 %v1122
      %v1508 = vpop.f32.mrf.mxu0
      %v1509 = vadd.f32 0.0, %v1508
      %1510 = vmatmul.f32.gmra.mxu0 %v1125
      %v1511 = vpop.f32.mrf.mxu0
      %1512 = vmatmul.f32.gmra.mxu0 %v1128
      %v1513 = vpop.f32.mrf.mxu0
      %1514 = vmatmul.f32.gmra.mxu0 %v1131
      %v1515 = vpop.f32.mrf.mxu0
      %v1516 = vadd.f32 0.0, %v1515
      %1517 = vmatmul.f32.gmra.mxu0 %v1134
      %v1518 = vpop.f32.mrf.mxu0
      %v1519 = vadd.f32 0.0, %v1518
      %1520 = vmatmul.f32.gmra.mxu0 %v1137
      %v1521 = vpop.f32.mrf.mxu0
      %1522 = vmatmul.f32.gmra.mxu0 %v1140
      %v1523 = vpop.f32.mrf.mxu0
      %1524 = vmatmul.f32.gmra.mxu0 %v1143
      %v1525 = vpop.f32.mrf.mxu0
      %v1526 = vadd.f32 0.0, %v1525
      %1527 = vmatmul.f32.gmra.mxu0 %v1146
      %v1528 = vpop.f32.mrf.mxu0
      %v1529 = vadd.f32 0.0, %v1528
      %1530 = vmatmul.f32.gmra.mxu0 %v1149
      %v1531 = vpop.f32.mrf.mxu0
      %1532 = vmatmul.f32.gmra.mxu0 %v1152
      %v1533 = vpop.f32.mrf.mxu0
      %1534 = vmatmul.f32.gmra.mxu0 %v1155
      %v1535 = vpop.f32.mrf.mxu0
      %v1536 = vadd.f32 0.0, %v1535
      %1537 = vmatmul.f32.gmra.mxu0 %v1158
      %v1538 = vpop.f32.mrf.mxu0
      %v1539 = vadd.f32 0.0, %v1538
      %1540 = vmatmul.f32.gmra.mxu0 %v1161
      %v1541 = vpop.f32.mrf.mxu0
      %1542 = vdwg.mxu0
      %1543 = vmatpush.msra.mxu0 0.0
      %1544 = vmatpush.msra.mxu0 0.0
      %1545 = vmatpush.msra.mxu0 0.0
      %1546 = vmatpush.msra.mxu0 0.0
      %1547 = vmatpush.msra.mxu0 0.0
      %1548 = vmatpush.msra.mxu0 0.0
      %1549 = vmatpush.msra.mxu0 0.0
      %1550 = vmatpush.msra.mxu0 0.0
      %1551 = vmatpush.msra.mxu0 0.0
      %1552 = vmatpush.msra.mxu0 0.0
      %1553 = vmatpush.msra.mxu0 0.0
      %1554 = vmatpush.msra.mxu0 0.0
      %1555 = vmatpush.msra.mxu0 0.0
      %1556 = vmatpush.msra.mxu0 0.0
      %1557 = vmatpush.msra.mxu0 %v1171
      %1558 = vmatpush.msra.mxu0 %v966
      %1559 = vmatmul.f32.gmra.mxu0 %v972
      %v1560 = vpop.f32.mrf.mxu0
      %1561 = vmatmul.f32.gmra.mxu0 %v975
      %v1562 = vpop.f32.mrf.mxu0
      %v1563 = vadd.f32 0.0, %v1562
      %1564 = vmatmul.f32.gmra.mxu0 %v978
      %v1565 = vpop.f32.mrf.mxu0
      %v1566 = vadd.f32 0.0, %v1565
      %1567 = vmatmul.f32.gmra.mxu0 %v981
      %v1568 = vpop.f32.mrf.mxu0
      %v1569 = vadd.f32 0.0, %v1568
      %1570 = vmatmul.f32.gmra.mxu0 %v984
      %v1571 = vpop.f32.mrf.mxu0
      %1572 = vmatmul.f32.gmra.mxu0 %v987
      %v1573 = vpop.f32.mrf.mxu0
      %v1574 = vadd.f32 0.0, %v1573
      %1575 = vmatmul.f32.gmra.mxu0 %v990
      %v1576 = vpop.f32.mrf.mxu0
      %v1577 = vadd.f32 0.0, %v1576
      %1578 = vmatmul.f32.gmra.mxu0 %v993
      %v1579 = vpop.f32.mrf.mxu0
      %v1580 = vadd.f32 0.0, %v1579
      %1581 = vmatmul.f32.gmra.mxu0 %v996
      %v1582 = vpop.f32.mrf.mxu0
      %1583 = vmatmul.f32.gmra.mxu0 %v999
      %v1584 = vpop.f32.mrf.mxu0
      %v1585 = vadd.f32 0.0, %v1584
      %1586 = vmatmul.f32.gmra.mxu0 %v1002
      %v1587 = vpop.f32.mrf.mxu0
      %v1588 = vadd.f32 0.0, %v1587
      %1589 = vmatmul.f32.gmra.mxu0 %v1005
      %v1590 = vpop.f32.mrf.mxu0
      %v1591 = vadd.f32 0.0, %v1590
      %1592 = vmatmul.f32.gmra.mxu0 %v1008
      %v1593 = vpop.f32.mrf.mxu0
      %1594 = vmatmul.f32.gmra.mxu0 %v1011
      %v1595 = vpop.f32.mrf.mxu0
      %v1596 = vadd.f32 0.0, %v1595
      %1597 = vmatmul.f32.gmra.mxu0 %v1014
      %v1598 = vpop.f32.mrf.mxu0
      %v1599 = vadd.f32 0.0, %v1598
      %1600 = vmatmul.f32.gmra.mxu0 %v1017
      %v1601 = vpop.f32.mrf.mxu0
      %v1602 = vadd.f32 0.0, %v1601
      %1603 = vmatmul.f32.gmra.mxu0 %v1020
      %v1604 = vpop.f32.mrf.mxu0
      %1605 = vmatmul.f32.gmra.mxu0 %v1023
      %v1606 = vpop.f32.mrf.mxu0
      %v1607 = vadd.f32 0.0, %v1606
      %1608 = vmatmul.f32.gmra.mxu0 %v1026
      %v1609 = vpop.f32.mrf.mxu0
      %v1610 = vadd.f32 0.0, %v1609
      %1611 = vmatmul.f32.gmra.mxu0 %v1029
      %v1612 = vpop.f32.mrf.mxu0
      %v1613 = vadd.f32 0.0, %v1612
      %1614 = vmatmul.f32.gmra.mxu0 %v1032
      %v1615 = vpop.f32.mrf.mxu0
      %1616 = vmatmul.f32.gmra.mxu0 %v1035
      %v1617 = vpop.f32.mrf.mxu0
      %v1618 = vadd.f32 0.0, %v1617
      %1619 = vmatmul.f32.gmra.mxu0 %v1038
      %v1620 = vpop.f32.mrf.mxu0
      %v1621 = vadd.f32 0.0, %v1620
      %1622 = vmatmul.f32.gmra.mxu0 %v1041
      %v1623 = vpop.f32.mrf.mxu0
      %v1624 = vadd.f32 0.0, %v1623
      %1625 = vmatmul.f32.gmra.mxu0 %v1044
      %v1626 = vpop.f32.mrf.mxu0
      %1627 = vmatmul.f32.gmra.mxu0 %v1047
      %v1628 = vpop.f32.mrf.mxu0
      %v1629 = vadd.f32 0.0, %v1628
      %1630 = vmatmul.f32.gmra.mxu0 %v1050
      %v1631 = vpop.f32.mrf.mxu0
      %v1632 = vadd.f32 0.0, %v1631
      %1633 = vmatmul.f32.gmra.mxu0 %v1053
      %v1634 = vpop.f32.mrf.mxu0
      %v1635 = vadd.f32 0.0, %v1634
      %1636 = vmatmul.f32.gmra.mxu0 %v1056
      %v1637 = vpop.f32.mrf.mxu0
      %1638 = vmatmul.f32.gmra.mxu0 %v1059
      %v1639 = vpop.f32.mrf.mxu0
      %v1640 = vadd.f32 0.0, %v1639
      %1641 = vmatmul.f32.gmra.mxu0 %v1062
      %v1642 = vpop.f32.mrf.mxu0
      %v1643 = vadd.f32 0.0, %v1642
      %1644 = vmatmul.f32.gmra.mxu0 %v1065
      %v1645 = vpop.f32.mrf.mxu0
      %v1646 = vadd.f32 0.0, %v1645
      %1647 = vmatmul.f32.gmra.mxu0 %v1068
      %v1648 = vpop.f32.mrf.mxu0
      %1649 = vmatmul.f32.gmra.mxu0 %v1071
      %v1650 = vpop.f32.mrf.mxu0
      %v1651 = vadd.f32 0.0, %v1650
      %1652 = vmatmul.f32.gmra.mxu0 %v1074
      %v1653 = vpop.f32.mrf.mxu0
      %v1654 = vadd.f32 0.0, %v1653
      %1655 = vmatmul.f32.gmra.mxu0 %v1077
      %v1656 = vpop.f32.mrf.mxu0
      %v1657 = vadd.f32 0.0, %v1656
      %1658 = vmatmul.f32.gmra.mxu0 %v1080
      %v1659 = vpop.f32.mrf.mxu0
      %1660 = vmatmul.f32.gmra.mxu0 %v1083
      %v1661 = vpop.f32.mrf.mxu0
      %v1662 = vadd.f32 0.0, %v1661
      %1663 = vmatmul.f32.gmra.mxu0 %v1086
      %v1664 = vpop.f32.mrf.mxu0
      %v1665 = vadd.f32 0.0, %v1664
      %1666 = vmatmul.f32.gmra.mxu0 %v1089
      %v1667 = vpop.f32.mrf.mxu0
      %v1668 = vadd.f32 0.0, %v1667
      %1669 = vmatmul.f32.gmra.mxu0 %v1092
      %v1670 = vpop.f32.mrf.mxu0
      %1671 = vmatmul.f32.gmra.mxu0 %v1095
      %v1672 = vpop.f32.mrf.mxu0
      %v1673 = vadd.f32 0.0, %v1672
      %1674 = vmatmul.f32.gmra.mxu0 %v1098
      %v1675 = vpop.f32.mrf.mxu0
      %v1676 = vadd.f32 0.0, %v1675
      %1677 = vmatmul.f32.gmra.mxu0 %v1101
      %v1678 = vpop.f32.mrf.mxu0
      %v1679 = vadd.f32 0.0, %v1678
      %1680 = vmatmul.f32.gmra.mxu0 %v1104
      %v1681 = vpop.f32.mrf.mxu0
      %1682 = vmatmul.f32.gmra.mxu0 %v1107
      %v1683 = vpop.f32.mrf.mxu0
      %v1684 = vadd.f32 0.0, %v1683
      %1685 = vmatmul.f32.gmra.mxu0 %v1110
      %v1686 = vpop.f32.mrf.mxu0
      %v1687 = vadd.f32 0.0, %v1686
      %1688 = vmatmul.f32.gmra.mxu0 %v1113
      %v1689 = vpop.f32.mrf.mxu0
      %v1690 = vadd.f32 0.0, %v1689
      %1691 = vmatmul.f32.gmra.mxu0 %v1116
      %v1692 = vpop.f32.mrf.mxu0
      %1693 = vmatmul.f32.gmra.mxu0 %v1119
      %v1694 = vpop.f32.mrf.mxu0
      %v1695 = vadd.f32 0.0, %v1694
      %1696 = vmatmul.f32.gmra.mxu0 %v1122
      %v1697 = vpop.f32.mrf.mxu0
      %v1698 = vadd.f32 0.0, %v1697
      %1699 = vmatmul.f32.gmra.mxu0 %v1125
      %v1700 = vpop.f32.mrf.mxu0
      %v1701 = vadd.f32 0.0, %v1700
      %1702 = vmatmul.f32.gmra.mxu0 %v1128
      %v1703 = vpop.f32.mrf.mxu0
      %1704 = vmatmul.f32.gmra.mxu0 %v1131
      %v1705 = vpop.f32.mrf.mxu0
      %v1706 = vadd.f32 0.0, %v1705
      %1707 = vmatmul.f32.gmra.mxu0 %v1134
      %v1708 = vpop.f32.mrf.mxu0
      %v1709 = vadd.f32 0.0, %v1708
      %1710 = vmatmul.f32.gmra.mxu0 %v1137
      %v1711 = vpop.f32.mrf.mxu0
      %v1712 = vadd.f32 0.0, %v1711
      %1713 = vmatmul.f32.gmra.mxu0 %v1140
      %v1714 = vpop.f32.mrf.mxu0
      %1715 = vmatmul.f32.gmra.mxu0 %v1143
      %v1716 = vpop.f32.mrf.mxu0
      %v1717 = vadd.f32 0.0, %v1716
      %1718 = vmatmul.f32.gmra.mxu0 %v1146
      %v1719 = vpop.f32.mrf.mxu0
      %v1720 = vadd.f32 0.0, %v1719
      %1721 = vmatmul.f32.gmra.mxu0 %v1149
      %v1722 = vpop.f32.mrf.mxu0
      %v1723 = vadd.f32 0.0, %v1722
      %1724 = vmatmul.f32.gmra.mxu0 %v1152
      %v1725 = vpop.f32.mrf.mxu0
      %1726 = vmatmul.f32.gmra.mxu0 %v1155
      %v1727 = vpop.f32.mrf.mxu0
      %v1728 = vadd.f32 0.0, %v1727
      %1729 = vmatmul.f32.gmra.mxu0 %v1158
      %v1730 = vpop.f32.mrf.mxu0
      %v1731 = vadd.f32 0.0, %v1730
      %1732 = vmatmul.f32.gmra.mxu0 %v1161
      %v1733 = vpop.f32.mrf.mxu0
      %v1734 = vadd.f32 0.0, %v1733
      %1735 = vdwg.mxu0
      %vm1768 = vcmask 1046528
      %v1769 = vrot.slane %v1386, 1
      %v1770 = vrot.slane %v1389, 1
      %v1771 = vsel %vm1768, %v1769, %v1770
      %v1772 = vrot.slane %v1396, 1
      %v1773 = vrot.slane %v1399, 1
      %v1774 = vsel %vm1768, %v1772, %v1773
      %v1775 = vrot.slane %v1406, 1
      %v1776 = vrot.slane %v1409, 1
      %v1777 = vsel %vm1768, %v1775, %v1776
      %v1778 = vrot.slane %v1416, 1
      %v1779 = vrot.slane %v1419, 1
      %v1780 = vsel %vm1768, %v1778, %v1779
      %v1781 = vrot.slane %v1426, 1
      %v1782 = vrot.slane %v1429, 1
      %v1783 = vsel %vm1768, %v1781, %v1782
      %v1784 = vrot.slane %v1436, 1
      %v1785 = vrot.slane %v1439, 1
      %v1786 = vsel %vm1768, %v1784, %v1785
      %v1787 = vrot.slane %v1446, 1
      %v1788 = vrot.slane %v1449, 1
      %v1789 = vsel %vm1768, %v1787, %v1788
      %v1790 = vrot.slane %v1456, 1
      %v1791 = vrot.slane %v1459, 1
      %v1792 = vsel %vm1768, %v1790, %v1791
      %v1793 = vrot.slane %v1466, 1
      %v1794 = vrot.slane %v1469, 1
      %v1795 = vsel %vm1768, %v1793, %v1794
      %v1796 = vrot.slane %v1476, 1
      %v1797 = vrot.slane %v1479, 1
      %v1798 = vsel %vm1768, %v1796, %v1797
      %v1799 = vrot.slane %v1486, 1
      %v1800 = vrot.slane %v1489, 1
      %v1801 = vsel %vm1768, %v1799, %v1800
      %v1802 = vrot.slane %v1496, 1
      %v1803 = vrot.slane %v1499, 1
      %v1804 = vsel %vm1768, %v1802, %v1803
      %v1805 = vrot.slane %v1506, 1
      %v1806 = vrot.slane %v1509, 1
      %v1807 = vsel %vm1768, %v1805, %v1806
      %v1808 = vrot.slane %v1516, 1
      %v1809 = vrot.slane %v1519, 1
      %v1810 = vsel %vm1768, %v1808, %v1809
      %v1811 = vrot.slane %v1526, 1
      %v1812 = vrot.slane %v1529, 1
      %v1813 = vsel %vm1768, %v1811, %v1812
      %v1814 = vrot.slane %v1536, 1
      %v1815 = vrot.slane %v1539, 1
      %v1816 = vsel %vm1768, %v1814, %v1815
      %v1865 = vadd.f32 %v1191, %v1769
      %v1866 = vadd.f32 %v1194, %v1771
      %v1867 = vadd.f32 %v1197, %v1770
      %v1868 = vadd.f32 %v1202, %v1772
      %v1869 = vadd.f32 %v1205, %v1774
      %v1870 = vadd.f32 %v1208, %v1773
      %v1871 = vadd.f32 %v1213, %v1775
      %v1872 = vadd.f32 %v1216, %v1777
      %v1873 = vadd.f32 %v1219, %v1776
      %v1874 = vadd.f32 %v1224, %v1778
      %v1875 = vadd.f32 %v1227, %v1780
      %v1876 = vadd.f32 %v1230, %v1779
      %v1877 = vadd.f32 %v1235, %v1781
      %v1878 = vadd.f32 %v1238, %v1783
      %v1879 = vadd.f32 %v1241, %v1782
      %v1880 = vadd.f32 %v1246, %v1784
      %v1881 = vadd.f32 %v1249, %v1786
      %v1882 = vadd.f32 %v1252, %v1785
      %v1883 = vadd.f32 %v1257, %v1787
      %v1884 = vadd.f32 %v1260, %v1789
      %v1885 = vadd.f32 %v1263, %v1788
      %v1886 = vadd.f32 %v1268, %v1790
      %v1887 = vadd.f32 %v1271, %v1792
      %v1888 = vadd.f32 %v1274, %v1791
      %v1889 = vadd.f32 %v1279, %v1793
      %v1890 = vadd.f32 %v1282, %v1795
      %v1891 = vadd.f32 %v1285, %v1794
      %v1892 = vadd.f32 %v1290, %v1796
      %v1893 = vadd.f32 %v1293, %v1798
      %v1894 = vadd.f32 %v1296, %v1797
      %v1895 = vadd.f32 %v1301, %v1799
      %v1896 = vadd.f32 %v1304, %v1801
      %v1897 = vadd.f32 %v1307, %v1800
      %v1898 = vadd.f32 %v1312, %v1802
      %v1899 = vadd.f32 %v1315, %v1804
      %v1900 = vadd.f32 %v1318, %v1803
      %v1901 = vadd.f32 %v1323, %v1805
      %v1902 = vadd.f32 %v1326, %v1807
      %v1903 = vadd.f32 %v1329, %v1806
      %v1904 = vadd.f32 %v1334, %v1808
      %v1905 = vadd.f32 %v1337, %v1810
      %v1906 = vadd.f32 %v1340, %v1809
      %v1907 = vadd.f32 %v1345, %v1811
      %v1908 = vadd.f32 %v1348, %v1813
      %v1909 = vadd.f32 %v1351, %v1812
      %v1910 = vadd.f32 %v1356, %v1814
      %v1911 = vadd.f32 %v1359, %v1816
      %v1912 = vadd.f32 %v1362, %v1815
      %vm1961 = vcmask 1045504
      %v1962 = vrot.slane %v1563, 2
      %v1963 = vrot.slane %v1566, 2
      %v1964 = vsel %vm1961, %v1962, %v1963
      %v1965 = vrot.slane %v1569, 2
      %v1966 = vsel %vm1961, %v1963, %v1965
      %v1967 = vrot.slane %v1574, 2
      %v1968 = vrot.slane %v1577, 2
      %v1969 = vsel %vm1961, %v1967, %v1968
      %v1970 = vrot.slane %v1580, 2
      %v1971 = vsel %vm1961, %v1968, %v1970
      %v1972 = vrot.slane %v1585, 2
      %v1973 = vrot.slane %v1588, 2
      %v1974 = vsel %vm1961, %v1972, %v1973
      %v1975 = vrot.slane %v1591, 2
      %v1976 = vsel %vm1961, %v1973, %v1975
      %v1977 = vrot.slane %v1596, 2
      %v1978 = vrot.slane %v1599, 2
      %v1979 = vsel %vm1961, %v1977, %v1978
      %v1980 = vrot.slane %v1602, 2
      %v1981 = vsel %vm1961, %v1978, %v1980
      %v1982 = vrot.slane %v1607, 2
      %v1983 = vrot.slane %v1610, 2
      %v1984 = vsel %vm1961, %v1982, %v1983
      %v1985 = vrot.slane %v1613, 2
      %v1986 = vsel %vm1961, %v1983, %v1985
      %v1987 = vrot.slane %v1618, 2
      %v1988 = vrot.slane %v1621, 2
      %v1989 = vsel %vm1961, %v1987, %v1988
      %v1990 = vrot.slane %v1624, 2
      %v1991 = vsel %vm1961, %v1988, %v1990
      %v1992 = vrot.slane %v1629, 2
      %v1993 = vrot.slane %v1632, 2
      %v1994 = vsel %vm1961, %v1992, %v1993
      %v1995 = vrot.slane %v1635, 2
      %v1996 = vsel %vm1961, %v1993, %v1995
      %v1997 = vrot.slane %v1640, 2
      %v1998 = vrot.slane %v1643, 2
      %v1999 = vsel %vm1961, %v1997, %v1998
      %v2000 = vrot.slane %v1646, 2
      %v2001 = vsel %vm1961, %v1998, %v2000
      %v2002 = vrot.slane %v1651, 2
      %v2003 = vrot.slane %v1654, 2
      %v2004 = vsel %vm1961, %v2002, %v2003
      %v2005 = vrot.slane %v1657, 2
      %v2006 = vsel %vm1961, %v2003, %v2005
      %v2007 = vrot.slane %v1662, 2
      %v2008 = vrot.slane %v1665, 2
      %v2009 = vsel %vm1961, %v2007, %v2008
      %v2010 = vrot.slane %v1668, 2
      %v2011 = vsel %vm1961, %v2008, %v2010
      %v2012 = vrot.slane %v1673, 2
      %v2013 = vrot.slane %v1676, 2
      %v2014 = vsel %vm1961, %v2012, %v2013
      %v2015 = vrot.slane %v1679, 2
      %v2016 = vsel %vm1961, %v2013, %v2015
      %v2017 = vrot.slane %v1684, 2
      %v2018 = vrot.slane %v1687, 2
      %v2019 = vsel %vm1961, %v2017, %v2018
      %v2020 = vrot.slane %v1690, 2
      %v2021 = vsel %vm1961, %v2018, %v2020
      %v2022 = vrot.slane %v1695, 2
      %v2023 = vrot.slane %v1698, 2
      %v2024 = vsel %vm1961, %v2022, %v2023
      %v2025 = vrot.slane %v1701, 2
      %v2026 = vsel %vm1961, %v2023, %v2025
      %v2027 = vrot.slane %v1706, 2
      %v2028 = vrot.slane %v1709, 2
      %v2029 = vsel %vm1961, %v2027, %v2028
      %v2030 = vrot.slane %v1712, 2
      %v2031 = vsel %vm1961, %v2028, %v2030
      %v2032 = vrot.slane %v1717, 2
      %v2033 = vrot.slane %v1720, 2
      %v2034 = vsel %vm1961, %v2032, %v2033
      %v2035 = vrot.slane %v1723, 2
      %v2036 = vsel %vm1961, %v2033, %v2035
      %v2037 = vrot.slane %v1728, 2
      %v2038 = vrot.slane %v1731, 2
      %v2039 = vsel %vm1961, %v2037, %v2038
      %v2040 = vrot.slane %v1734, 2
      %v2041 = vsel %vm1961, %v2038, %v2040
      %v2090 = vadd.f32 %v1865, %v1962
      %v2091 = vadd.f32 %v1866, %v1964
      %v2092 = vadd.f32 %v1867, %v1966
      %v2093 = vadd.f32 %v1868, %v1967
      %v2094 = vadd.f32 %v1869, %v1969
      %v2095 = vadd.f32 %v1870, %v1971
      %v2096 = vadd.f32 %v1871, %v1972
      %v2097 = vadd.f32 %v1872, %v1974
      %v2098 = vadd.f32 %v1873, %v1976
      %v2099 = vadd.f32 %v1874, %v1977
      %v2100 = vadd.f32 %v1875, %v1979
      %v2101 = vadd.f32 %v1876, %v1981
      %v2102 = vadd.f32 %v1877, %v1982
      %v2103 = vadd.f32 %v1878, %v1984
      %v2104 = vadd.f32 %v1879, %v1986
      %v2105 = vadd.f32 %v1880, %v1987
      %v2106 = vadd.f32 %v1881, %v1989
      %v2107 = vadd.f32 %v1882, %v1991
      %v2108 = vadd.f32 %v1883, %v1992
      %v2109 = vadd.f32 %v1884, %v1994
      %v2110 = vadd.f32 %v1885, %v1996
      %v2111 = vadd.f32 %v1886, %v1997
      %v2112 = vadd.f32 %v1887, %v1999
      %v2113 = vadd.f32 %v1888, %v2001
      %v2114 = vadd.f32 %v1889, %v2002
      %v2115 = vadd.f32 %v1890, %v2004
      %v2116 = vadd.f32 %v1891, %v2006
      %v2117 = vadd.f32 %v1892, %v2007
      %v2118 = vadd.f32 %v1893, %v2009
      %v2119 = vadd.f32 %v1894, %v2011
      %v2120 = vadd.f32 %v1895, %v2012
      %v2121 = vadd.f32 %v1896, %v2014
      %v2122 = vadd.f32 %v1897, %v2016
      %v2123 = vadd.f32 %v1898, %v2017
      %v2124 = vadd.f32 %v1899, %v2019
      %v2125 = vadd.f32 %v1900, %v2021
      %v2126 = vadd.f32 %v1901, %v2022
      %v2127 = vadd.f32 %v1902, %v2024
      %v2128 = vadd.f32 %v1903, %v2026
      %v2129 = vadd.f32 %v1904, %v2027
      %v2130 = vadd.f32 %v1905, %v2029
      %v2131 = vadd.f32 %v1906, %v2031
      %v2132 = vadd.f32 %v1907, %v2032
      %v2133 = vadd.f32 %v1908, %v2034
      %v2134 = vadd.f32 %v1909, %v2036
      %v2135 = vadd.f32 %v1910, %v2037
      %v2136 = vadd.f32 %v1911, %v2039
      %v2137 = vadd.f32 %v1912, %v2041
      %v2138 = vperm.slane %v198, 0
      %v2139 = vadd.f32 %v2090, %v2138
      %v2140 = vadd.f32 %v2091, %v2138
      %v2141 = vadd.f32 %v2092, %v2138
      %v2142 = vadd.f32 %v2093, %v2138
      %v2143 = vadd.f32 %v2094, %v2138
      %v2144 = vadd.f32 %v2095, %v2138
      %v2145 = vadd.f32 %v2096, %v2138
      %v2146 = vadd.f32 %v2097, %v2138
      %v2147 = vadd.f32 %v2098, %v2138
      %v2148 = vadd.f32 %v2099, %v2138
      %v2149 = vadd.f32 %v2100, %v2138
      %v2150 = vadd.f32 %v2101, %v2138
      %v2151 = vadd.f32 %v2102, %v2138
      %v2152 = vadd.f32 %v2103, %v2138
      %v2153 = vadd.f32 %v2104, %v2138
      %v2154 = vadd.f32 %v2105, %v2138
      %v2155 = vadd.f32 %v2106, %v2138
      %v2156 = vadd.f32 %v2107, %v2138
      %v2157 = vadd.f32 %v2108, %v2138
      %v2158 = vadd.f32 %v2109, %v2138
      %v2159 = vadd.f32 %v2110, %v2138
      %v2160 = vadd.f32 %v2111, %v2138
      %v2161 = vadd.f32 %v2112, %v2138
      %v2162 = vadd.f32 %v2113, %v2138
      %v2163 = vadd.f32 %v2114, %v2138
      %v2164 = vadd.f32 %v2115, %v2138
      %v2165 = vadd.f32 %v2116, %v2138
      %v2166 = vadd.f32 %v2117, %v2138
      %v2167 = vadd.f32 %v2118, %v2138
      %v2168 = vadd.f32 %v2119, %v2138
      %v2169 = vadd.f32 %v2120, %v2138
      %v2170 = vadd.f32 %v2121, %v2138
      %v2171 = vadd.f32 %v2122, %v2138
      %v2172 = vadd.f32 %v2123, %v2138
      %v2173 = vadd.f32 %v2124, %v2138
      %v2174 = vadd.f32 %v2125, %v2138
      %v2175 = vadd.f32 %v2126, %v2138
      %v2176 = vadd.f32 %v2127, %v2138
      %v2177 = vadd.f32 %v2128, %v2138
      %v2178 = vadd.f32 %v2129, %v2138
      %v2179 = vadd.f32 %v2130, %v2138
      %v2180 = vadd.f32 %v2131, %v2138
      %v2181 = vadd.f32 %v2132, %v2138
      %v2182 = vadd.f32 %v2133, %v2138
      %v2183 = vadd.f32 %v2134, %v2138
      %v2184 = vadd.f32 %v2135, %v2138
      %v2185 = vadd.f32 %v2136, %v2138
      %v2186 = vadd.f32 %v2137, %v2138
      %v2187 = vmax.f32 %v2139, 0.0
      %v2188 = vmax.f32 %v2140, 0.0
      %v2189 = vmax.f32 %v2141, 0.0
      %v2190 = vmax.f32 %v2142, 0.0
      %v2191 = vmax.f32 %v2143, 0.0
      %v2192 = vmax.f32 %v2144, 0.0
      %v2193 = vmax.f32 %v2145, 0.0
      %v2194 = vmax.f32 %v2146, 0.0
      %v2195 = vmax.f32 %v2147, 0.0
      %v2196 = vmax.f32 %v2148, 0.0
      %v2197 = vmax.f32 %v2149, 0.0
      %v2198 = vmax.f32 %v2150, 0.0
      %v2199 = vmax.f32 %v2151, 0.0
      %v2200 = vmax.f32 %v2152, 0.0
      %v2201 = vmax.f32 %v2153, 0.0
      %v2202 = vmax.f32 %v2154, 0.0
      %v2203 = vmax.f32 %v2155, 0.0
      %v2204 = vmax.f32 %v2156, 0.0
      %v2205 = vmax.f32 %v2157, 0.0
      %v2206 = vmax.f32 %v2158, 0.0
      %v2207 = vmax.f32 %v2159, 0.0
      %v2208 = vmax.f32 %v2160, 0.0
      %v2209 = vmax.f32 %v2161, 0.0
      %v2210 = vmax.f32 %v2162, 0.0
      %v2211 = vmax.f32 %v2163, 0.0
      %v2212 = vmax.f32 %v2164, 0.0
      %v2213 = vmax.f32 %v2165, 0.0
      %v2214 = vmax.f32 %v2166, 0.0
      %v2215 = vmax.f32 %v2167, 0.0
      %v2216 = vmax.f32 %v2168, 0.0
      %v2217 = vmax.f32 %v2169, 0.0
      %v2218 = vmax.f32 %v2170, 0.0
      %v2219 = vmax.f32 %v2171, 0.0
      %v2220 = vmax.f32 %v2172, 0.0
      %v2221 = vmax.f32 %v2173, 0.0
      %v2222 = vmax.f32 %v2174, 0.0
      %v2223 = vmax.f32 %v2175, 0.0
      %v2224 = vmax.f32 %v2176, 0.0
      %v2225 = vmax.f32 %v2177, 0.0
      %v2226 = vmax.f32 %v2178, 0.0
      %v2227 = vmax.f32 %v2179, 0.0
      %v2228 = vmax.f32 %v2180, 0.0
      %v2229 = vmax.f32 %v2181, 0.0
      %v2230 = vmax.f32 %v2182, 0.0
      %v2231 = vmax.f32 %v2183, 0.0
      %v2232 = vmax.f32 %v2184, 0.0
      %v2233 = vmax.f32 %v2185, 0.0
      %v2234 = vmax.f32 %v2186, 0.0
      %2235 = vst [vmem:[#allocation3] sm:$0xff] 0.0
      %2236 = vst [vmem:[#allocation3 + $0x8] sm:$0xff] 0.0
      %2237 = vst [vmem:[#allocation3 + $0x10] sm:$0xff] 0.0
      %2238 = vst [vmem:[#allocation3 + $0x18] sm:$0xff] 0.0
      %s2239 = scalar_lea.vmem [#allocation3], 544
      %2240 = vst [vmem:[%s2239] sm:$0xff] 0.0
      %2241 = vst [vmem:[%s2239 + $0x8] sm:$0xff] 0.0
      %2242 = vst [vmem:[%s2239 + $0x10] sm:$0xff] 0.0
      %2243 = vst [vmem:[%s2239 + $0x18] sm:$0xff] 0.0
      %2244 = vst [vmem:[#allocation3] sm:$0xff] 0.0
      %2245 = vst [vmem:[#allocation3 + $0x20] sm:$0xff] 0.0
      %2246 = vst [vmem:[#allocation3 + $0x40] sm:$0xff] 0.0
      %2247 = vst [vmem:[#allocation3 + $0x60] sm:$0xff] 0.0
      %2248 = vst [vmem:[#allocation3 + $0x80] sm:$0xff] 0.0
      %2249 = vst [vmem:[#allocation3 + $0xa0] sm:$0xff] 0.0
      %2250 = vst [vmem:[#allocation3 + $0xc0] sm:$0xff] 0.0
      %2251 = vst [vmem:[#allocation3 + $0xe0] sm:$0xff] 0.0
      %2252 = vst [vmem:[#allocation3 + $0x100] sm:$0xff] 0.0
      %2253 = vst [vmem:[#allocation3 + $0x120] sm:$0xff] 0.0
      %2254 = vst [vmem:[#allocation3 + $0x140] sm:$0xff] 0.0
      %2255 = vst [vmem:[#allocation3 + $0x160] sm:$0xff] 0.0
      %2256 = vst [vmem:[#allocation3 + $0x180] sm:$0xff] 0.0
      %2257 = vst [vmem:[#allocation3 + $0x1a0] sm:$0xff] 0.0
      %2258 = vst [vmem:[#allocation3 + $0x1c0] sm:$0xff] 0.0
      %2259 = vst [vmem:[#allocation3 + $0x1e0] sm:$0xff] 0.0
      %2260 = vst [vmem:[#allocation3 + $0x200] sm:$0xff] 0.0
      %2261 = vst [vmem:[#allocation3 + $0x220] sm:$0xff] 0.0
      %2262 = vst [vmem:[#allocation3 + $0x18] sm:$0xff] 0.0
      %2263 = vst [vmem:[#allocation3 + $0x38] sm:$0xff] 0.0
      %2264 = vst [vmem:[#allocation3 + $0x58] sm:$0xff] 0.0
      %2265 = vst [vmem:[#allocation3 + $0x78] sm:$0xff] 0.0
      %2266 = vst [vmem:[#allocation3 + $0x98] sm:$0xff] 0.0
      %2267 = vst [vmem:[#allocation3 + $0xb8] sm:$0xff] 0.0
      %2268 = vst [vmem:[#allocation3 + $0xd8] sm:$0xff] 0.0
      %2269 = vst [vmem:[#allocation3 + $0xf8] sm:$0xff] 0.0
      %2270 = vst [vmem:[#allocation3 + $0x118] sm:$0xff] 0.0
      %2271 = vst [vmem:[#allocation3 + $0x138] sm:$0xff] 0.0
      %2272 = vst [vmem:[#allocation3 + $0x158] sm:$0xff] 0.0
      %2273 = vst [vmem:[#allocation3 + $0x178] sm:$0xff] 0.0
      %2274 = vst [vmem:[#allocation3 + $0x198] sm:$0xff] 0.0
      %2275 = vst [vmem:[#allocation3 + $0x1b8] sm:$0xff] 0.0
      %2276 = vst [vmem:[#allocation3 + $0x1d8] sm:$0xff] 0.0
      %2277 = vst [vmem:[#allocation3 + $0x1f8] sm:$0xff] 0.0
      %2278 = vst [vmem:[#allocation3 + $0x218] sm:$0xff] 0.0
      %2279 = vst [vmem:[#allocation3 + $0x238] sm:$0xff] 0.0
      %s2280 = scalar_lea.vmem [#allocation3], 32
      %2281 = vst [vmem:[%s2280 + $0x1] sm:$0x80] %v2187
      %2282 = vst [vmem:[%s2280 + $0x9] sm:$0xff] %v2188
      %2283 = vst [vmem:[%s2280 + $0x11] sm:$0x7f] %v2189
      %2284 = vst [vmem:[%s2280 + $0x21] sm:$0x80] %v2190
      %2285 = vst [vmem:[%s2280 + $0x29] sm:$0xff] %v2191
      %2286 = vst [vmem:[%s2280 + $0x31] sm:$0x7f] %v2192
      %2287 = vst [vmem:[%s2280 + $0x41] sm:$0x80] %v2193
      %2288 = vst [vmem:[%s2280 + $0x49] sm:$0xff] %v2194
      %2289 = vst [vmem:[%s2280 + $0x51] sm:$0x7f] %v2195
      %2290 = vst [vmem:[%s2280 + $0x61] sm:$0x80] %v2196
      %2291 = vst [vmem:[%s2280 + $0x69] sm:$0xff] %v2197
      %2292 = vst [vmem:[%s2280 + $0x71] sm:$0x7f] %v2198
      %2293 = vst [vmem:[%s2280 + $0x81] sm:$0x80] %v2199
      %2294 = vst [vmem:[%s2280 + $0x89] sm:$0xff] %v2200
      %2295 = vst [vmem:[%s2280 + $0x91] sm:$0x7f] %v2201
      %2296 = vst [vmem:[%s2280 + $0xa1] sm:$0x80] %v2202
      %2297 = vst [vmem:[%s2280 + $0xa9] sm:$0xff] %v2203
      %2298 = vst [vmem:[%s2280 + $0xb1] sm:$0x7f] %v2204
      %2299 = vst [vmem:[%s2280 + $0xc1] sm:$0x80] %v2205
      %2300 = vst [vmem:[%s2280 + $0xc9] sm:$0xff] %v2206
      %2301 = vst [vmem:[%s2280 + $0xd1] sm:$0x7f] %v2207
      %2302 = vst [vmem:[%s2280 + $0xe1] sm:$0x80] %v2208
      %2303 = vst [vmem:[%s2280 + $0xe9] sm:$0xff] %v2209
      %2304 = vst [vmem:[%s2280 + $0xf1] sm:$0x7f] %v2210
      %2305 = vst [vmem:[%s2280 + $0x101] sm:$0x80] %v2211
      %2306 = vst [vmem:[%s2280 + $0x109] sm:$0xff] %v2212
      %2307 = vst [vmem:[%s2280 + $0x111] sm:$0x7f] %v2213
      %2308 = vst [vmem:[%s2280 + $0x121] sm:$0x80] %v2214
      %2309 = vst [vmem:[%s2280 + $0x129] sm:$0xff] %v2215
      %2310 = vst [vmem:[%s2280 + $0x131] sm:$0x7f] %v2216
      %2311 = vst [vmem:[%s2280 + $0x141] sm:$0x80] %v2217
      %2312 = vst [vmem:[%s2280 + $0x149] sm:$0xff] %v2218
      %2313 = vst [vmem:[%s2280 + $0x151] sm:$0x7f] %v2219
      %2314 = vst [vmem:[%s2280 + $0x161] sm:$0x80] %v2220
      %2315 = vst [vmem:[%s2280 + $0x169] sm:$0xff] %v2221
      %2316 = vst [vmem:[%s2280 + $0x171] sm:$0x7f] %v2222
      %2317 = vst [vmem:[%s2280 + $0x181] sm:$0x80] %v2223
      %2318 = vst [vmem:[%s2280 + $0x189] sm:$0xff] %v2224
      %2319 = vst [vmem:[%s2280 + $0x191] sm:$0x7f] %v2225
      %2320 = vst [vmem:[%s2280 + $0x1a1] sm:$0x80] %v2226
      %2321 = vst [vmem:[%s2280 + $0x1a9] sm:$0xff] %v2227
      %2322 = vst [vmem:[%s2280 + $0x1b1] sm:$0x7f] %v2228
      %2323 = vst [vmem:[%s2280 + $0x1c1] sm:$0x80] %v2229
      %2324 = vst [vmem:[%s2280 + $0x1c9] sm:$0xff] %v2230
      %2325 = vst [vmem:[%s2280 + $0x1d1] sm:$0x7f] %v2231
      %2326 = vst [vmem:[%s2280 + $0x1e1] sm:$0x80] %v2232
      %2327 = vst [vmem:[%s2280 + $0x1e9] sm:$0xff] %v2233
      %2328 = vst [vmem:[%s2280 + $0x1f1] sm:$0x7f] %v2234
      %v2329 = vld [vmem:[#allocation3] sm:$0xff]
      %v2330 = vld [vmem:[#allocation3 + $0x8] sm:$0xff]
      %v2331 = vld [vmem:[#allocation3 + $0x10] sm:$0xff]
      %v2332 = vld [vmem:[#allocation3 + $0x18] sm:$0xff]
      %v2333 = vld [vmem:[#allocation3 + $0x20] sm:$0xff]
      %v2334 = vld [vmem:[#allocation3 + $0x28] sm:$0xff]
      %v2335 = vld [vmem:[#allocation3 + $0x30] sm:$0xff]
      %v2336 = vld [vmem:[#allocation3 + $0x38] sm:$0xff]
      %v2337 = vld [vmem:[#allocation3 + $0x40] sm:$0xff]
      %v2338 = vld [vmem:[#allocation3 + $0x48] sm:$0xff]
      %v2339 = vld [vmem:[#allocation3 + $0x50] sm:$0xff]
      %v2340 = vld [vmem:[#allocation3 + $0x58] sm:$0xff]
      %v2341 = vld [vmem:[#allocation3 + $0x60] sm:$0xff]
      %v2342 = vld [vmem:[#allocation3 + $0x68] sm:$0xff]
      %v2343 = vld [vmem:[#allocation3 + $0x70] sm:$0xff]
      %v2344 = vld [vmem:[#allocation3 + $0x78] sm:$0xff]
      %v2345 = vld [vmem:[#allocation3 + $0x80] sm:$0xff]
      %v2346 = vld [vmem:[#allocation3 + $0x88] sm:$0xff]
      %v2347 = vld [vmem:[#allocation3 + $0x90] sm:$0xff]
      %v2348 = vld [vmem:[#allocation3 + $0x98] sm:$0xff]
      %v2349 = vld [vmem:[#allocation3 + $0xa0] sm:$0xff]
      %v2350 = vld [vmem:[#allocation3 + $0xa8] sm:$0xff]
      %v2351 = vld [vmem:[#allocation3 + $0xb0] sm:$0xff]
      %v2352 = vld [vmem:[#allocation3 + $0xb8] sm:$0xff]
      %v2353 = vld [vmem:[#allocation3 + $0xc0] sm:$0xff]
      %v2354 = vld [vmem:[#allocation3 + $0xc8] sm:$0xff]
      %v2355 = vld [vmem:[#allocation3 + $0xd0] sm:$0xff]
      %v2356 = vld [vmem:[#allocation3 + $0xd8] sm:$0xff]
      %v2357 = vld [vmem:[#allocation3 + $0xe0] sm:$0xff]
      %v2358 = vld [vmem:[#allocation3 + $0xe8] sm:$0xff]
      %v2359 = vld [vmem:[#allocation3 + $0xf0] sm:$0xff]
      %v2360 = vld [vmem:[#allocation3 + $0xf8] sm:$0xff]
      %v2361 = vld [vmem:[#allocation3 + $0x100] sm:$0xff]
      %v2362 = vld [vmem:[#allocation3 + $0x108] sm:$0xff]
      %v2363 = vld [vmem:[#allocation3 + $0x110] sm:$0xff]
      %v2364 = vld [vmem:[#allocation3 + $0x118] sm:$0xff]
      %v2365 = vld [vmem:[#allocation3 + $0x120] sm:$0xff]
      %v2366 = vld [vmem:[#allocation3 + $0x128] sm:$0xff]
      %v2367 = vld [vmem:[#allocation3 + $0x130] sm:$0xff]
      %v2368 = vld [vmem:[#allocation3 + $0x138] sm:$0xff]
      %v2369 = vld [vmem:[#allocation3 + $0x140] sm:$0xff]
      %v2370 = vld [vmem:[#allocation3 + $0x148] sm:$0xff]
      %v2371 = vld [vmem:[#allocation3 + $0x150] sm:$0xff]
      %v2372 = vld [vmem:[#allocation3 + $0x158] sm:$0xff]
      %v2373 = vld [vmem:[#allocation3 + $0x160] sm:$0xff]
      %v2374 = vld [vmem:[#allocation3 + $0x168] sm:$0xff]
      %v2375 = vld [vmem:[#allocation3 + $0x170] sm:$0xff]
      %v2376 = vld [vmem:[#allocation3 + $0x178] sm:$0xff]
      %v2377 = vld [vmem:[#allocation3 + $0x180] sm:$0xff]
      %v2378 = vld [vmem:[#allocation3 + $0x188] sm:$0xff]
      %v2379 = vld [vmem:[#allocation3 + $0x190] sm:$0xff]
      %v2380 = vld [vmem:[#allocation3 + $0x198] sm:$0xff]
      %v2381 = vld [vmem:[#allocation3 + $0x1a0] sm:$0xff]
      %v2382 = vld [vmem:[#allocation3 + $0x1a8] sm:$0xff]
      %v2383 = vld [vmem:[#allocation3 + $0x1b0] sm:$0xff]
      %v2384 = vld [vmem:[#allocation3 + $0x1b8] sm:$0xff]
      %v2385 = vld [vmem:[#allocation3 + $0x1c0] sm:$0xff]
      %v2386 = vld [vmem:[#allocation3 + $0x1c8] sm:$0xff]
      %v2387 = vld [vmem:[#allocation3 + $0x1d0] sm:$0xff]
      %v2388 = vld [vmem:[#allocation3 + $0x1d8] sm:$0xff]
      %v2389 = vld [vmem:[#allocation3 + $0x1e0] sm:$0xff]
      %v2390 = vld [vmem:[#allocation3 + $0x1e8] sm:$0xff]
      %v2391 = vld [vmem:[#allocation3 + $0x1f0] sm:$0xff]
      %v2392 = vld [vmem:[#allocation3 + $0x1f8] sm:$0xff]
      %v2393 = vld [vmem:[#allocation3 + $0x200] sm:$0xff]
      %v2394 = vld [vmem:[#allocation3 + $0x208] sm:$0xff]
      %v2395 = vld [vmem:[#allocation3 + $0x210] sm:$0xff]
      %v2396 = vld [vmem:[#allocation3 + $0x218] sm:$0xff]
      %v2397 = vld [vmem:[#allocation3 + $0x220] sm:$0xff]
      %v2398 = vld [vmem:[#allocation3 + $0x228] sm:$0xff]
      %v2399 = vld [vmem:[#allocation3 + $0x230] sm:$0xff]
      %v2400 = vld [vmem:[#allocation3 + $0x238] sm:$0xff]
      %v2401 = vld [vmem:[%s2] sm:$0xff]
      %v2402 = vld [vmem:[%s2 + $0x8] sm:$0xff]
      %v2403 = vld [vmem:[%s2 + $0x10] sm:$0xff]
      %v2404 = vld [vmem:[%s2 + $0x18] sm:$0xff]
      %v2405 = vld [vmem:[%s2 + $0x20] sm:$0xff]
      %v2406 = vld [vmem:[%s2 + $0x28] sm:$0xff]
      %v2407 = vld [vmem:[%s2 + $0x30] sm:$0xff]
      %v2408 = vld [vmem:[%s2 + $0x38] sm:$0xff]
      %v2409 = vld [vmem:[%s2 + $0x40] sm:$0xff]
      %v2410 = vld [vmem:[%s2 + $0x48] sm:$0xff]
      %v2411 = vld [vmem:[%s2 + $0x50] sm:$0xff]
      %v2412 = vld [vmem:[%s2 + $0x58] sm:$0xff]
      %v2413 = vld [vmem:[%s2 + $0x60] sm:$0xff]
      %v2414 = vld [vmem:[%s2 + $0x68] sm:$0xff]
      %v2415 = vld [vmem:[%s2 + $0x70] sm:$0xff]
      %v2416 = vld [vmem:[%s2 + $0x78] sm:$0xff]
      %v2417 = vld [vmem:[%s2 + $0x80] sm:$0xff]
      %v2418 = vld [vmem:[%s2 + $0x88] sm:$0xff]
      %v2419 = vld [vmem:[%s2 + $0x90] sm:$0xff]
      %v2420 = vld [vmem:[%s2 + $0x98] sm:$0xff]
      %v2421 = vld [vmem:[%s2 + $0xa0] sm:$0xff]
      %v2422 = vld [vmem:[%s2 + $0xa8] sm:$0xff]
      %v2423 = vld [vmem:[%s2 + $0xb0] sm:$0xff]
      %v2424 = vld [vmem:[%s2 + $0xb8] sm:$0xff]
      %v2425 = vld [vmem:[%s2 + $0xc0] sm:$0xff]
      %v2426 = vld [vmem:[%s2 + $0xc8] sm:$0xff]
      %v2427 = vld [vmem:[%s2 + $0xd0] sm:$0xff]
      %v2428 = vld [vmem:[%s2 + $0xd8] sm:$0xff]
      %v2429 = vld [vmem:[%s2 + $0xe0] sm:$0xff]
      %v2430 = vld [vmem:[%s2 + $0xe8] sm:$0xff]
      %v2431 = vld [vmem:[%s2 + $0xf0] sm:$0xff]
      %v2432 = vld [vmem:[%s2 + $0xf8] sm:$0xff]
      %v2433 = vld [vmem:[%s2 + $0x100] sm:$0xff]
      %v2434 = vld [vmem:[%s2 + $0x108] sm:$0xff]
      %v2435 = vld [vmem:[%s2 + $0x110] sm:$0xff]
      %v2436 = vld [vmem:[%s2 + $0x118] sm:$0xff]
      %v2437 = vld [vmem:[%s2 + $0x120] sm:$0xff]
      %v2438 = vld [vmem:[%s2 + $0x128] sm:$0xff]
      %v2439 = vld [vmem:[%s2 + $0x130] sm:$0xff]
      %v2440 = vld [vmem:[%s2 + $0x138] sm:$0xff]
      %v2441 = vld [vmem:[%s2 + $0x140] sm:$0xff]
      %v2442 = vld [vmem:[%s2 + $0x148] sm:$0xff]
      %v2443 = vld [vmem:[%s2 + $0x150] sm:$0xff]
      %v2444 = vld [vmem:[%s2 + $0x158] sm:$0xff]
      %v2445 = vld [vmem:[%s2 + $0x160] sm:$0xff]
      %v2446 = vld [vmem:[%s2 + $0x168] sm:$0xff]
      %v2447 = vld [vmem:[%s2 + $0x170] sm:$0xff]
      %v2448 = vld [vmem:[%s2 + $0x178] sm:$0xff]
      %v2449 = vld [vmem:[%s2 + $0x180] sm:$0xff]
      %v2450 = vld [vmem:[%s2 + $0x188] sm:$0xff]
      %v2451 = vld [vmem:[%s2 + $0x190] sm:$0xff]
      %v2452 = vld [vmem:[%s2 + $0x198] sm:$0xff]
      %v2453 = vld [vmem:[%s2 + $0x1a0] sm:$0xff]
      %v2454 = vld [vmem:[%s2 + $0x1a8] sm:$0xff]
      %v2455 = vld [vmem:[%s2 + $0x1b0] sm:$0xff]
      %v2456 = vld [vmem:[%s2 + $0x1b8] sm:$0xff]
      %v2457 = vld [vmem:[%s2 + $0x1c0] sm:$0xff]
      %v2458 = vld [vmem:[%s2 + $0x1c8] sm:$0xff]
      %v2459 = vld [vmem:[%s2 + $0x1d0] sm:$0xff]
      %v2460 = vld [vmem:[%s2 + $0x1d8] sm:$0xff]
      %v2461 = vld [vmem:[%s2 + $0x1e0] sm:$0xff]
      %v2462 = vld [vmem:[%s2 + $0x1e8] sm:$0xff]
      %v2463 = vld [vmem:[%s2 + $0x1f0] sm:$0xff]
      %v2464 = vld [vmem:[%s2 + $0x1f8] sm:$0xff]
      %v2465 = vld [vmem:[%s2 + $0x200] sm:$0xff]
      %v2466 = vld [vmem:[%s2 + $0x208] sm:$0xff]
      %v2467 = vld [vmem:[%s2 + $0x210] sm:$0xff]
      %v2468 = vld [vmem:[%s2 + $0x218] sm:$0xff]
      %v2469 = vld [vmem:[%s2 + $0x220] sm:$0xff]
      %v2470 = vld [vmem:[%s2 + $0x228] sm:$0xff]
      %v2471 = vld [vmem:[%s2 + $0x230] sm:$0xff]
      %v2472 = vld [vmem:[%s2 + $0x238] sm:$0xff]
      %v2473 = vld [vmem:[%s2 + $0x240] sm:$0xff]
      %v2474 = vld [vmem:[%s2 + $0x248] sm:$0xff]
      %v2475 = vld [vmem:[%s2 + $0x250] sm:$0xff]
      %v2476 = vld [vmem:[%s2 + $0x258] sm:$0xff]
      %v2477 = vld [vmem:[%s2 + $0x260] sm:$0xff]
      %v2478 = vld [vmem:[%s2 + $0x268] sm:$0xff]
      %v2479 = vld [vmem:[%s2 + $0x270] sm:$0xff]
      %v2480 = vld [vmem:[%s2 + $0x278] sm:$0xff]
      %v2481 = vld [vmem:[%s2 + $0x280] sm:$0xff]
      %v2482 = vld [vmem:[%s2 + $0x288] sm:$0xff]
      %v2483 = vld [vmem:[%s2 + $0x290] sm:$0xff]
      %v2484 = vld [vmem:[%s2 + $0x298] sm:$0xff]
      %v2485 = vld [vmem:[%s2 + $0x2a0] sm:$0xff]
      %v2486 = vld [vmem:[%s2 + $0x2a8] sm:$0xff]
      %v2487 = vld [vmem:[%s2 + $0x2b0] sm:$0xff]
      %v2488 = vld [vmem:[%s2 + $0x2b8] sm:$0xff]
      %v2489 = vld [vmem:[%s2 + $0x2c0] sm:$0xff]
      %v2490 = vld [vmem:[%s2 + $0x2c8] sm:$0xff]
      %v2491 = vld [vmem:[%s2 + $0x2d0] sm:$0xff]
      %v2492 = vld [vmem:[%s2 + $0x2d8] sm:$0xff]
      %v2493 = vld [vmem:[%s2 + $0x2e0] sm:$0xff]
      %v2494 = vld [vmem:[%s2 + $0x2e8] sm:$0xff]
      %v2495 = vld [vmem:[%s2 + $0x2f0] sm:$0xff]
      %v2496 = vld [vmem:[%s2 + $0x2f8] sm:$0xff]
      %v2497 = vld [vmem:[%s2 + $0x300] sm:$0xff]
      %v2498 = vld [vmem:[%s2 + $0x308] sm:$0xff]
      %v2499 = vld [vmem:[%s2 + $0x310] sm:$0xff]
      %v2500 = vld [vmem:[%s2 + $0x318] sm:$0xff]
      %v2501 = vld [vmem:[%s2 + $0x320] sm:$0xff]
      %v2502 = vld [vmem:[%s2 + $0x328] sm:$0xff]
      %v2503 = vld [vmem:[%s2 + $0x330] sm:$0xff]
      %v2504 = vld [vmem:[%s2 + $0x338] sm:$0xff]
      %v2505 = vld [vmem:[%s2 + $0x340] sm:$0xff]
      %v2506 = vld [vmem:[%s2 + $0x348] sm:$0xff]
      %v2507 = vld [vmem:[%s2 + $0x350] sm:$0xff]
      %v2508 = vld [vmem:[%s2 + $0x358] sm:$0xff]
      %v2509 = vld [vmem:[%s2 + $0x360] sm:$0xff]
      %v2510 = vld [vmem:[%s2 + $0x368] sm:$0xff]
      %v2511 = vld [vmem:[%s2 + $0x370] sm:$0xff]
      %v2512 = vld [vmem:[%s2 + $0x378] sm:$0xff]
      %v2513 = vld [vmem:[%s2 + $0x380] sm:$0xff]
      %v2514 = vld [vmem:[%s2 + $0x388] sm:$0xff]
      %v2515 = vld [vmem:[%s2 + $0x390] sm:$0xff]
      %v2516 = vld [vmem:[%s2 + $0x398] sm:$0xff]
      %v2517 = vld [vmem:[%s2 + $0x3a0] sm:$0xff]
      %v2518 = vld [vmem:[%s2 + $0x3a8] sm:$0xff]
      %v2519 = vld [vmem:[%s2 + $0x3b0] sm:$0xff]
      %v2520 = vld [vmem:[%s2 + $0x3b8] sm:$0xff]
      %v2521 = vld [vmem:[%s2 + $0x3c0] sm:$0xff]
      %v2522 = vld [vmem:[%s2 + $0x3c8] sm:$0xff]
      %v2523 = vld [vmem:[%s2 + $0x3d0] sm:$0xff]
      %v2524 = vld [vmem:[%s2 + $0x3d8] sm:$0xff]
      %v2525 = vld [vmem:[%s2 + $0x3e0] sm:$0xff]
      %v2526 = vld [vmem:[%s2 + $0x3e8] sm:$0xff]
      %v2527 = vld [vmem:[%s2 + $0x3f0] sm:$0xff]
      %v2528 = vld [vmem:[%s2 + $0x3f8] sm:$0xff]
      %v2529 = vld [vmem:[%s2 + $0x400] sm:$0xff]
      %v2530 = vld [vmem:[%s2 + $0x408] sm:$0xff]
      %v2531 = vld [vmem:[%s2 + $0x410] sm:$0xff]
      %v2532 = vld [vmem:[%s2 + $0x418] sm:$0xff]
      %v2533 = vld [vmem:[%s2 + $0x420] sm:$0xff]
      %v2534 = vld [vmem:[%s2 + $0x428] sm:$0xff]
      %v2535 = vld [vmem:[%s2 + $0x430] sm:$0xff]
      %v2536 = vld [vmem:[%s2 + $0x438] sm:$0xff]
      %v2537 = vld [vmem:[%s2 + $0x440] sm:$0xff]
      %v2538 = vld [vmem:[%s2 + $0x448] sm:$0xff]
      %v2539 = vld [vmem:[%s2 + $0x450] sm:$0xff]
      %v2540 = vld [vmem:[%s2 + $0x458] sm:$0xff]
      %v2541 = vld [vmem:[%s2 + $0x460] sm:$0xff]
      %v2542 = vld [vmem:[%s2 + $0x468] sm:$0xff]
      %v2543 = vld [vmem:[%s2 + $0x470] sm:$0xff]
      %v2544 = vld [vmem:[%s2 + $0x478] sm:$0xff]
      %2545 = vmatpush.msra.mxu0 %v2446
      %2546 = vmatpush.msra.mxu0 %v2443
      %2547 = vmatpush.msra.mxu0 %v2440
      %2548 = vmatpush.msra.mxu0 %v2437
      %2549 = vmatpush.msra.mxu0 %v2434
      %2550 = vmatpush.msra.mxu0 %v2431
      %2551 = vmatpush.msra.mxu0 %v2428
      %2552 = vmatpush.msra.mxu0 %v2425
      %2553 = vmatpush.msra.mxu0 %v2422
      %2554 = vmatpush.msra.mxu0 %v2419
      %2555 = vmatpush.msra.mxu0 %v2416
      %2556 = vmatpush.msra.mxu0 %v2413
      %2557 = vmatpush.msra.mxu0 %v2410
      %2558 = vmatpush.msra.mxu0 %v2407
      %2559 = vmatpush.msra.mxu0 %v2404
      %2560 = vmatpush.msra.mxu0 %v2401
      %2561 = vmatmul.f32.gmra.mxu0 %v2329
      %v2562 = vpop.f32.mrf.mxu0
      %v2563 = vadd.f32 0.0, %v2562
      %2564 = vmatmul.f32.gmra.mxu0 %v2330
      %v2565 = vpop.f32.mrf.mxu0
      %v2566 = vadd.f32 0.0, %v2565
      %2567 = vmatmul.f32.gmra.mxu0 %v2331
      %v2568 = vpop.f32.mrf.mxu0
      %v2569 = vadd.f32 0.0, %v2568
      %2570 = vmatmul.f32.gmra.mxu0 %v2332
      %v2571 = vpop.f32.mrf.mxu0
      %2572 = vmatmul.f32.gmra.mxu0 %v2333
      %v2573 = vpop.f32.mrf.mxu0
      %v2574 = vadd.f32 0.0, %v2573
      %2575 = vmatmul.f32.gmra.mxu0 %v2334
      %v2576 = vpop.f32.mrf.mxu0
      %v2577 = vadd.f32 0.0, %v2576
      %2578 = vmatmul.f32.gmra.mxu0 %v2335
      %v2579 = vpop.f32.mrf.mxu0
      %v2580 = vadd.f32 0.0, %v2579
      %2581 = vmatmul.f32.gmra.mxu0 %v2336
      %v2582 = vpop.f32.mrf.mxu0
      %2583 = vmatmul.f32.gmra.mxu0 %v2337
      %v2584 = vpop.f32.mrf.mxu0
      %v2585 = vadd.f32 0.0, %v2584
      %2586 = vmatmul.f32.gmra.mxu0 %v2338
      %v2587 = vpop.f32.mrf.mxu0
      %v2588 = vadd.f32 0.0, %v2587
      %2589 = vmatmul.f32.gmra.mxu0 %v2339
      %v2590 = vpop.f32.mrf.mxu0
      %v2591 = vadd.f32 0.0, %v2590
      %2592 = vmatmul.f32.gmra.mxu0 %v2340
      %v2593 = vpop.f32.mrf.mxu0
      %2594 = vmatmul.f32.gmra.mxu0 %v2341
      %v2595 = vpop.f32.mrf.mxu0
      %v2596 = vadd.f32 0.0, %v2595
      %2597 = vmatmul.f32.gmra.mxu0 %v2342
      %v2598 = vpop.f32.mrf.mxu0
      %v2599 = vadd.f32 0.0, %v2598
      %2600 = vmatmul.f32.gmra.mxu0 %v2343
      %v2601 = vpop.f32.mrf.mxu0
      %v2602 = vadd.f32 0.0, %v2601
      %2603 = vmatmul.f32.gmra.mxu0 %v2344
      %v2604 = vpop.f32.mrf.mxu0
      %2605 = vmatmul.f32.gmra.mxu0 %v2345
      %v2606 = vpop.f32.mrf.mxu0
      %v2607 = vadd.f32 0.0, %v2606
      %2608 = vmatmul.f32.gmra.mxu0 %v2346
      %v2609 = vpop.f32.mrf.mxu0
      %v2610 = vadd.f32 0.0, %v2609
      %2611 = vmatmul.f32.gmra.mxu0 %v2347
      %v2612 = vpop.f32.mrf.mxu0
      %v2613 = vadd.f32 0.0, %v2612
      %2614 = vmatmul.f32.gmra.mxu0 %v2348
      %v2615 = vpop.f32.mrf.mxu0
      %2616 = vmatmul.f32.gmra.mxu0 %v2349
      %v2617 = vpop.f32.mrf.mxu0
      %v2618 = vadd.f32 0.0, %v2617
      %2619 = vmatmul.f32.gmra.mxu0 %v2350
      %v2620 = vpop.f32.mrf.mxu0
      %v2621 = vadd.f32 0.0, %v2620
      %2622 = vmatmul.f32.gmra.mxu0 %v2351
      %v2623 = vpop.f32.mrf.mxu0
      %v2624 = vadd.f32 0.0, %v2623
      %2625 = vmatmul.f32.gmra.mxu0 %v2352
      %v2626 = vpop.f32.mrf.mxu0
      %2627 = vmatmul.f32.gmra.mxu0 %v2353
      %v2628 = vpop.f32.mrf.mxu0
      %v2629 = vadd.f32 0.0, %v2628
      %2630 = vmatmul.f32.gmra.mxu0 %v2354
      %v2631 = vpop.f32.mrf.mxu0
      %v2632 = vadd.f32 0.0, %v2631
      %2633 = vmatmul.f32.gmra.mxu0 %v2355
      %v2634 = vpop.f32.mrf.mxu0
      %v2635 = vadd.f32 0.0, %v2634
      %2636 = vmatmul.f32.gmra.mxu0 %v2356
      %v2637 = vpop.f32.mrf.mxu0
      %2638 = vmatmul.f32.gmra.mxu0 %v2357
      %v2639 = vpop.f32.mrf.mxu0
      %v2640 = vadd.f32 0.0, %v2639
      %2641 = vmatmul.f32.gmra.mxu0 %v2358
      %v2642 = vpop.f32.mrf.mxu0
      %v2643 = vadd.f32 0.0, %v2642
      %2644 = vmatmul.f32.gmra.mxu0 %v2359
      %v2645 = vpop.f32.mrf.mxu0
      %v2646 = vadd.f32 0.0, %v2645
      %2647 = vmatmul.f32.gmra.mxu0 %v2360
      %v2648 = vpop.f32.mrf.mxu0
      %2649 = vmatmul.f32.gmra.mxu0 %v2361
      %v2650 = vpop.f32.mrf.mxu0
      %v2651 = vadd.f32 0.0, %v2650
      %2652 = vmatmul.f32.gmra.mxu0 %v2362
      %v2653 = vpop.f32.mrf.mxu0
      %v2654 = vadd.f32 0.0, %v2653
      %2655 = vmatmul.f32.gmra.mxu0 %v2363
      %v2656 = vpop.f32.mrf.mxu0
      %v2657 = vadd.f32 0.0, %v2656
      %2658 = vmatmul.f32.gmra.mxu0 %v2364
      %v2659 = vpop.f32.mrf.mxu0
      %2660 = vmatmul.f32.gmra.mxu0 %v2365
      %v2661 = vpop.f32.mrf.mxu0
      %v2662 = vadd.f32 0.0, %v2661
      %2663 = vmatmul.f32.gmra.mxu0 %v2366
      %v2664 = vpop.f32.mrf.mxu0
      %v2665 = vadd.f32 0.0, %v2664
      %2666 = vmatmul.f32.gmra.mxu0 %v2367
      %v2667 = vpop.f32.mrf.mxu0
      %v2668 = vadd.f32 0.0, %v2667
      %2669 = vmatmul.f32.gmra.mxu0 %v2368
      %v2670 = vpop.f32.mrf.mxu0
      %2671 = vmatmul.f32.gmra.mxu0 %v2369
      %v2672 = vpop.f32.mrf.mxu0
      %v2673 = vadd.f32 0.0, %v2672
      %2674 = vmatmul.f32.gmra.mxu0 %v2370
      %v2675 = vpop.f32.mrf.mxu0
      %v2676 = vadd.f32 0.0, %v2675
      %2677 = vmatmul.f32.gmra.mxu0 %v2371
      %v2678 = vpop.f32.mrf.mxu0
      %v2679 = vadd.f32 0.0, %v2678
      %2680 = vmatmul.f32.gmra.mxu0 %v2372
      %v2681 = vpop.f32.mrf.mxu0
      %2682 = vmatmul.f32.gmra.mxu0 %v2373
      %v2683 = vpop.f32.mrf.mxu0
      %v2684 = vadd.f32 0.0, %v2683
      %2685 = vmatmul.f32.gmra.mxu0 %v2374
      %v2686 = vpop.f32.mrf.mxu0
      %v2687 = vadd.f32 0.0, %v2686
      %2688 = vmatmul.f32.gmra.mxu0 %v2375
      %v2689 = vpop.f32.mrf.mxu0
      %v2690 = vadd.f32 0.0, %v2689
      %2691 = vmatmul.f32.gmra.mxu0 %v2376
      %v2692 = vpop.f32.mrf.mxu0
      %2693 = vmatmul.f32.gmra.mxu0 %v2377
      %v2694 = vpop.f32.mrf.mxu0
      %v2695 = vadd.f32 0.0, %v2694
      %2696 = vmatmul.f32.gmra.mxu0 %v2378
      %v2697 = vpop.f32.mrf.mxu0
      %v2698 = vadd.f32 0.0, %v2697
      %2699 = vmatmul.f32.gmra.mxu0 %v2379
      %v2700 = vpop.f32.mrf.mxu0
      %v2701 = vadd.f32 0.0, %v2700
      %2702 = vmatmul.f32.gmra.mxu0 %v2380
      %v2703 = vpop.f32.mrf.mxu0
      %2704 = vmatmul.f32.gmra.mxu0 %v2381
      %v2705 = vpop.f32.mrf.mxu0
      %v2706 = vadd.f32 0.0, %v2705
      %2707 = vmatmul.f32.gmra.mxu0 %v2382
      %v2708 = vpop.f32.mrf.mxu0
      %v2709 = vadd.f32 0.0, %v2708
      %2710 = vmatmul.f32.gmra.mxu0 %v2383
      %v2711 = vpop.f32.mrf.mxu0
      %v2712 = vadd.f32 0.0, %v2711
      %2713 = vmatmul.f32.gmra.mxu0 %v2384
      %v2714 = vpop.f32.mrf.mxu0
      %2715 = vmatmul.f32.gmra.mxu0 %v2385
      %v2716 = vpop.f32.mrf.mxu0
      %v2717 = vadd.f32 0.0, %v2716
      %2718 = vmatmul.f32.gmra.mxu0 %v2386
      %v2719 = vpop.f32.mrf.mxu0
      %v2720 = vadd.f32 0.0, %v2719
      %2721 = vmatmul.f32.gmra.mxu0 %v2387
      %v2722 = vpop.f32.mrf.mxu0
      %v2723 = vadd.f32 0.0, %v2722
      %2724 = vmatmul.f32.gmra.mxu0 %v2388
      %v2725 = vpop.f32.mrf.mxu0
      %2726 = vmatmul.f32.gmra.mxu0 %v2389
      %v2727 = vpop.f32.mrf.mxu0
      %v2728 = vadd.f32 0.0, %v2727
      %2729 = vmatmul.f32.gmra.mxu0 %v2390
      %v2730 = vpop.f32.mrf.mxu0
      %v2731 = vadd.f32 0.0, %v2730
      %2732 = vmatmul.f32.gmra.mxu0 %v2391
      %v2733 = vpop.f32.mrf.mxu0
      %v2734 = vadd.f32 0.0, %v2733
      %2735 = vmatmul.f32.gmra.mxu0 %v2392
      %v2736 = vpop.f32.mrf.mxu0
      %2737 = vdwg.mxu0
      %2738 = vmatpush.msra.mxu0 %v2494
      %2739 = vmatpush.msra.mxu0 %v2491
      %2740 = vmatpush.msra.mxu0 %v2488
      %2741 = vmatpush.msra.mxu0 %v2485
      %2742 = vmatpush.msra.mxu0 %v2482
      %2743 = vmatpush.msra.mxu0 %v2479
      %2744 = vmatpush.msra.mxu0 %v2476
      %2745 = vmatpush.msra.mxu0 %v2473
      %2746 = vmatpush.msra.mxu0 %v2470
      %2747 = vmatpush.msra.mxu0 %v2467
      %2748 = vmatpush.msra.mxu0 %v2464
      %2749 = vmatpush.msra.mxu0 %v2461
      %2750 = vmatpush.msra.mxu0 %v2458
      %2751 = vmatpush.msra.mxu0 %v2455
      %2752 = vmatpush.msra.mxu0 %v2452
      %2753 = vmatpush.msra.mxu0 %v2449
      %2754 = vmatmul.f32.gmra.mxu0 %v2333
      %v2755 = vpop.f32.mrf.mxu0
      %v2756 = vadd.f32 %v2563, %v2755
      %2757 = vmatmul.f32.gmra.mxu0 %v2334
      %v2758 = vpop.f32.mrf.mxu0
      %v2759 = vadd.f32 %v2566, %v2758
      %2760 = vmatmul.f32.gmra.mxu0 %v2335
      %v2761 = vpop.f32.mrf.mxu0
      %v2762 = vadd.f32 %v2569, %v2761
      %2763 = vmatmul.f32.gmra.mxu0 %v2336
      %v2764 = vpop.f32.mrf.mxu0
      %2765 = vmatmul.f32.gmra.mxu0 %v2337
      %v2766 = vpop.f32.mrf.mxu0
      %v2767 = vadd.f32 %v2574, %v2766
      %2768 = vmatmul.f32.gmra.mxu0 %v2338
      %v2769 = vpop.f32.mrf.mxu0
      %v2770 = vadd.f32 %v2577, %v2769
      %2771 = vmatmul.f32.gmra.mxu0 %v2339
      %v2772 = vpop.f32.mrf.mxu0
      %v2773 = vadd.f32 %v2580, %v2772
      %2774 = vmatmul.f32.gmra.mxu0 %v2340
      %v2775 = vpop.f32.mrf.mxu0
      %2776 = vmatmul.f32.gmra.mxu0 %v2341
      %v2777 = vpop.f32.mrf.mxu0
      %v2778 = vadd.f32 %v2585, %v2777
      %2779 = vmatmul.f32.gmra.mxu0 %v2342
      %v2780 = vpop.f32.mrf.mxu0
      %v2781 = vadd.f32 %v2588, %v2780
      %2782 = vmatmul.f32.gmra.mxu0 %v2343
      %v2783 = vpop.f32.mrf.mxu0
      %v2784 = vadd.f32 %v2591, %v2783
      %2785 = vmatmul.f32.gmra.mxu0 %v2344
      %v2786 = vpop.f32.mrf.mxu0
      %2787 = vmatmul.f32.gmra.mxu0 %v2345
      %v2788 = vpop.f32.mrf.mxu0
      %v2789 = vadd.f32 %v2596, %v2788
      %2790 = vmatmul.f32.gmra.mxu0 %v2346
      %v2791 = vpop.f32.mrf.mxu0
      %v2792 = vadd.f32 %v2599, %v2791
      %2793 = vmatmul.f32.gmra.mxu0 %v2347
      %v2794 = vpop.f32.mrf.mxu0
      %v2795 = vadd.f32 %v2602, %v2794
      %2796 = vmatmul.f32.gmra.mxu0 %v2348
      %v2797 = vpop.f32.mrf.mxu0
      %2798 = vmatmul.f32.gmra.mxu0 %v2349
      %v2799 = vpop.f32.mrf.mxu0
      %v2800 = vadd.f32 %v2607, %v2799
      %2801 = vmatmul.f32.gmra.mxu0 %v2350
      %v2802 = vpop.f32.mrf.mxu0
      %v2803 = vadd.f32 %v2610, %v2802
      %2804 = vmatmul.f32.gmra.mxu0 %v2351
      %v2805 = vpop.f32.mrf.mxu0
      %v2806 = vadd.f32 %v2613, %v2805
      %2807 = vmatmul.f32.gmra.mxu0 %v2352
      %v2808 = vpop.f32.mrf.mxu0
      %2809 = vmatmul.f32.gmra.mxu0 %v2353
      %v2810 = vpop.f32.mrf.mxu0
      %v2811 = vadd.f32 %v2618, %v2810
      %2812 = vmatmul.f32.gmra.mxu0 %v2354
      %v2813 = vpop.f32.mrf.mxu0
      %v2814 = vadd.f32 %v2621, %v2813
      %2815 = vmatmul.f32.gmra.mxu0 %v2355
      %v2816 = vpop.f32.mrf.mxu0
      %v2817 = vadd.f32 %v2624, %v2816
      %2818 = vmatmul.f32.gmra.mxu0 %v2356
      %v2819 = vpop.f32.mrf.mxu0
      %2820 = vmatmul.f32.gmra.mxu0 %v2357
      %v2821 = vpop.f32.mrf.mxu0
      %v2822 = vadd.f32 %v2629, %v2821
      %2823 = vmatmul.f32.gmra.mxu0 %v2358
      %v2824 = vpop.f32.mrf.mxu0
      %v2825 = vadd.f32 %v2632, %v2824
      %2826 = vmatmul.f32.gmra.mxu0 %v2359
      %v2827 = vpop.f32.mrf.mxu0
      %v2828 = vadd.f32 %v2635, %v2827
      %2829 = vmatmul.f32.gmra.mxu0 %v2360
      %v2830 = vpop.f32.mrf.mxu0
      %2831 = vmatmul.f32.gmra.mxu0 %v2361
      %v2832 = vpop.f32.mrf.mxu0
      %v2833 = vadd.f32 %v2640, %v2832
      %2834 = vmatmul.f32.gmra.mxu0 %v2362
      %v2835 = vpop.f32.mrf.mxu0
      %v2836 = vadd.f32 %v2643, %v2835
      %2837 = vmatmul.f32.gmra.mxu0 %v2363
      %v2838 = vpop.f32.mrf.mxu0
      %v2839 = vadd.f32 %v2646, %v2838
      %2840 = vmatmul.f32.gmra.mxu0 %v2364
      %v2841 = vpop.f32.mrf.mxu0
      %2842 = vmatmul.f32.gmra.mxu0 %v2365
      %v2843 = vpop.f32.mrf.mxu0
      %v2844 = vadd.f32 %v2651, %v2843
      %2845 = vmatmul.f32.gmra.mxu0 %v2366
      %v2846 = vpop.f32.mrf.mxu0
      %v2847 = vadd.f32 %v2654, %v2846
      %2848 = vmatmul.f32.gmra.mxu0 %v2367
      %v2849 = vpop.f32.mrf.mxu0
      %v2850 = vadd.f32 %v2657, %v2849
      %2851 = vmatmul.f32.gmra.mxu0 %v2368
      %v2852 = vpop.f32.mrf.mxu0
      %2853 = vmatmul.f32.gmra.mxu0 %v2369
      %v2854 = vpop.f32.mrf.mxu0
      %v2855 = vadd.f32 %v2662, %v2854
      %2856 = vmatmul.f32.gmra.mxu0 %v2370
      %v2857 = vpop.f32.mrf.mxu0
      %v2858 = vadd.f32 %v2665, %v2857
      %2859 = vmatmul.f32.gmra.mxu0 %v2371
      %v2860 = vpop.f32.mrf.mxu0
      %v2861 = vadd.f32 %v2668, %v2860
      %2862 = vmatmul.f32.gmra.mxu0 %v2372
      %v2863 = vpop.f32.mrf.mxu0
      %2864 = vmatmul.f32.gmra.mxu0 %v2373
      %v2865 = vpop.f32.mrf.mxu0
      %v2866 = vadd.f32 %v2673, %v2865
      %2867 = vmatmul.f32.gmra.mxu0 %v2374
      %v2868 = vpop.f32.mrf.mxu0
      %v2869 = vadd.f32 %v2676, %v2868
      %2870 = vmatmul.f32.gmra.mxu0 %v2375
      %v2871 = vpop.f32.mrf.mxu0
      %v2872 = vadd.f32 %v2679, %v2871
      %2873 = vmatmul.f32.gmra.mxu0 %v2376
      %v2874 = vpop.f32.mrf.mxu0
      %2875 = vmatmul.f32.gmra.mxu0 %v2377
      %v2876 = vpop.f32.mrf.mxu0
      %v2877 = vadd.f32 %v2684, %v2876
      %2878 = vmatmul.f32.gmra.mxu0 %v2378
      %v2879 = vpop.f32.mrf.mxu0
      %v2880 = vadd.f32 %v2687, %v2879
      %2881 = vmatmul.f32.gmra.mxu0 %v2379
      %v2882 = vpop.f32.mrf.mxu0
      %v2883 = vadd.f32 %v2690, %v2882
      %2884 = vmatmul.f32.gmra.mxu0 %v2380
      %v2885 = vpop.f32.mrf.mxu0
      %2886 = vmatmul.f32.gmra.mxu0 %v2381
      %v2887 = vpop.f32.mrf.mxu0
      %v2888 = vadd.f32 %v2695, %v2887
      %2889 = vmatmul.f32.gmra.mxu0 %v2382
      %v2890 = vpop.f32.mrf.mxu0
      %v2891 = vadd.f32 %v2698, %v2890
      %2892 = vmatmul.f32.gmra.mxu0 %v2383
      %v2893 = vpop.f32.mrf.mxu0
      %v2894 = vadd.f32 %v2701, %v2893
      %2895 = vmatmul.f32.gmra.mxu0 %v2384
      %v2896 = vpop.f32.mrf.mxu0
      %2897 = vmatmul.f32.gmra.mxu0 %v2385
      %v2898 = vpop.f32.mrf.mxu0
      %v2899 = vadd.f32 %v2706, %v2898
      %2900 = vmatmul.f32.gmra.mxu0 %v2386
      %v2901 = vpop.f32.mrf.mxu0
      %v2902 = vadd.f32 %v2709, %v2901
      %2903 = vmatmul.f32.gmra.mxu0 %v2387
      %v2904 = vpop.f32.mrf.mxu0
      %v2905 = vadd.f32 %v2712, %v2904
      %2906 = vmatmul.f32.gmra.mxu0 %v2388
      %v2907 = vpop.f32.mrf.mxu0
      %2908 = vmatmul.f32.gmra.mxu0 %v2389
      %v2909 = vpop.f32.mrf.mxu0
      %v2910 = vadd.f32 %v2717, %v2909
      %2911 = vmatmul.f32.gmra.mxu0 %v2390
      %v2912 = vpop.f32.mrf.mxu0
      %v2913 = vadd.f32 %v2720, %v2912
      %2914 = vmatmul.f32.gmra.mxu0 %v2391
      %v2915 = vpop.f32.mrf.mxu0
      %v2916 = vadd.f32 %v2723, %v2915
      %2917 = vmatmul.f32.gmra.mxu0 %v2392
      %v2918 = vpop.f32.mrf.mxu0
      %2919 = vmatmul.f32.gmra.mxu0 %v2393
      %v2920 = vpop.f32.mrf.mxu0
      %v2921 = vadd.f32 %v2728, %v2920
      %2922 = vmatmul.f32.gmra.mxu0 %v2394
      %v2923 = vpop.f32.mrf.mxu0
      %v2924 = vadd.f32 %v2731, %v2923
      %2925 = vmatmul.f32.gmra.mxu0 %v2395
      %v2926 = vpop.f32.mrf.mxu0
      %v2927 = vadd.f32 %v2734, %v2926
      %2928 = vmatmul.f32.gmra.mxu0 %v2396
      %v2929 = vpop.f32.mrf.mxu0
      %2930 = vdwg.mxu0
      %2931 = vmatpush.msra.mxu0 %v2542
      %2932 = vmatpush.msra.mxu0 %v2539
      %2933 = vmatpush.msra.mxu0 %v2536
      %2934 = vmatpush.msra.mxu0 %v2533
      %2935 = vmatpush.msra.mxu0 %v2530
      %2936 = vmatpush.msra.mxu0 %v2527
      %2937 = vmatpush.msra.mxu0 %v2524
      %2938 = vmatpush.msra.mxu0 %v2521
      %2939 = vmatpush.msra.mxu0 %v2518
      %2940 = vmatpush.msra.mxu0 %v2515
      %2941 = vmatpush.msra.mxu0 %v2512
      %2942 = vmatpush.msra.mxu0 %v2509
      %2943 = vmatpush.msra.mxu0 %v2506
      %2944 = vmatpush.msra.mxu0 %v2503
      %2945 = vmatpush.msra.mxu0 %v2500
      %2946 = vmatpush.msra.mxu0 %v2497
      %2947 = vmatmul.f32.gmra.mxu0 %v2337
      %v2948 = vpop.f32.mrf.mxu0
      %v2949 = vadd.f32 %v2756, %v2948
      %2950 = vmatmul.f32.gmra.mxu0 %v2338
      %v2951 = vpop.f32.mrf.mxu0
      %v2952 = vadd.f32 %v2759, %v2951
      %2953 = vmatmul.f32.gmra.mxu0 %v2339
      %v2954 = vpop.f32.mrf.mxu0
      %v2955 = vadd.f32 %v2762, %v2954
      %2956 = vmatmul.f32.gmra.mxu0 %v2340
      %v2957 = vpop.f32.mrf.mxu0
      %2958 = vmatmul.f32.gmra.mxu0 %v2341
      %v2959 = vpop.f32.mrf.mxu0
      %v2960 = vadd.f32 %v2767, %v2959
      %2961 = vmatmul.f32.gmra.mxu0 %v2342
      %v2962 = vpop.f32.mrf.mxu0
      %v2963 = vadd.f32 %v2770, %v2962
      %2964 = vmatmul.f32.gmra.mxu0 %v2343
      %v2965 = vpop.f32.mrf.mxu0
      %v2966 = vadd.f32 %v2773, %v2965
      %2967 = vmatmul.f32.gmra.mxu0 %v2344
      %v2968 = vpop.f32.mrf.mxu0
      %2969 = vmatmul.f32.gmra.mxu0 %v2345
      %v2970 = vpop.f32.mrf.mxu0
      %v2971 = vadd.f32 %v2778, %v2970
      %2972 = vmatmul.f32.gmra.mxu0 %v2346
      %v2973 = vpop.f32.mrf.mxu0
      %v2974 = vadd.f32 %v2781, %v2973
      %2975 = vmatmul.f32.gmra.mxu0 %v2347
      %v2976 = vpop.f32.mrf.mxu0
      %v2977 = vadd.f32 %v2784, %v2976
      %2978 = vmatmul.f32.gmra.mxu0 %v2348
      %v2979 = vpop.f32.mrf.mxu0
      %2980 = vmatmul.f32.gmra.mxu0 %v2349
      %v2981 = vpop.f32.mrf.mxu0
      %v2982 = vadd.f32 %v2789, %v2981
      %2983 = vmatmul.f32.gmra.mxu0 %v2350
      %v2984 = vpop.f32.mrf.mxu0
      %v2985 = vadd.f32 %v2792, %v2984
      %2986 = vmatmul.f32.gmra.mxu0 %v2351
      %v2987 = vpop.f32.mrf.mxu0
      %v2988 = vadd.f32 %v2795, %v2987
      %2989 = vmatmul.f32.gmra.mxu0 %v2352
      %v2990 = vpop.f32.mrf.mxu0
      %2991 = vmatmul.f32.gmra.mxu0 %v2353
      %v2992 = vpop.f32.mrf.mxu0
      %v2993 = vadd.f32 %v2800, %v2992
      %2994 = vmatmul.f32.gmra.mxu0 %v2354
      %v2995 = vpop.f32.mrf.mxu0
      %v2996 = vadd.f32 %v2803, %v2995
      %2997 = vmatmul.f32.gmra.mxu0 %v2355
      %v2998 = vpop.f32.mrf.mxu0
      %v2999 = vadd.f32 %v2806, %v2998
      %3000 = vmatmul.f32.gmra.mxu0 %v2356
      %v3001 = vpop.f32.mrf.mxu0
      %3002 = vmatmul.f32.gmra.mxu0 %v2357
      %v3003 = vpop.f32.mrf.mxu0
      %v3004 = vadd.f32 %v2811, %v3003
      %3005 = vmatmul.f32.gmra.mxu0 %v2358
      %v3006 = vpop.f32.mrf.mxu0
      %v3007 = vadd.f32 %v2814, %v3006
      %3008 = vmatmul.f32.gmra.mxu0 %v2359
      %v3009 = vpop.f32.mrf.mxu0
      %v3010 = vadd.f32 %v2817, %v3009
      %3011 = vmatmul.f32.gmra.mxu0 %v2360
      %v3012 = vpop.f32.mrf.mxu0
      %3013 = vmatmul.f32.gmra.mxu0 %v2361
      %v3014 = vpop.f32.mrf.mxu0
      %v3015 = vadd.f32 %v2822, %v3014
      %3016 = vmatmul.f32.gmra.mxu0 %v2362
      %v3017 = vpop.f32.mrf.mxu0
      %v3018 = vadd.f32 %v2825, %v3017
      %3019 = vmatmul.f32.gmra.mxu0 %v2363
      %v3020 = vpop.f32.mrf.mxu0
      %v3021 = vadd.f32 %v2828, %v3020
      %3022 = vmatmul.f32.gmra.mxu0 %v2364
      %v3023 = vpop.f32.mrf.mxu0
      %3024 = vmatmul.f32.gmra.mxu0 %v2365
      %v3025 = vpop.f32.mrf.mxu0
      %v3026 = vadd.f32 %v2833, %v3025
      %3027 = vmatmul.f32.gmra.mxu0 %v2366
      %v3028 = vpop.f32.mrf.mxu0
      %v3029 = vadd.f32 %v2836, %v3028
      %3030 = vmatmul.f32.gmra.mxu0 %v2367
      %v3031 = vpop.f32.mrf.mxu0
      %v3032 = vadd.f32 %v2839, %v3031
      %3033 = vmatmul.f32.gmra.mxu0 %v2368
      %v3034 = vpop.f32.mrf.mxu0
      %3035 = vmatmul.f32.gmra.mxu0 %v2369
      %v3036 = vpop.f32.mrf.mxu0
      %v3037 = vadd.f32 %v2844, %v3036
      %3038 = vmatmul.f32.gmra.mxu0 %v2370
      %v3039 = vpop.f32.mrf.mxu0
      %v3040 = vadd.f32 %v2847, %v3039
      %3041 = vmatmul.f32.gmra.mxu0 %v2371
      %v3042 = vpop.f32.mrf.mxu0
      %v3043 = vadd.f32 %v2850, %v3042
      %3044 = vmatmul.f32.gmra.mxu0 %v2372
      %v3045 = vpop.f32.mrf.mxu0
      %3046 = vmatmul.f32.gmra.mxu0 %v2373
      %v3047 = vpop.f32.mrf.mxu0
      %v3048 = vadd.f32 %v2855, %v3047
      %3049 = vmatmul.f32.gmra.mxu0 %v2374
      %v3050 = vpop.f32.mrf.mxu0
      %v3051 = vadd.f32 %v2858, %v3050
      %3052 = vmatmul.f32.gmra.mxu0 %v2375
      %v3053 = vpop.f32.mrf.mxu0
      %v3054 = vadd.f32 %v2861, %v3053
      %3055 = vmatmul.f32.gmra.mxu0 %v2376
      %v3056 = vpop.f32.mrf.mxu0
      %3057 = vmatmul.f32.gmra.mxu0 %v2377
      %v3058 = vpop.f32.mrf.mxu0
      %v3059 = vadd.f32 %v2866, %v3058
      %3060 = vmatmul.f32.gmra.mxu0 %v2378
      %v3061 = vpop.f32.mrf.mxu0
      %v3062 = vadd.f32 %v2869, %v3061
      %3063 = vmatmul.f32.gmra.mxu0 %v2379
      %v3064 = vpop.f32.mrf.mxu0
      %v3065 = vadd.f32 %v2872, %v3064
      %3066 = vmatmul.f32.gmra.mxu0 %v2380
      %v3067 = vpop.f32.mrf.mxu0
      %3068 = vmatmul.f32.gmra.mxu0 %v2381
      %v3069 = vpop.f32.mrf.mxu0
      %v3070 = vadd.f32 %v2877, %v3069
      %3071 = vmatmul.f32.gmra.mxu0 %v2382
      %v3072 = vpop.f32.mrf.mxu0
      %v3073 = vadd.f32 %v2880, %v3072
      %3074 = vmatmul.f32.gmra.mxu0 %v2383
      %v3075 = vpop.f32.mrf.mxu0
      %v3076 = vadd.f32 %v2883, %v3075
      %3077 = vmatmul.f32.gmra.mxu0 %v2384
      %v3078 = vpop.f32.mrf.mxu0
      %3079 = vmatmul.f32.gmra.mxu0 %v2385
      %v3080 = vpop.f32.mrf.mxu0
      %v3081 = vadd.f32 %v2888, %v3080
      %3082 = vmatmul.f32.gmra.mxu0 %v2386
      %v3083 = vpop.f32.mrf.mxu0
      %v3084 = vadd.f32 %v2891, %v3083
      %3085 = vmatmul.f32.gmra.mxu0 %v2387
      %v3086 = vpop.f32.mrf.mxu0
      %v3087 = vadd.f32 %v2894, %v3086
      %3088 = vmatmul.f32.gmra.mxu0 %v2388
      %v3089 = vpop.f32.mrf.mxu0
      %3090 = vmatmul.f32.gmra.mxu0 %v2389
      %v3091 = vpop.f32.mrf.mxu0
      %v3092 = vadd.f32 %v2899, %v3091
      %3093 = vmatmul.f32.gmra.mxu0 %v2390
      %v3094 = vpop.f32.mrf.mxu0
      %v3095 = vadd.f32 %v2902, %v3094
      %3096 = vmatmul.f32.gmra.mxu0 %v2391
      %v3097 = vpop.f32.mrf.mxu0
      %v3098 = vadd.f32 %v2905, %v3097
      %3099 = vmatmul.f32.gmra.mxu0 %v2392
      %v3100 = vpop.f32.mrf.mxu0
      %3101 = vmatmul.f32.gmra.mxu0 %v2393
      %v3102 = vpop.f32.mrf.mxu0
      %v3103 = vadd.f32 %v2910, %v3102
      %3104 = vmatmul.f32.gmra.mxu0 %v2394
      %v3105 = vpop.f32.mrf.mxu0
      %v3106 = vadd.f32 %v2913, %v3105
      %3107 = vmatmul.f32.gmra.mxu0 %v2395
      %v3108 = vpop.f32.mrf.mxu0
      %v3109 = vadd.f32 %v2916, %v3108
      %3110 = vmatmul.f32.gmra.mxu0 %v2396
      %v3111 = vpop.f32.mrf.mxu0
      %3112 = vmatmul.f32.gmra.mxu0 %v2397
      %v3113 = vpop.f32.mrf.mxu0
      %v3114 = vadd.f32 %v2921, %v3113
      %3115 = vmatmul.f32.gmra.mxu0 %v2398
      %v3116 = vpop.f32.mrf.mxu0
      %v3117 = vadd.f32 %v2924, %v3116
      %3118 = vmatmul.f32.gmra.mxu0 %v2399
      %v3119 = vpop.f32.mrf.mxu0
      %v3120 = vadd.f32 %v2927, %v3119
      %3121 = vmatmul.f32.gmra.mxu0 %v2400
      %v3122 = vpop.f32.mrf.mxu0
      %3123 = vdwg.mxu0
      %3124 = vmatpush.msra.mxu0 %v2447
      %3125 = vmatpush.msra.mxu0 %v2444
      %3126 = vmatpush.msra.mxu0 %v2441
      %3127 = vmatpush.msra.mxu0 %v2438
      %3128 = vmatpush.msra.mxu0 %v2435
      %3129 = vmatpush.msra.mxu0 %v2432
      %3130 = vmatpush.msra.mxu0 %v2429
      %3131 = vmatpush.msra.mxu0 %v2426
      %3132 = vmatpush.msra.mxu0 %v2423
      %3133 = vmatpush.msra.mxu0 %v2420
      %3134 = vmatpush.msra.mxu0 %v2417
      %3135 = vmatpush.msra.mxu0 %v2414
      %3136 = vmatpush.msra.mxu0 %v2411
      %3137 = vmatpush.msra.mxu0 %v2408
      %3138 = vmatpush.msra.mxu0 %v2405
      %3139 = vmatpush.msra.mxu0 %v2402
      %3140 = vmatmul.f32.gmra.mxu0 %v2329
      %v3141 = vpop.f32.mrf.mxu0
      %3142 = vmatmul.f32.gmra.mxu0 %v2330
      %v3143 = vpop.f32.mrf.mxu0
      %v3144 = vadd.f32 0.0, %v3143
      %3145 = vmatmul.f32.gmra.mxu0 %v2331
      %v3146 = vpop.f32.mrf.mxu0
      %v3147 = vadd.f32 0.0, %v3146
      %3148 = vmatmul.f32.gmra.mxu0 %v2332
      %v3149 = vpop.f32.mrf.mxu0
      %3150 = vmatmul.f32.gmra.mxu0 %v2333
      %v3151 = vpop.f32.mrf.mxu0
      %3152 = vmatmul.f32.gmra.mxu0 %v2334
      %v3153 = vpop.f32.mrf.mxu0
      %v3154 = vadd.f32 0.0, %v3153
      %3155 = vmatmul.f32.gmra.mxu0 %v2335
      %v3156 = vpop.f32.mrf.mxu0
      %v3157 = vadd.f32 0.0, %v3156
      %3158 = vmatmul.f32.gmra.mxu0 %v2336
      %v3159 = vpop.f32.mrf.mxu0
      %3160 = vmatmul.f32.gmra.mxu0 %v2337
      %v3161 = vpop.f32.mrf.mxu0
      %3162 = vmatmul.f32.gmra.mxu0 %v2338
      %v3163 = vpop.f32.mrf.mxu0
      %v3164 = vadd.f32 0.0, %v3163
      %3165 = vmatmul.f32.gmra.mxu0 %v2339
      %v3166 = vpop.f32.mrf.mxu0
      %v3167 = vadd.f32 0.0, %v3166
      %3168 = vmatmul.f32.gmra.mxu0 %v2340
      %v3169 = vpop.f32.mrf.mxu0
      %3170 = vmatmul.f32.gmra.mxu0 %v2341
      %v3171 = vpop.f32.mrf.mxu0
      %3172 = vmatmul.f32.gmra.mxu0 %v2342
      %v3173 = vpop.f32.mrf.mxu0
      %v3174 = vadd.f32 0.0, %v3173
      %3175 = vmatmul.f32.gmra.mxu0 %v2343
      %v3176 = vpop.f32.mrf.mxu0
      %v3177 = vadd.f32 0.0, %v3176
      %3178 = vmatmul.f32.gmra.mxu0 %v2344
      %v3179 = vpop.f32.mrf.mxu0
      %3180 = vmatmul.f32.gmra.mxu0 %v2345
      %v3181 = vpop.f32.mrf.mxu0
      %3182 = vmatmul.f32.gmra.mxu0 %v2346
      %v3183 = vpop.f32.mrf.mxu0
      %v3184 = vadd.f32 0.0, %v3183
      %3185 = vmatmul.f32.gmra.mxu0 %v2347
      %v3186 = vpop.f32.mrf.mxu0
      %v3187 = vadd.f32 0.0, %v3186
      %3188 = vmatmul.f32.gmra.mxu0 %v2348
      %v3189 = vpop.f32.mrf.mxu0
      %3190 = vmatmul.f32.gmra.mxu0 %v2349
      %v3191 = vpop.f32.mrf.mxu0
      %3192 = vmatmul.f32.gmra.mxu0 %v2350
      %v3193 = vpop.f32.mrf.mxu0
      %v3194 = vadd.f32 0.0, %v3193
      %3195 = vmatmul.f32.gmra.mxu0 %v2351
      %v3196 = vpop.f32.mrf.mxu0
      %v3197 = vadd.f32 0.0, %v3196
      %3198 = vmatmul.f32.gmra.mxu0 %v2352
      %v3199 = vpop.f32.mrf.mxu0
      %3200 = vmatmul.f32.gmra.mxu0 %v2353
      %v3201 = vpop.f32.mrf.mxu0
      %3202 = vmatmul.f32.gmra.mxu0 %v2354
      %v3203 = vpop.f32.mrf.mxu0
      %v3204 = vadd.f32 0.0, %v3203
      %3205 = vmatmul.f32.gmra.mxu0 %v2355
      %v3206 = vpop.f32.mrf.mxu0
      %v3207 = vadd.f32 0.0, %v3206
      %3208 = vmatmul.f32.gmra.mxu0 %v2356
      %v3209 = vpop.f32.mrf.mxu0
      %3210 = vmatmul.f32.gmra.mxu0 %v2357
      %v3211 = vpop.f32.mrf.mxu0
      %3212 = vmatmul.f32.gmra.mxu0 %v2358
      %v3213 = vpop.f32.mrf.mxu0
      %v3214 = vadd.f32 0.0, %v3213
      %3215 = vmatmul.f32.gmra.mxu0 %v2359
      %v3216 = vpop.f32.mrf.mxu0
      %v3217 = vadd.f32 0.0, %v3216
      %3218 = vmatmul.f32.gmra.mxu0 %v2360
      %v3219 = vpop.f32.mrf.mxu0
      %3220 = vmatmul.f32.gmra.mxu0 %v2361
      %v3221 = vpop.f32.mrf.mxu0
      %3222 = vmatmul.f32.gmra.mxu0 %v2362
      %v3223 = vpop.f32.mrf.mxu0
      %v3224 = vadd.f32 0.0, %v3223
      %3225 = vmatmul.f32.gmra.mxu0 %v2363
      %v3226 = vpop.f32.mrf.mxu0
      %v3227 = vadd.f32 0.0, %v3226
      %3228 = vmatmul.f32.gmra.mxu0 %v2364
      %v3229 = vpop.f32.mrf.mxu0
      %3230 = vmatmul.f32.gmra.mxu0 %v2365
      %v3231 = vpop.f32.mrf.mxu0
      %3232 = vmatmul.f32.gmra.mxu0 %v2366
      %v3233 = vpop.f32.mrf.mxu0
      %v3234 = vadd.f32 0.0, %v3233
      %3235 = vmatmul.f32.gmra.mxu0 %v2367
      %v3236 = vpop.f32.mrf.mxu0
      %v3237 = vadd.f32 0.0, %v3236
      %3238 = vmatmul.f32.gmra.mxu0 %v2368
      %v3239 = vpop.f32.mrf.mxu0
      %3240 = vmatmul.f32.gmra.mxu0 %v2369
      %v3241 = vpop.f32.mrf.mxu0
      %3242 = vmatmul.f32.gmra.mxu0 %v2370
      %v3243 = vpop.f32.mrf.mxu0
      %v3244 = vadd.f32 0.0, %v3243
      %3245 = vmatmul.f32.gmra.mxu0 %v2371
      %v3246 = vpop.f32.mrf.mxu0
      %v3247 = vadd.f32 0.0, %v3246
      %3248 = vmatmul.f32.gmra.mxu0 %v2372
      %v3249 = vpop.f32.mrf.mxu0
      %3250 = vmatmul.f32.gmra.mxu0 %v2373
      %v3251 = vpop.f32.mrf.mxu0
      %3252 = vmatmul.f32.gmra.mxu0 %v2374
      %v3253 = vpop.f32.mrf.mxu0
      %v3254 = vadd.f32 0.0, %v3253
      %3255 = vmatmul.f32.gmra.mxu0 %v2375
      %v3256 = vpop.f32.mrf.mxu0
      %v3257 = vadd.f32 0.0, %v3256
      %3258 = vmatmul.f32.gmra.mxu0 %v2376
      %v3259 = vpop.f32.mrf.mxu0
      %3260 = vmatmul.f32.gmra.mxu0 %v2377
      %v3261 = vpop.f32.mrf.mxu0
      %3262 = vmatmul.f32.gmra.mxu0 %v2378
      %v3263 = vpop.f32.mrf.mxu0
      %v3264 = vadd.f32 0.0, %v3263
      %3265 = vmatmul.f32.gmra.mxu0 %v2379
      %v3266 = vpop.f32.mrf.mxu0
      %v3267 = vadd.f32 0.0, %v3266
      %3268 = vmatmul.f32.gmra.mxu0 %v2380
      %v3269 = vpop.f32.mrf.mxu0
      %3270 = vmatmul.f32.gmra.mxu0 %v2381
      %v3271 = vpop.f32.mrf.mxu0
      %3272 = vmatmul.f32.gmra.mxu0 %v2382
      %v3273 = vpop.f32.mrf.mxu0
      %v3274 = vadd.f32 0.0, %v3273
      %3275 = vmatmul.f32.gmra.mxu0 %v2383
      %v3276 = vpop.f32.mrf.mxu0
      %v3277 = vadd.f32 0.0, %v3276
      %3278 = vmatmul.f32.gmra.mxu0 %v2384
      %v3279 = vpop.f32.mrf.mxu0
      %3280 = vmatmul.f32.gmra.mxu0 %v2385
      %v3281 = vpop.f32.mrf.mxu0
      %3282 = vmatmul.f32.gmra.mxu0 %v2386
      %v3283 = vpop.f32.mrf.mxu0
      %v3284 = vadd.f32 0.0, %v3283
      %3285 = vmatmul.f32.gmra.mxu0 %v2387
      %v3286 = vpop.f32.mrf.mxu0
      %v3287 = vadd.f32 0.0, %v3286
      %3288 = vmatmul.f32.gmra.mxu0 %v2388
      %v3289 = vpop.f32.mrf.mxu0
      %3290 = vmatmul.f32.gmra.mxu0 %v2389
      %v3291 = vpop.f32.mrf.mxu0
      %3292 = vmatmul.f32.gmra.mxu0 %v2390
      %v3293 = vpop.f32.mrf.mxu0
      %v3294 = vadd.f32 0.0, %v3293
      %3295 = vmatmul.f32.gmra.mxu0 %v2391
      %v3296 = vpop.f32.mrf.mxu0
      %v3297 = vadd.f32 0.0, %v3296
      %3298 = vmatmul.f32.gmra.mxu0 %v2392
      %v3299 = vpop.f32.mrf.mxu0
      %3300 = vdwg.mxu0
      %3301 = vmatpush.msra.mxu0 %v2495
      %3302 = vmatpush.msra.mxu0 %v2492
      %3303 = vmatpush.msra.mxu0 %v2489
      %3304 = vmatpush.msra.mxu0 %v2486
      %3305 = vmatpush.msra.mxu0 %v2483
      %3306 = vmatpush.msra.mxu0 %v2480
      %3307 = vmatpush.msra.mxu0 %v2477
      %3308 = vmatpush.msra.mxu0 %v2474
      %3309 = vmatpush.msra.mxu0 %v2471
      %3310 = vmatpush.msra.mxu0 %v2468
      %3311 = vmatpush.msra.mxu0 %v2465
      %3312 = vmatpush.msra.mxu0 %v2462
      %3313 = vmatpush.msra.mxu0 %v2459
      %3314 = vmatpush.msra.mxu0 %v2456
      %3315 = vmatpush.msra.mxu0 %v2453
      %3316 = vmatpush.msra.mxu0 %v2450
      %3317 = vmatmul.f32.gmra.mxu0 %v2333
      %v3318 = vpop.f32.mrf.mxu0
      %3319 = vmatmul.f32.gmra.mxu0 %v2334
      %v3320 = vpop.f32.mrf.mxu0
      %v3321 = vadd.f32 %v3144, %v3320
      %3322 = vmatmul.f32.gmra.mxu0 %v2335
      %v3323 = vpop.f32.mrf.mxu0
      %v3324 = vadd.f32 %v3147, %v3323
      %3325 = vmatmul.f32.gmra.mxu0 %v2336
      %v3326 = vpop.f32.mrf.mxu0
      %3327 = vmatmul.f32.gmra.mxu0 %v2337
      %v3328 = vpop.f32.mrf.mxu0
      %3329 = vmatmul.f32.gmra.mxu0 %v2338
      %v3330 = vpop.f32.mrf.mxu0
      %v3331 = vadd.f32 %v3154, %v3330
      %3332 = vmatmul.f32.gmra.mxu0 %v2339
      %v3333 = vpop.f32.mrf.mxu0
      %v3334 = vadd.f32 %v3157, %v3333
      %3335 = vmatmul.f32.gmra.mxu0 %v2340
      %v3336 = vpop.f32.mrf.mxu0
      %3337 = vmatmul.f32.gmra.mxu0 %v2341
      %v3338 = vpop.f32.mrf.mxu0
      %3339 = vmatmul.f32.gmra.mxu0 %v2342
      %v3340 = vpop.f32.mrf.mxu0
      %v3341 = vadd.f32 %v3164, %v3340
      %3342 = vmatmul.f32.gmra.mxu0 %v2343
      %v3343 = vpop.f32.mrf.mxu0
      %v3344 = vadd.f32 %v3167, %v3343
      %3345 = vmatmul.f32.gmra.mxu0 %v2344
      %v3346 = vpop.f32.mrf.mxu0
      %3347 = vmatmul.f32.gmra.mxu0 %v2345
      %v3348 = vpop.f32.mrf.mxu0
      %3349 = vmatmul.f32.gmra.mxu0 %v2346
      %v3350 = vpop.f32.mrf.mxu0
      %v3351 = vadd.f32 %v3174, %v3350
      %3352 = vmatmul.f32.gmra.mxu0 %v2347
      %v3353 = vpop.f32.mrf.mxu0
      %v3354 = vadd.f32 %v3177, %v3353
      %3355 = vmatmul.f32.gmra.mxu0 %v2348
      %v3356 = vpop.f32.mrf.mxu0
      %3357 = vmatmul.f32.gmra.mxu0 %v2349
      %v3358 = vpop.f32.mrf.mxu0
      %3359 = vmatmul.f32.gmra.mxu0 %v2350
      %v3360 = vpop.f32.mrf.mxu0
      %v3361 = vadd.f32 %v3184, %v3360
      %3362 = vmatmul.f32.gmra.mxu0 %v2351
      %v3363 = vpop.f32.mrf.mxu0
      %v3364 = vadd.f32 %v3187, %v3363
      %3365 = vmatmul.f32.gmra.mxu0 %v2352
      %v3366 = vpop.f32.mrf.mxu0
      %3367 = vmatmul.f32.gmra.mxu0 %v2353
      %v3368 = vpop.f32.mrf.mxu0
      %3369 = vmatmul.f32.gmra.mxu0 %v2354
      %v3370 = vpop.f32.mrf.mxu0
      %v3371 = vadd.f32 %v3194, %v3370
      %3372 = vmatmul.f32.gmra.mxu0 %v2355
      %v3373 = vpop.f32.mrf.mxu0
      %v3374 = vadd.f32 %v3197, %v3373
      %3375 = vmatmul.f32.gmra.mxu0 %v2356
      %v3376 = vpop.f32.mrf.mxu0
      %3377 = vmatmul.f32.gmra.mxu0 %v2357
      %v3378 = vpop.f32.mrf.mxu0
      %3379 = vmatmul.f32.gmra.mxu0 %v2358
      %v3380 = vpop.f32.mrf.mxu0
      %v3381 = vadd.f32 %v3204, %v3380
      %3382 = vmatmul.f32.gmra.mxu0 %v2359
      %v3383 = vpop.f32.mrf.mxu0
      %v3384 = vadd.f32 %v3207, %v3383
      %3385 = vmatmul.f32.gmra.mxu0 %v2360
      %v3386 = vpop.f32.mrf.mxu0
      %3387 = vmatmul.f32.gmra.mxu0 %v2361
      %v3388 = vpop.f32.mrf.mxu0
      %3389 = vmatmul.f32.gmra.mxu0 %v2362
      %v3390 = vpop.f32.mrf.mxu0
      %v3391 = vadd.f32 %v3214, %v3390
      %3392 = vmatmul.f32.gmra.mxu0 %v2363
      %v3393 = vpop.f32.mrf.mxu0
      %v3394 = vadd.f32 %v3217, %v3393
      %3395 = vmatmul.f32.gmra.mxu0 %v2364
      %v3396 = vpop.f32.mrf.mxu0
      %3397 = vmatmul.f32.gmra.mxu0 %v2365
      %v3398 = vpop.f32.mrf.mxu0
      %3399 = vmatmul.f32.gmra.mxu0 %v2366
      %v3400 = vpop.f32.mrf.mxu0
      %v3401 = vadd.f32 %v3224, %v3400
      %3402 = vmatmul.f32.gmra.mxu0 %v2367
      %v3403 = vpop.f32.mrf.mxu0
      %v3404 = vadd.f32 %v3227, %v3403
      %3405 = vmatmul.f32.gmra.mxu0 %v2368
      %v3406 = vpop.f32.mrf.mxu0
      %3407 = vmatmul.f32.gmra.mxu0 %v2369
      %v3408 = vpop.f32.mrf.mxu0
      %3409 = vmatmul.f32.gmra.mxu0 %v2370
      %v3410 = vpop.f32.mrf.mxu0
      %v3411 = vadd.f32 %v3234, %v3410
      %3412 = vmatmul.f32.gmra.mxu0 %v2371
      %v3413 = vpop.f32.mrf.mxu0
      %v3414 = vadd.f32 %v3237, %v3413
      %3415 = vmatmul.f32.gmra.mxu0 %v2372
      %v3416 = vpop.f32.mrf.mxu0
      %3417 = vmatmul.f32.gmra.mxu0 %v2373
      %v3418 = vpop.f32.mrf.mxu0
      %3419 = vmatmul.f32.gmra.mxu0 %v2374
      %v3420 = vpop.f32.mrf.mxu0
      %v3421 = vadd.f32 %v3244, %v3420
      %3422 = vmatmul.f32.gmra.mxu0 %v2375
      %v3423 = vpop.f32.mrf.mxu0
      %v3424 = vadd.f32 %v3247, %v3423
      %3425 = vmatmul.f32.gmra.mxu0 %v2376
      %v3426 = vpop.f32.mrf.mxu0
      %3427 = vmatmul.f32.gmra.mxu0 %v2377
      %v3428 = vpop.f32.mrf.mxu0
      %3429 = vmatmul.f32.gmra.mxu0 %v2378
      %v3430 = vpop.f32.mrf.mxu0
      %v3431 = vadd.f32 %v3254, %v3430
      %3432 = vmatmul.f32.gmra.mxu0 %v2379
      %v3433 = vpop.f32.mrf.mxu0
      %v3434 = vadd.f32 %v3257, %v3433
      %3435 = vmatmul.f32.gmra.mxu0 %v2380
      %v3436 = vpop.f32.mrf.mxu0
      %3437 = vmatmul.f32.gmra.mxu0 %v2381
      %v3438 = vpop.f32.mrf.mxu0
      %3439 = vmatmul.f32.gmra.mxu0 %v2382
      %v3440 = vpop.f32.mrf.mxu0
      %v3441 = vadd.f32 %v3264, %v3440
      %3442 = vmatmul.f32.gmra.mxu0 %v2383
      %v3443 = vpop.f32.mrf.mxu0
      %v3444 = vadd.f32 %v3267, %v3443
      %3445 = vmatmul.f32.gmra.mxu0 %v2384
      %v3446 = vpop.f32.mrf.mxu0
      %3447 = vmatmul.f32.gmra.mxu0 %v2385
      %v3448 = vpop.f32.mrf.mxu0
      %3449 = vmatmul.f32.gmra.mxu0 %v2386
      %v3450 = vpop.f32.mrf.mxu0
      %v3451 = vadd.f32 %v3274, %v3450
      %3452 = vmatmul.f32.gmra.mxu0 %v2387
      %v3453 = vpop.f32.mrf.mxu0
      %v3454 = vadd.f32 %v3277, %v3453
      %3455 = vmatmul.f32.gmra.mxu0 %v2388
      %v3456 = vpop.f32.mrf.mxu0
      %3457 = vmatmul.f32.gmra.mxu0 %v2389
      %v3458 = vpop.f32.mrf.mxu0
      %3459 = vmatmul.f32.gmra.mxu0 %v2390
      %v3460 = vpop.f32.mrf.mxu0
      %v3461 = vadd.f32 %v3284, %v3460
      %3462 = vmatmul.f32.gmra.mxu0 %v2391
      %v3463 = vpop.f32.mrf.mxu0
      %v3464 = vadd.f32 %v3287, %v3463
      %3465 = vmatmul.f32.gmra.mxu0 %v2392
      %v3466 = vpop.f32.mrf.mxu0
      %3467 = vmatmul.f32.gmra.mxu0 %v2393
      %v3468 = vpop.f32.mrf.mxu0
      %3469 = vmatmul.f32.gmra.mxu0 %v2394
      %v3470 = vpop.f32.mrf.mxu0
      %v3471 = vadd.f32 %v3294, %v3470
      %3472 = vmatmul.f32.gmra.mxu0 %v2395
      %v3473 = vpop.f32.mrf.mxu0
      %v3474 = vadd.f32 %v3297, %v3473
      %3475 = vmatmul.f32.gmra.mxu0 %v2396
      %v3476 = vpop.f32.mrf.mxu0
      %3477 = vdwg.mxu0
      %3478 = vmatpush.msra.mxu0 %v2543
      %3479 = vmatpush.msra.mxu0 %v2540
      %3480 = vmatpush.msra.mxu0 %v2537
      %3481 = vmatpush.msra.mxu0 %v2534
      %3482 = vmatpush.msra.mxu0 %v2531
      %3483 = vmatpush.msra.mxu0 %v2528
      %3484 = vmatpush.msra.mxu0 %v2525
      %3485 = vmatpush.msra.mxu0 %v2522
      %3486 = vmatpush.msra.mxu0 %v2519
      %3487 = vmatpush.msra.mxu0 %v2516
      %3488 = vmatpush.msra.mxu0 %v2513
      %3489 = vmatpush.msra.mxu0 %v2510
      %3490 = vmatpush.msra.mxu0 %v2507
      %3491 = vmatpush.msra.mxu0 %v2504
      %3492 = vmatpush.msra.mxu0 %v2501
      %3493 = vmatpush.msra.mxu0 %v2498
      %3494 = vmatmul.f32.gmra.mxu0 %v2337
      %v3495 = vpop.f32.mrf.mxu0
      %3496 = vmatmul.f32.gmra.mxu0 %v2338
      %v3497 = vpop.f32.mrf.mxu0
      %v3498 = vadd.f32 %v3321, %v3497
      %3499 = vmatmul.f32.gmra.mxu0 %v2339
      %v3500 = vpop.f32.mrf.mxu0
      %v3501 = vadd.f32 %v3324, %v3500
      %3502 = vmatmul.f32.gmra.mxu0 %v2340
      %v3503 = vpop.f32.mrf.mxu0
      %3504 = vmatmul.f32.gmra.mxu0 %v2341
      %v3505 = vpop.f32.mrf.mxu0
      %3506 = vmatmul.f32.gmra.mxu0 %v2342
      %v3507 = vpop.f32.mrf.mxu0
      %v3508 = vadd.f32 %v3331, %v3507
      %3509 = vmatmul.f32.gmra.mxu0 %v2343
      %v3510 = vpop.f32.mrf.mxu0
      %v3511 = vadd.f32 %v3334, %v3510
      %3512 = vmatmul.f32.gmra.mxu0 %v2344
      %v3513 = vpop.f32.mrf.mxu0
      %3514 = vmatmul.f32.gmra.mxu0 %v2345
      %v3515 = vpop.f32.mrf.mxu0
      %3516 = vmatmul.f32.gmra.mxu0 %v2346
      %v3517 = vpop.f32.mrf.mxu0
      %v3518 = vadd.f32 %v3341, %v3517
      %3519 = vmatmul.f32.gmra.mxu0 %v2347
      %v3520 = vpop.f32.mrf.mxu0
      %v3521 = vadd.f32 %v3344, %v3520
      %3522 = vmatmul.f32.gmra.mxu0 %v2348
      %v3523 = vpop.f32.mrf.mxu0
      %3524 = vmatmul.f32.gmra.mxu0 %v2349
      %v3525 = vpop.f32.mrf.mxu0
      %3526 = vmatmul.f32.gmra.mxu0 %v2350
      %v3527 = vpop.f32.mrf.mxu0
      %v3528 = vadd.f32 %v3351, %v3527
      %3529 = vmatmul.f32.gmra.mxu0 %v2351
      %v3530 = vpop.f32.mrf.mxu0
      %v3531 = vadd.f32 %v3354, %v3530
      %3532 = vmatmul.f32.gmra.mxu0 %v2352
      %v3533 = vpop.f32.mrf.mxu0
      %3534 = vmatmul.f32.gmra.mxu0 %v2353
      %v3535 = vpop.f32.mrf.mxu0
      %3536 = vmatmul.f32.gmra.mxu0 %v2354
      %v3537 = vpop.f32.mrf.mxu0
      %v3538 = vadd.f32 %v3361, %v3537
      %3539 = vmatmul.f32.gmra.mxu0 %v2355
      %v3540 = vpop.f32.mrf.mxu0
      %v3541 = vadd.f32 %v3364, %v3540
      %3542 = vmatmul.f32.gmra.mxu0 %v2356
      %v3543 = vpop.f32.mrf.mxu0
      %3544 = vmatmul.f32.gmra.mxu0 %v2357
      %v3545 = vpop.f32.mrf.mxu0
      %3546 = vmatmul.f32.gmra.mxu0 %v2358
      %v3547 = vpop.f32.mrf.mxu0
      %v3548 = vadd.f32 %v3371, %v3547
      %3549 = vmatmul.f32.gmra.mxu0 %v2359
      %v3550 = vpop.f32.mrf.mxu0
      %v3551 = vadd.f32 %v3374, %v3550
      %3552 = vmatmul.f32.gmra.mxu0 %v2360
      %v3553 = vpop.f32.mrf.mxu0
      %3554 = vmatmul.f32.gmra.mxu0 %v2361
      %v3555 = vpop.f32.mrf.mxu0
      %3556 = vmatmul.f32.gmra.mxu0 %v2362
      %v3557 = vpop.f32.mrf.mxu0
      %v3558 = vadd.f32 %v3381, %v3557
      %3559 = vmatmul.f32.gmra.mxu0 %v2363
      %v3560 = vpop.f32.mrf.mxu0
      %v3561 = vadd.f32 %v3384, %v3560
      %3562 = vmatmul.f32.gmra.mxu0 %v2364
      %v3563 = vpop.f32.mrf.mxu0
      %3564 = vmatmul.f32.gmra.mxu0 %v2365
      %v3565 = vpop.f32.mrf.mxu0
      %3566 = vmatmul.f32.gmra.mxu0 %v2366
      %v3567 = vpop.f32.mrf.mxu0
      %v3568 = vadd.f32 %v3391, %v3567
      %3569 = vmatmul.f32.gmra.mxu0 %v2367
      %v3570 = vpop.f32.mrf.mxu0
      %v3571 = vadd.f32 %v3394, %v3570
      %3572 = vmatmul.f32.gmra.mxu0 %v2368
      %v3573 = vpop.f32.mrf.mxu0
      %3574 = vmatmul.f32.gmra.mxu0 %v2369
      %v3575 = vpop.f32.mrf.mxu0
      %3576 = vmatmul.f32.gmra.mxu0 %v2370
      %v3577 = vpop.f32.mrf.mxu0
      %v3578 = vadd.f32 %v3401, %v3577
      %3579 = vmatmul.f32.gmra.mxu0 %v2371
      %v3580 = vpop.f32.mrf.mxu0
      %v3581 = vadd.f32 %v3404, %v3580
      %3582 = vmatmul.f32.gmra.mxu0 %v2372
      %v3583 = vpop.f32.mrf.mxu0
      %3584 = vmatmul.f32.gmra.mxu0 %v2373
      %v3585 = vpop.f32.mrf.mxu0
      %3586 = vmatmul.f32.gmra.mxu0 %v2374
      %v3587 = vpop.f32.mrf.mxu0
      %v3588 = vadd.f32 %v3411, %v3587
      %3589 = vmatmul.f32.gmra.mxu0 %v2375
      %v3590 = vpop.f32.mrf.mxu0
      %v3591 = vadd.f32 %v3414, %v3590
      %3592 = vmatmul.f32.gmra.mxu0 %v2376
      %v3593 = vpop.f32.mrf.mxu0
      %3594 = vmatmul.f32.gmra.mxu0 %v2377
      %v3595 = vpop.f32.mrf.mxu0
      %3596 = vmatmul.f32.gmra.mxu0 %v2378
      %v3597 = vpop.f32.mrf.mxu0
      %v3598 = vadd.f32 %v3421, %v3597
      %3599 = vmatmul.f32.gmra.mxu0 %v2379
      %v3600 = vpop.f32.mrf.mxu0
      %v3601 = vadd.f32 %v3424, %v3600
      %3602 = vmatmul.f32.gmra.mxu0 %v2380
      %v3603 = vpop.f32.mrf.mxu0
      %3604 = vmatmul.f32.gmra.mxu0 %v2381
      %v3605 = vpop.f32.mrf.mxu0
      %3606 = vmatmul.f32.gmra.mxu0 %v2382
      %v3607 = vpop.f32.mrf.mxu0
      %v3608 = vadd.f32 %v3431, %v3607
      %3609 = vmatmul.f32.gmra.mxu0 %v2383
      %v3610 = vpop.f32.mrf.mxu0
      %v3611 = vadd.f32 %v3434, %v3610
      %3612 = vmatmul.f32.gmra.mxu0 %v2384
      %v3613 = vpop.f32.mrf.mxu0
      %3614 = vmatmul.f32.gmra.mxu0 %v2385
      %v3615 = vpop.f32.mrf.mxu0
      %3616 = vmatmul.f32.gmra.mxu0 %v2386
      %v3617 = vpop.f32.mrf.mxu0
      %v3618 = vadd.f32 %v3441, %v3617
      %3619 = vmatmul.f32.gmra.mxu0 %v2387
      %v3620 = vpop.f32.mrf.mxu0
      %v3621 = vadd.f32 %v3444, %v3620
      %3622 = vmatmul.f32.gmra.mxu0 %v2388
      %v3623 = vpop.f32.mrf.mxu0
      %3624 = vmatmul.f32.gmra.mxu0 %v2389
      %v3625 = vpop.f32.mrf.mxu0
      %3626 = vmatmul.f32.gmra.mxu0 %v2390
      %v3627 = vpop.f32.mrf.mxu0
      %v3628 = vadd.f32 %v3451, %v3627
      %3629 = vmatmul.f32.gmra.mxu0 %v2391
      %v3630 = vpop.f32.mrf.mxu0
      %v3631 = vadd.f32 %v3454, %v3630
      %3632 = vmatmul.f32.gmra.mxu0 %v2392
      %v3633 = vpop.f32.mrf.mxu0
      %3634 = vmatmul.f32.gmra.mxu0 %v2393
      %v3635 = vpop.f32.mrf.mxu0
      %3636 = vmatmul.f32.gmra.mxu0 %v2394
      %v3637 = vpop.f32.mrf.mxu0
      %v3638 = vadd.f32 %v3461, %v3637
      %3639 = vmatmul.f32.gmra.mxu0 %v2395
      %v3640 = vpop.f32.mrf.mxu0
      %v3641 = vadd.f32 %v3464, %v3640
      %3642 = vmatmul.f32.gmra.mxu0 %v2396
      %v3643 = vpop.f32.mrf.mxu0
      %3644 = vmatmul.f32.gmra.mxu0 %v2397
      %v3645 = vpop.f32.mrf.mxu0
      %3646 = vmatmul.f32.gmra.mxu0 %v2398
      %v3647 = vpop.f32.mrf.mxu0
      %v3648 = vadd.f32 %v3471, %v3647
      %3649 = vmatmul.f32.gmra.mxu0 %v2399
      %v3650 = vpop.f32.mrf.mxu0
      %v3651 = vadd.f32 %v3474, %v3650
      %3652 = vmatmul.f32.gmra.mxu0 %v2400
      %v3653 = vpop.f32.mrf.mxu0
      %3654 = vdwg.mxu0
      %3655 = vmatpush.msra.mxu0 %v2448
      %3656 = vmatpush.msra.mxu0 %v2445
      %3657 = vmatpush.msra.mxu0 %v2442
      %3658 = vmatpush.msra.mxu0 %v2439
      %3659 = vmatpush.msra.mxu0 %v2436
      %3660 = vmatpush.msra.mxu0 %v2433
      %3661 = vmatpush.msra.mxu0 %v2430
      %3662 = vmatpush.msra.mxu0 %v2427
      %3663 = vmatpush.msra.mxu0 %v2424
      %3664 = vmatpush.msra.mxu0 %v2421
      %3665 = vmatpush.msra.mxu0 %v2418
      %3666 = vmatpush.msra.mxu0 %v2415
      %3667 = vmatpush.msra.mxu0 %v2412
      %3668 = vmatpush.msra.mxu0 %v2409
      %3669 = vmatpush.msra.mxu0 %v2406
      %3670 = vmatpush.msra.mxu0 %v2403
      %3671 = vmatmul.f32.gmra.mxu0 %v2329
      %v3672 = vpop.f32.mrf.mxu0
      %3673 = vmatmul.f32.gmra.mxu0 %v2330
      %v3674 = vpop.f32.mrf.mxu0
      %v3675 = vadd.f32 0.0, %v3674
      %3676 = vmatmul.f32.gmra.mxu0 %v2331
      %v3677 = vpop.f32.mrf.mxu0
      %v3678 = vadd.f32 0.0, %v3677
      %3679 = vmatmul.f32.gmra.mxu0 %v2332
      %v3680 = vpop.f32.mrf.mxu0
      %v3681 = vadd.f32 0.0, %v3680
      %3682 = vmatmul.f32.gmra.mxu0 %v2333
      %v3683 = vpop.f32.mrf.mxu0
      %3684 = vmatmul.f32.gmra.mxu0 %v2334
      %v3685 = vpop.f32.mrf.mxu0
      %v3686 = vadd.f32 0.0, %v3685
      %3687 = vmatmul.f32.gmra.mxu0 %v2335
      %v3688 = vpop.f32.mrf.mxu0
      %v3689 = vadd.f32 0.0, %v3688
      %3690 = vmatmul.f32.gmra.mxu0 %v2336
      %v3691 = vpop.f32.mrf.mxu0
      %v3692 = vadd.f32 0.0, %v3691
      %3693 = vmatmul.f32.gmra.mxu0 %v2337
      %v3694 = vpop.f32.mrf.mxu0
      %3695 = vmatmul.f32.gmra.mxu0 %v2338
      %v3696 = vpop.f32.mrf.mxu0
      %v3697 = vadd.f32 0.0, %v3696
      %3698 = vmatmul.f32.gmra.mxu0 %v2339
      %v3699 = vpop.f32.mrf.mxu0
      %v3700 = vadd.f32 0.0, %v3699
      %3701 = vmatmul.f32.gmra.mxu0 %v2340
      %v3702 = vpop.f32.mrf.mxu0
      %v3703 = vadd.f32 0.0, %v3702
      %3704 = vmatmul.f32.gmra.mxu0 %v2341
      %v3705 = vpop.f32.mrf.mxu0
      %3706 = vmatmul.f32.gmra.mxu0 %v2342
      %v3707 = vpop.f32.mrf.mxu0
      %v3708 = vadd.f32 0.0, %v3707
      %3709 = vmatmul.f32.gmra.mxu0 %v2343
      %v3710 = vpop.f32.mrf.mxu0
      %v3711 = vadd.f32 0.0, %v3710
      %3712 = vmatmul.f32.gmra.mxu0 %v2344
      %v3713 = vpop.f32.mrf.mxu0
      %v3714 = vadd.f32 0.0, %v3713
      %3715 = vmatmul.f32.gmra.mxu0 %v2345
      %v3716 = vpop.f32.mrf.mxu0
      %3717 = vmatmul.f32.gmra.mxu0 %v2346
      %v3718 = vpop.f32.mrf.mxu0
      %v3719 = vadd.f32 0.0, %v3718
      %3720 = vmatmul.f32.gmra.mxu0 %v2347
      %v3721 = vpop.f32.mrf.mxu0
      %v3722 = vadd.f32 0.0, %v3721
      %3723 = vmatmul.f32.gmra.mxu0 %v2348
      %v3724 = vpop.f32.mrf.mxu0
      %v3725 = vadd.f32 0.0, %v3724
      %3726 = vmatmul.f32.gmra.mxu0 %v2349
      %v3727 = vpop.f32.mrf.mxu0
      %3728 = vmatmul.f32.gmra.mxu0 %v2350
      %v3729 = vpop.f32.mrf.mxu0
      %v3730 = vadd.f32 0.0, %v3729
      %3731 = vmatmul.f32.gmra.mxu0 %v2351
      %v3732 = vpop.f32.mrf.mxu0
      %v3733 = vadd.f32 0.0, %v3732
      %3734 = vmatmul.f32.gmra.mxu0 %v2352
      %v3735 = vpop.f32.mrf.mxu0
      %v3736 = vadd.f32 0.0, %v3735
      %3737 = vmatmul.f32.gmra.mxu0 %v2353
      %v3738 = vpop.f32.mrf.mxu0
      %3739 = vmatmul.f32.gmra.mxu0 %v2354
      %v3740 = vpop.f32.mrf.mxu0
      %v3741 = vadd.f32 0.0, %v3740
      %3742 = vmatmul.f32.gmra.mxu0 %v2355
      %v3743 = vpop.f32.mrf.mxu0
      %v3744 = vadd.f32 0.0, %v3743
      %3745 = vmatmul.f32.gmra.mxu0 %v2356
      %v3746 = vpop.f32.mrf.mxu0
      %v3747 = vadd.f32 0.0, %v3746
      %3748 = vmatmul.f32.gmra.mxu0 %v2357
      %v3749 = vpop.f32.mrf.mxu0
      %3750 = vmatmul.f32.gmra.mxu0 %v2358
      %v3751 = vpop.f32.mrf.mxu0
      %v3752 = vadd.f32 0.0, %v3751
      %3753 = vmatmul.f32.gmra.mxu0 %v2359
      %v3754 = vpop.f32.mrf.mxu0
      %v3755 = vadd.f32 0.0, %v3754
      %3756 = vmatmul.f32.gmra.mxu0 %v2360
      %v3757 = vpop.f32.mrf.mxu0
      %v3758 = vadd.f32 0.0, %v3757
      %3759 = vmatmul.f32.gmra.mxu0 %v2361
      %v3760 = vpop.f32.mrf.mxu0
      %3761 = vmatmul.f32.gmra.mxu0 %v2362
      %v3762 = vpop.f32.mrf.mxu0
      %v3763 = vadd.f32 0.0, %v3762
      %3764 = vmatmul.f32.gmra.mxu0 %v2363
      %v3765 = vpop.f32.mrf.mxu0
      %v3766 = vadd.f32 0.0, %v3765
      %3767 = vmatmul.f32.gmra.mxu0 %v2364
      %v3768 = vpop.f32.mrf.mxu0
      %v3769 = vadd.f32 0.0, %v3768
      %3770 = vmatmul.f32.gmra.mxu0 %v2365
      %v3771 = vpop.f32.mrf.mxu0
      %3772 = vmatmul.f32.gmra.mxu0 %v2366
      %v3773 = vpop.f32.mrf.mxu0
      %v3774 = vadd.f32 0.0, %v3773
      %3775 = vmatmul.f32.gmra.mxu0 %v2367
      %v3776 = vpop.f32.mrf.mxu0
      %v3777 = vadd.f32 0.0, %v3776
      %3778 = vmatmul.f32.gmra.mxu0 %v2368
      %v3779 = vpop.f32.mrf.mxu0
      %v3780 = vadd.f32 0.0, %v3779
      %3781 = vmatmul.f32.gmra.mxu0 %v2369
      %v3782 = vpop.f32.mrf.mxu0
      %3783 = vmatmul.f32.gmra.mxu0 %v2370
      %v3784 = vpop.f32.mrf.mxu0
      %v3785 = vadd.f32 0.0, %v3784
      %3786 = vmatmul.f32.gmra.mxu0 %v2371
      %v3787 = vpop.f32.mrf.mxu0
      %v3788 = vadd.f32 0.0, %v3787
      %3789 = vmatmul.f32.gmra.mxu0 %v2372
      %v3790 = vpop.f32.mrf.mxu0
      %v3791 = vadd.f32 0.0, %v3790
      %3792 = vmatmul.f32.gmra.mxu0 %v2373
      %v3793 = vpop.f32.mrf.mxu0
      %3794 = vmatmul.f32.gmra.mxu0 %v2374
      %v3795 = vpop.f32.mrf.mxu0
      %v3796 = vadd.f32 0.0, %v3795
      %3797 = vmatmul.f32.gmra.mxu0 %v2375
      %v3798 = vpop.f32.mrf.mxu0
      %v3799 = vadd.f32 0.0, %v3798
      %3800 = vmatmul.f32.gmra.mxu0 %v2376
      %v3801 = vpop.f32.mrf.mxu0
      %v3802 = vadd.f32 0.0, %v3801
      %3803 = vmatmul.f32.gmra.mxu0 %v2377
      %v3804 = vpop.f32.mrf.mxu0
      %3805 = vmatmul.f32.gmra.mxu0 %v2378
      %v3806 = vpop.f32.mrf.mxu0
      %v3807 = vadd.f32 0.0, %v3806
      %3808 = vmatmul.f32.gmra.mxu0 %v2379
      %v3809 = vpop.f32.mrf.mxu0
      %v3810 = vadd.f32 0.0, %v3809
      %3811 = vmatmul.f32.gmra.mxu0 %v2380
      %v3812 = vpop.f32.mrf.mxu0
      %v3813 = vadd.f32 0.0, %v3812
      %3814 = vmatmul.f32.gmra.mxu0 %v2381
      %v3815 = vpop.f32.mrf.mxu0
      %3816 = vmatmul.f32.gmra.mxu0 %v2382
      %v3817 = vpop.f32.mrf.mxu0
      %v3818 = vadd.f32 0.0, %v3817
      %3819 = vmatmul.f32.gmra.mxu0 %v2383
      %v3820 = vpop.f32.mrf.mxu0
      %v3821 = vadd.f32 0.0, %v3820
      %3822 = vmatmul.f32.gmra.mxu0 %v2384
      %v3823 = vpop.f32.mrf.mxu0
      %v3824 = vadd.f32 0.0, %v3823
      %3825 = vmatmul.f32.gmra.mxu0 %v2385
      %v3826 = vpop.f32.mrf.mxu0
      %3827 = vmatmul.f32.gmra.mxu0 %v2386
      %v3828 = vpop.f32.mrf.mxu0
      %v3829 = vadd.f32 0.0, %v3828
      %3830 = vmatmul.f32.gmra.mxu0 %v2387
      %v3831 = vpop.f32.mrf.mxu0
      %v3832 = vadd.f32 0.0, %v3831
      %3833 = vmatmul.f32.gmra.mxu0 %v2388
      %v3834 = vpop.f32.mrf.mxu0
      %v3835 = vadd.f32 0.0, %v3834
      %3836 = vmatmul.f32.gmra.mxu0 %v2389
      %v3837 = vpop.f32.mrf.mxu0
      %3838 = vmatmul.f32.gmra.mxu0 %v2390
      %v3839 = vpop.f32.mrf.mxu0
      %v3840 = vadd.f32 0.0, %v3839
      %3841 = vmatmul.f32.gmra.mxu0 %v2391
      %v3842 = vpop.f32.mrf.mxu0
      %v3843 = vadd.f32 0.0, %v3842
      %3844 = vmatmul.f32.gmra.mxu0 %v2392
      %v3845 = vpop.f32.mrf.mxu0
      %v3846 = vadd.f32 0.0, %v3845
      %3847 = vdwg.mxu0
      %3848 = vmatpush.msra.mxu0 %v2496
      %3849 = vmatpush.msra.mxu0 %v2493
      %3850 = vmatpush.msra.mxu0 %v2490
      %3851 = vmatpush.msra.mxu0 %v2487
      %3852 = vmatpush.msra.mxu0 %v2484
      %3853 = vmatpush.msra.mxu0 %v2481
      %3854 = vmatpush.msra.mxu0 %v2478
      %3855 = vmatpush.msra.mxu0 %v2475
      %3856 = vmatpush.msra.mxu0 %v2472
      %3857 = vmatpush.msra.mxu0 %v2469
      %3858 = vmatpush.msra.mxu0 %v2466
      %3859 = vmatpush.msra.mxu0 %v2463
      %3860 = vmatpush.msra.mxu0 %v2460
      %3861 = vmatpush.msra.mxu0 %v2457
      %3862 = vmatpush.msra.mxu0 %v2454
      %3863 = vmatpush.msra.mxu0 %v2451
      %3864 = vmatmul.f32.gmra.mxu0 %v2333
      %v3865 = vpop.f32.mrf.mxu0
      %3866 = vmatmul.f32.gmra.mxu0 %v2334
      %v3867 = vpop.f32.mrf.mxu0
      %v3868 = vadd.f32 %v3675, %v3867
      %3869 = vmatmul.f32.gmra.mxu0 %v2335
      %v3870 = vpop.f32.mrf.mxu0
      %v3871 = vadd.f32 %v3678, %v3870
      %3872 = vmatmul.f32.gmra.mxu0 %v2336
      %v3873 = vpop.f32.mrf.mxu0
      %v3874 = vadd.f32 %v3681, %v3873
      %3875 = vmatmul.f32.gmra.mxu0 %v2337
      %v3876 = vpop.f32.mrf.mxu0
      %3877 = vmatmul.f32.gmra.mxu0 %v2338
      %v3878 = vpop.f32.mrf.mxu0
      %v3879 = vadd.f32 %v3686, %v3878
      %3880 = vmatmul.f32.gmra.mxu0 %v2339
      %v3881 = vpop.f32.mrf.mxu0
      %v3882 = vadd.f32 %v3689, %v3881
      %3883 = vmatmul.f32.gmra.mxu0 %v2340
      %v3884 = vpop.f32.mrf.mxu0
      %v3885 = vadd.f32 %v3692, %v3884
      %3886 = vmatmul.f32.gmra.mxu0 %v2341
      %v3887 = vpop.f32.mrf.mxu0
      %3888 = vmatmul.f32.gmra.mxu0 %v2342
      %v3889 = vpop.f32.mrf.mxu0
      %v3890 = vadd.f32 %v3697, %v3889
      %3891 = vmatmul.f32.gmra.mxu0 %v2343
      %v3892 = vpop.f32.mrf.mxu0
      %v3893 = vadd.f32 %v3700, %v3892
      %3894 = vmatmul.f32.gmra.mxu0 %v2344
      %v3895 = vpop.f32.mrf.mxu0
      %v3896 = vadd.f32 %v3703, %v3895
      %3897 = vmatmul.f32.gmra.mxu0 %v2345
      %v3898 = vpop.f32.mrf.mxu0
      %3899 = vmatmul.f32.gmra.mxu0 %v2346
      %v3900 = vpop.f32.mrf.mxu0
      %v3901 = vadd.f32 %v3708, %v3900
      %3902 = vmatmul.f32.gmra.mxu0 %v2347
      %v3903 = vpop.f32.mrf.mxu0
      %v3904 = vadd.f32 %v3711, %v3903
      %3905 = vmatmul.f32.gmra.mxu0 %v2348
      %v3906 = vpop.f32.mrf.mxu0
      %v3907 = vadd.f32 %v3714, %v3906
      %3908 = vmatmul.f32.gmra.mxu0 %v2349
      %v3909 = vpop.f32.mrf.mxu0
      %3910 = vmatmul.f32.gmra.mxu0 %v2350
      %v3911 = vpop.f32.mrf.mxu0
      %v3912 = vadd.f32 %v3719, %v3911
      %3913 = vmatmul.f32.gmra.mxu0 %v2351
      %v3914 = vpop.f32.mrf.mxu0
      %v3915 = vadd.f32 %v3722, %v3914
      %3916 = vmatmul.f32.gmra.mxu0 %v2352
      %v3917 = vpop.f32.mrf.mxu0
      %v3918 = vadd.f32 %v3725, %v3917
      %3919 = vmatmul.f32.gmra.mxu0 %v2353
      %v3920 = vpop.f32.mrf.mxu0
      %3921 = vmatmul.f32.gmra.mxu0 %v2354
      %v3922 = vpop.f32.mrf.mxu0
      %v3923 = vadd.f32 %v3730, %v3922
      %3924 = vmatmul.f32.gmra.mxu0 %v2355
      %v3925 = vpop.f32.mrf.mxu0
      %v3926 = vadd.f32 %v3733, %v3925
      %3927 = vmatmul.f32.gmra.mxu0 %v2356
      %v3928 = vpop.f32.mrf.mxu0
      %v3929 = vadd.f32 %v3736, %v3928
      %3930 = vmatmul.f32.gmra.mxu0 %v2357
      %v3931 = vpop.f32.mrf.mxu0
      %3932 = vmatmul.f32.gmra.mxu0 %v2358
      %v3933 = vpop.f32.mrf.mxu0
      %v3934 = vadd.f32 %v3741, %v3933
      %3935 = vmatmul.f32.gmra.mxu0 %v2359
      %v3936 = vpop.f32.mrf.mxu0
      %v3937 = vadd.f32 %v3744, %v3936
      %3938 = vmatmul.f32.gmra.mxu0 %v2360
      %v3939 = vpop.f32.mrf.mxu0
      %v3940 = vadd.f32 %v3747, %v3939
      %3941 = vmatmul.f32.gmra.mxu0 %v2361
      %v3942 = vpop.f32.mrf.mxu0
      %3943 = vmatmul.f32.gmra.mxu0 %v2362
      %v3944 = vpop.f32.mrf.mxu0
      %v3945 = vadd.f32 %v3752, %v3944
      %3946 = vmatmul.f32.gmra.mxu0 %v2363
      %v3947 = vpop.f32.mrf.mxu0
      %v3948 = vadd.f32 %v3755, %v3947
      %3949 = vmatmul.f32.gmra.mxu0 %v2364
      %v3950 = vpop.f32.mrf.mxu0
      %v3951 = vadd.f32 %v3758, %v3950
      %3952 = vmatmul.f32.gmra.mxu0 %v2365
      %v3953 = vpop.f32.mrf.mxu0
      %3954 = vmatmul.f32.gmra.mxu0 %v2366
      %v3955 = vpop.f32.mrf.mxu0
      %v3956 = vadd.f32 %v3763, %v3955
      %3957 = vmatmul.f32.gmra.mxu0 %v2367
      %v3958 = vpop.f32.mrf.mxu0
      %v3959 = vadd.f32 %v3766, %v3958
      %3960 = vmatmul.f32.gmra.mxu0 %v2368
      %v3961 = vpop.f32.mrf.mxu0
      %v3962 = vadd.f32 %v3769, %v3961
      %3963 = vmatmul.f32.gmra.mxu0 %v2369
      %v3964 = vpop.f32.mrf.mxu0
      %3965 = vmatmul.f32.gmra.mxu0 %v2370
      %v3966 = vpop.f32.mrf.mxu0
      %v3967 = vadd.f32 %v3774, %v3966
      %3968 = vmatmul.f32.gmra.mxu0 %v2371
      %v3969 = vpop.f32.mrf.mxu0
      %v3970 = vadd.f32 %v3777, %v3969
      %3971 = vmatmul.f32.gmra.mxu0 %v2372
      %v3972 = vpop.f32.mrf.mxu0
      %v3973 = vadd.f32 %v3780, %v3972
      %3974 = vmatmul.f32.gmra.mxu0 %v2373
      %v3975 = vpop.f32.mrf.mxu0
      %3976 = vmatmul.f32.gmra.mxu0 %v2374
      %v3977 = vpop.f32.mrf.mxu0
      %v3978 = vadd.f32 %v3785, %v3977
      %3979 = vmatmul.f32.gmra.mxu0 %v2375
      %v3980 = vpop.f32.mrf.mxu0
      %v3981 = vadd.f32 %v3788, %v3980
      %3982 = vmatmul.f32.gmra.mxu0 %v2376
      %v3983 = vpop.f32.mrf.mxu0
      %v3984 = vadd.f32 %v3791, %v3983
      %3985 = vmatmul.f32.gmra.mxu0 %v2377
      %v3986 = vpop.f32.mrf.mxu0
      %3987 = vmatmul.f32.gmra.mxu0 %v2378
      %v3988 = vpop.f32.mrf.mxu0
      %v3989 = vadd.f32 %v3796, %v3988
      %3990 = vmatmul.f32.gmra.mxu0 %v2379
      %v3991 = vpop.f32.mrf.mxu0
      %v3992 = vadd.f32 %v3799, %v3991
      %3993 = vmatmul.f32.gmra.mxu0 %v2380
      %v3994 = vpop.f32.mrf.mxu0
      %v3995 = vadd.f32 %v3802, %v3994
      %3996 = vmatmul.f32.gmra.mxu0 %v2381
      %v3997 = vpop.f32.mrf.mxu0
      %3998 = vmatmul.f32.gmra.mxu0 %v2382
      %v3999 = vpop.f32.mrf.mxu0
      %v4000 = vadd.f32 %v3807, %v3999
      %4001 = vmatmul.f32.gmra.mxu0 %v2383
      %v4002 = vpop.f32.mrf.mxu0
      %v4003 = vadd.f32 %v3810, %v4002
      %4004 = vmatmul.f32.gmra.mxu0 %v2384
      %v4005 = vpop.f32.mrf.mxu0
      %v4006 = vadd.f32 %v3813, %v4005
      %4007 = vmatmul.f32.gmra.mxu0 %v2385
      %v4008 = vpop.f32.mrf.mxu0
      %4009 = vmatmul.f32.gmra.mxu0 %v2386
      %v4010 = vpop.f32.mrf.mxu0
      %v4011 = vadd.f32 %v3818, %v4010
      %4012 = vmatmul.f32.gmra.mxu0 %v2387
      %v4013 = vpop.f32.mrf.mxu0
      %v4014 = vadd.f32 %v3821, %v4013
      %4015 = vmatmul.f32.gmra.mxu0 %v2388
      %v4016 = vpop.f32.mrf.mxu0
      %v4017 = vadd.f32 %v3824, %v4016
      %4018 = vmatmul.f32.gmra.mxu0 %v2389
      %v4019 = vpop.f32.mrf.mxu0
      %4020 = vmatmul.f32.gmra.mxu0 %v2390
      %v4021 = vpop.f32.mrf.mxu0
      %v4022 = vadd.f32 %v3829, %v4021
      %4023 = vmatmul.f32.gmra.mxu0 %v2391
      %v4024 = vpop.f32.mrf.mxu0
      %v4025 = vadd.f32 %v3832, %v4024
      %4026 = vmatmul.f32.gmra.mxu0 %v2392
      %v4027 = vpop.f32.mrf.mxu0
      %v4028 = vadd.f32 %v3835, %v4027
      %4029 = vmatmul.f32.gmra.mxu0 %v2393
      %v4030 = vpop.f32.mrf.mxu0
      %4031 = vmatmul.f32.gmra.mxu0 %v2394
      %v4032 = vpop.f32.mrf.mxu0
      %v4033 = vadd.f32 %v3840, %v4032
      %4034 = vmatmul.f32.gmra.mxu0 %v2395
      %v4035 = vpop.f32.mrf.mxu0
      %v4036 = vadd.f32 %v3843, %v4035
      %4037 = vmatmul.f32.gmra.mxu0 %v2396
      %v4038 = vpop.f32.mrf.mxu0
      %v4039 = vadd.f32 %v3846, %v4038
      %4040 = vdwg.mxu0
      %4041 = vmatpush.msra.mxu0 %v2544
      %4042 = vmatpush.msra.mxu0 %v2541
      %4043 = vmatpush.msra.mxu0 %v2538
      %4044 = vmatpush.msra.mxu0 %v2535
      %4045 = vmatpush.msra.mxu0 %v2532
      %4046 = vmatpush.msra.mxu0 %v2529
      %4047 = vmatpush.msra.mxu0 %v2526
      %4048 = vmatpush.msra.mxu0 %v2523
      %4049 = vmatpush.msra.mxu0 %v2520
      %4050 = vmatpush.msra.mxu0 %v2517
      %4051 = vmatpush.msra.mxu0 %v2514
      %4052 = vmatpush.msra.mxu0 %v2511
      %4053 = vmatpush.msra.mxu0 %v2508
      %4054 = vmatpush.msra.mxu0 %v2505
      %4055 = vmatpush.msra.mxu0 %v2502
      %4056 = vmatpush.msra.mxu0 %v2499
      %4057 = vmatmul.f32.gmra.mxu0 %v2337
      %v4058 = vpop.f32.mrf.mxu0
      %4059 = vmatmul.f32.gmra.mxu0 %v2338
      %v4060 = vpop.f32.mrf.mxu0
      %v4061 = vadd.f32 %v3868, %v4060
      %4062 = vmatmul.f32.gmra.mxu0 %v2339
      %v4063 = vpop.f32.mrf.mxu0
      %v4064 = vadd.f32 %v3871, %v4063
      %4065 = vmatmul.f32.gmra.mxu0 %v2340
      %v4066 = vpop.f32.mrf.mxu0
      %v4067 = vadd.f32 %v3874, %v4066
      %4068 = vmatmul.f32.gmra.mxu0 %v2341
      %v4069 = vpop.f32.mrf.mxu0
      %4070 = vmatmul.f32.gmra.mxu0 %v2342
      %v4071 = vpop.f32.mrf.mxu0
      %v4072 = vadd.f32 %v3879, %v4071
      %4073 = vmatmul.f32.gmra.mxu0 %v2343
      %v4074 = vpop.f32.mrf.mxu0
      %v4075 = vadd.f32 %v3882, %v4074
      %4076 = vmatmul.f32.gmra.mxu0 %v2344
      %v4077 = vpop.f32.mrf.mxu0
      %v4078 = vadd.f32 %v3885, %v4077
      %4079 = vmatmul.f32.gmra.mxu0 %v2345
      %v4080 = vpop.f32.mrf.mxu0
      %4081 = vmatmul.f32.gmra.mxu0 %v2346
      %v4082 = vpop.f32.mrf.mxu0
      %v4083 = vadd.f32 %v3890, %v4082
      %4084 = vmatmul.f32.gmra.mxu0 %v2347
      %v4085 = vpop.f32.mrf.mxu0
      %v4086 = vadd.f32 %v3893, %v4085
      %4087 = vmatmul.f32.gmra.mxu0 %v2348
      %v4088 = vpop.f32.mrf.mxu0
      %v4089 = vadd.f32 %v3896, %v4088
      %4090 = vmatmul.f32.gmra.mxu0 %v2349
      %v4091 = vpop.f32.mrf.mxu0
      %4092 = vmatmul.f32.gmra.mxu0 %v2350
      %v4093 = vpop.f32.mrf.mxu0
      %v4094 = vadd.f32 %v3901, %v4093
      %4095 = vmatmul.f32.gmra.mxu0 %v2351
      %v4096 = vpop.f32.mrf.mxu0
      %v4097 = vadd.f32 %v3904, %v4096
      %4098 = vmatmul.f32.gmra.mxu0 %v2352
      %v4099 = vpop.f32.mrf.mxu0
      %v4100 = vadd.f32 %v3907, %v4099
      %4101 = vmatmul.f32.gmra.mxu0 %v2353
      %v4102 = vpop.f32.mrf.mxu0
      %4103 = vmatmul.f32.gmra.mxu0 %v2354
      %v4104 = vpop.f32.mrf.mxu0
      %v4105 = vadd.f32 %v3912, %v4104
      %4106 = vmatmul.f32.gmra.mxu0 %v2355
      %v4107 = vpop.f32.mrf.mxu0
      %v4108 = vadd.f32 %v3915, %v4107
      %4109 = vmatmul.f32.gmra.mxu0 %v2356
      %v4110 = vpop.f32.mrf.mxu0
      %v4111 = vadd.f32 %v3918, %v4110
      %4112 = vmatmul.f32.gmra.mxu0 %v2357
      %v4113 = vpop.f32.mrf.mxu0
      %4114 = vmatmul.f32.gmra.mxu0 %v2358
      %v4115 = vpop.f32.mrf.mxu0
      %v4116 = vadd.f32 %v3923, %v4115
      %4117 = vmatmul.f32.gmra.mxu0 %v2359
      %v4118 = vpop.f32.mrf.mxu0
      %v4119 = vadd.f32 %v3926, %v4118
      %4120 = vmatmul.f32.gmra.mxu0 %v2360
      %v4121 = vpop.f32.mrf.mxu0
      %v4122 = vadd.f32 %v3929, %v4121
      %4123 = vmatmul.f32.gmra.mxu0 %v2361
      %v4124 = vpop.f32.mrf.mxu0
      %4125 = vmatmul.f32.gmra.mxu0 %v2362
      %v4126 = vpop.f32.mrf.mxu0
      %v4127 = vadd.f32 %v3934, %v4126
      %4128 = vmatmul.f32.gmra.mxu0 %v2363
      %v4129 = vpop.f32.mrf.mxu0
      %v4130 = vadd.f32 %v3937, %v4129
      %4131 = vmatmul.f32.gmra.mxu0 %v2364
      %v4132 = vpop.f32.mrf.mxu0
      %v4133 = vadd.f32 %v3940, %v4132
      %4134 = vmatmul.f32.gmra.mxu0 %v2365
      %v4135 = vpop.f32.mrf.mxu0
      %4136 = vmatmul.f32.gmra.mxu0 %v2366
      %v4137 = vpop.f32.mrf.mxu0
      %v4138 = vadd.f32 %v3945, %v4137
      %4139 = vmatmul.f32.gmra.mxu0 %v2367
      %v4140 = vpop.f32.mrf.mxu0
      %v4141 = vadd.f32 %v3948, %v4140
      %4142 = vmatmul.f32.gmra.mxu0 %v2368
      %v4143 = vpop.f32.mrf.mxu0
      %v4144 = vadd.f32 %v3951, %v4143
      %4145 = vmatmul.f32.gmra.mxu0 %v2369
      %v4146 = vpop.f32.mrf.mxu0
      %4147 = vmatmul.f32.gmra.mxu0 %v2370
      %v4148 = vpop.f32.mrf.mxu0
      %v4149 = vadd.f32 %v3956, %v4148
      %4150 = vmatmul.f32.gmra.mxu0 %v2371
      %v4151 = vpop.f32.mrf.mxu0
      %v4152 = vadd.f32 %v3959, %v4151
      %4153 = vmatmul.f32.gmra.mxu0 %v2372
      %v4154 = vpop.f32.mrf.mxu0
      %v4155 = vadd.f32 %v3962, %v4154
      %4156 = vmatmul.f32.gmra.mxu0 %v2373
      %v4157 = vpop.f32.mrf.mxu0
      %4158 = vmatmul.f32.gmra.mxu0 %v2374
      %v4159 = vpop.f32.mrf.mxu0
      %v4160 = vadd.f32 %v3967, %v4159
      %4161 = vmatmul.f32.gmra.mxu0 %v2375
      %v4162 = vpop.f32.mrf.mxu0
      %v4163 = vadd.f32 %v3970, %v4162
      %4164 = vmatmul.f32.gmra.mxu0 %v2376
      %v4165 = vpop.f32.mrf.mxu0
      %v4166 = vadd.f32 %v3973, %v4165
      %4167 = vmatmul.f32.gmra.mxu0 %v2377
      %v4168 = vpop.f32.mrf.mxu0
      %4169 = vmatmul.f32.gmra.mxu0 %v2378
      %v4170 = vpop.f32.mrf.mxu0
      %v4171 = vadd.f32 %v3978, %v4170
      %4172 = vmatmul.f32.gmra.mxu0 %v2379
      %v4173 = vpop.f32.mrf.mxu0
      %v4174 = vadd.f32 %v3981, %v4173
      %4175 = vmatmul.f32.gmra.mxu0 %v2380
      %v4176 = vpop.f32.mrf.mxu0
      %v4177 = vadd.f32 %v3984, %v4176
      %4178 = vmatmul.f32.gmra.mxu0 %v2381
      %v4179 = vpop.f32.mrf.mxu0
      %4180 = vmatmul.f32.gmra.mxu0 %v2382
      %v4181 = vpop.f32.mrf.mxu0
      %v4182 = vadd.f32 %v3989, %v4181
      %4183 = vmatmul.f32.gmra.mxu0 %v2383
      %v4184 = vpop.f32.mrf.mxu0
      %v4185 = vadd.f32 %v3992, %v4184
      %4186 = vmatmul.f32.gmra.mxu0 %v2384
      %v4187 = vpop.f32.mrf.mxu0
      %v4188 = vadd.f32 %v3995, %v4187
      %4189 = vmatmul.f32.gmra.mxu0 %v2385
      %v4190 = vpop.f32.mrf.mxu0
      %4191 = vmatmul.f32.gmra.mxu0 %v2386
      %v4192 = vpop.f32.mrf.mxu0
      %v4193 = vadd.f32 %v4000, %v4192
      %4194 = vmatmul.f32.gmra.mxu0 %v2387
      %v4195 = vpop.f32.mrf.mxu0
      %v4196 = vadd.f32 %v4003, %v4195
      %4197 = vmatmul.f32.gmra.mxu0 %v2388
      %v4198 = vpop.f32.mrf.mxu0
      %v4199 = vadd.f32 %v4006, %v4198
      %4200 = vmatmul.f32.gmra.mxu0 %v2389
      %v4201 = vpop.f32.mrf.mxu0
      %4202 = vmatmul.f32.gmra.mxu0 %v2390
      %v4203 = vpop.f32.mrf.mxu0
      %v4204 = vadd.f32 %v4011, %v4203
      %4205 = vmatmul.f32.gmra.mxu0 %v2391
      %v4206 = vpop.f32.mrf.mxu0
      %v4207 = vadd.f32 %v4014, %v4206
      %4208 = vmatmul.f32.gmra.mxu0 %v2392
      %v4209 = vpop.f32.mrf.mxu0
      %v4210 = vadd.f32 %v4017, %v4209
      %4211 = vmatmul.f32.gmra.mxu0 %v2393
      %v4212 = vpop.f32.mrf.mxu0
      %4213 = vmatmul.f32.gmra.mxu0 %v2394
      %v4214 = vpop.f32.mrf.mxu0
      %v4215 = vadd.f32 %v4022, %v4214
      %4216 = vmatmul.f32.gmra.mxu0 %v2395
      %v4217 = vpop.f32.mrf.mxu0
      %v4218 = vadd.f32 %v4025, %v4217
      %4219 = vmatmul.f32.gmra.mxu0 %v2396
      %v4220 = vpop.f32.mrf.mxu0
      %v4221 = vadd.f32 %v4028, %v4220
      %4222 = vmatmul.f32.gmra.mxu0 %v2397
      %v4223 = vpop.f32.mrf.mxu0
      %4224 = vmatmul.f32.gmra.mxu0 %v2398
      %v4225 = vpop.f32.mrf.mxu0
      %v4226 = vadd.f32 %v4033, %v4225
      %4227 = vmatmul.f32.gmra.mxu0 %v2399
      %v4228 = vpop.f32.mrf.mxu0
      %v4229 = vadd.f32 %v4036, %v4228
      %4230 = vmatmul.f32.gmra.mxu0 %v2400
      %v4231 = vpop.f32.mrf.mxu0
      %v4232 = vadd.f32 %v4039, %v4231
      %4233 = vdwg.mxu0
      %v4266 = vrot.slane %v3498, 1
      %v4267 = vrot.slane %v3501, 1
      %v4268 = vsel %vm1768, %v4266, %v4267
      %v4269 = vrot.slane %v3508, 1
      %v4270 = vrot.slane %v3511, 1
      %v4271 = vsel %vm1768, %v4269, %v4270
      %v4272 = vrot.slane %v3518, 1
      %v4273 = vrot.slane %v3521, 1
      %v4274 = vsel %vm1768, %v4272, %v4273
      %v4275 = vrot.slane %v3528, 1
      %v4276 = vrot.slane %v3531, 1
      %v4277 = vsel %vm1768, %v4275, %v4276
      %v4278 = vrot.slane %v3538, 1
      %v4279 = vrot.slane %v3541, 1
      %v4280 = vsel %vm1768, %v4278, %v4279
      %v4281 = vrot.slane %v3548, 1
      %v4282 = vrot.slane %v3551, 1
      %v4283 = vsel %vm1768, %v4281, %v4282
      %v4284 = vrot.slane %v3558, 1
      %v4285 = vrot.slane %v3561, 1
      %v4286 = vsel %vm1768, %v4284, %v4285
      %v4287 = vrot.slane %v3568, 1
      %v4288 = vrot.slane %v3571, 1
      %v4289 = vsel %vm1768, %v4287, %v4288
      %v4290 = vrot.slane %v3578, 1
      %v4291 = vrot.slane %v3581, 1
      %v4292 = vsel %vm1768, %v4290, %v4291
      %v4293 = vrot.slane %v3588, 1
      %v4294 = vrot.slane %v3591, 1
      %v4295 = vsel %vm1768, %v4293, %v4294
      %v4296 = vrot.slane %v3598, 1
      %v4297 = vrot.slane %v3601, 1
      %v4298 = vsel %vm1768, %v4296, %v4297
      %v4299 = vrot.slane %v3608, 1
      %v4300 = vrot.slane %v3611, 1
      %v4301 = vsel %vm1768, %v4299, %v4300
      %v4302 = vrot.slane %v3618, 1
      %v4303 = vrot.slane %v3621, 1
      %v4304 = vsel %vm1768, %v4302, %v4303
      %v4305 = vrot.slane %v3628, 1
      %v4306 = vrot.slane %v3631, 1
      %v4307 = vsel %vm1768, %v4305, %v4306
      %v4308 = vrot.slane %v3638, 1
      %v4309 = vrot.slane %v3641, 1
      %v4310 = vsel %vm1768, %v4308, %v4309
      %v4311 = vrot.slane %v3648, 1
      %v4312 = vrot.slane %v3651, 1
      %v4313 = vsel %vm1768, %v4311, %v4312
      %v4362 = vadd.f32 %v2949, %v4266
      %v4363 = vadd.f32 %v2952, %v4268
      %v4364 = vadd.f32 %v2955, %v4267
      %v4365 = vadd.f32 %v2960, %v4269
      %v4366 = vadd.f32 %v2963, %v4271
      %v4367 = vadd.f32 %v2966, %v4270
      %v4368 = vadd.f32 %v2971, %v4272
      %v4369 = vadd.f32 %v2974, %v4274
      %v4370 = vadd.f32 %v2977, %v4273
      %v4371 = vadd.f32 %v2982, %v4275
      %v4372 = vadd.f32 %v2985, %v4277
      %v4373 = vadd.f32 %v2988, %v4276
      %v4374 = vadd.f32 %v2993, %v4278
      %v4375 = vadd.f32 %v2996, %v4280
      %v4376 = vadd.f32 %v2999, %v4279
      %v4377 = vadd.f32 %v3004, %v4281
      %v4378 = vadd.f32 %v3007, %v4283
      %v4379 = vadd.f32 %v3010, %v4282
      %v4380 = vadd.f32 %v3015, %v4284
      %v4381 = vadd.f32 %v3018, %v4286
      %v4382 = vadd.f32 %v3021, %v4285
      %v4383 = vadd.f32 %v3026, %v4287
      %v4384 = vadd.f32 %v3029, %v4289
      %v4385 = vadd.f32 %v3032, %v4288
      %v4386 = vadd.f32 %v3037, %v4290
      %v4387 = vadd.f32 %v3040, %v4292
      %v4388 = vadd.f32 %v3043, %v4291
      %v4389 = vadd.f32 %v3048, %v4293
      %v4390 = vadd.f32 %v3051, %v4295
      %v4391 = vadd.f32 %v3054, %v4294
      %v4392 = vadd.f32 %v3059, %v4296
      %v4393 = vadd.f32 %v3062, %v4298
      %v4394 = vadd.f32 %v3065, %v4297
      %v4395 = vadd.f32 %v3070, %v4299
      %v4396 = vadd.f32 %v3073, %v4301
      %v4397 = vadd.f32 %v3076, %v4300
      %v4398 = vadd.f32 %v3081, %v4302
      %v4399 = vadd.f32 %v3084, %v4304
      %v4400 = vadd.f32 %v3087, %v4303
      %v4401 = vadd.f32 %v3092, %v4305
      %v4402 = vadd.f32 %v3095, %v4307
      %v4403 = vadd.f32 %v3098, %v4306
      %v4404 = vadd.f32 %v3103, %v4308
      %v4405 = vadd.f32 %v3106, %v4310
      %v4406 = vadd.f32 %v3109, %v4309
      %v4407 = vadd.f32 %v3114, %v4311
      %v4408 = vadd.f32 %v3117, %v4313
      %v4409 = vadd.f32 %v3120, %v4312
      %v4458 = vrot.slane %v4061, 2
      %v4459 = vrot.slane %v4064, 2
      %v4460 = vsel %vm1961, %v4458, %v4459
      %v4461 = vrot.slane %v4067, 2
      %v4462 = vsel %vm1961, %v4459, %v4461
      %v4463 = vrot.slane %v4072, 2
      %v4464 = vrot.slane %v4075, 2
      %v4465 = vsel %vm1961, %v4463, %v4464
      %v4466 = vrot.slane %v4078, 2
      %v4467 = vsel %vm1961, %v4464, %v4466
      %v4468 = vrot.slane %v4083, 2
      %v4469 = vrot.slane %v4086, 2
      %v4470 = vsel %vm1961, %v4468, %v4469
      %v4471 = vrot.slane %v4089, 2
      %v4472 = vsel %vm1961, %v4469, %v4471
      %v4473 = vrot.slane %v4094, 2
      %v4474 = vrot.slane %v4097, 2
      %v4475 = vsel %vm1961, %v4473, %v4474
      %v4476 = vrot.slane %v4100, 2
      %v4477 = vsel %vm1961, %v4474, %v4476
      %v4478 = vrot.slane %v4105, 2
      %v4479 = vrot.slane %v4108, 2
      %v4480 = vsel %vm1961, %v4478, %v4479
      %v4481 = vrot.slane %v4111, 2
      %v4482 = vsel %vm1961, %v4479, %v4481
      %v4483 = vrot.slane %v4116, 2
      %v4484 = vrot.slane %v4119, 2
      %v4485 = vsel %vm1961, %v4483, %v4484
      %v4486 = vrot.slane %v4122, 2
      %v4487 = vsel %vm1961, %v4484, %v4486
      %v4488 = vrot.slane %v4127, 2
      %v4489 = vrot.slane %v4130, 2
      %v4490 = vsel %vm1961, %v4488, %v4489
      %v4491 = vrot.slane %v4133, 2
      %v4492 = vsel %vm1961, %v4489, %v4491
      %v4493 = vrot.slane %v4138, 2
      %v4494 = vrot.slane %v4141, 2
      %v4495 = vsel %vm1961, %v4493, %v4494
      %v4496 = vrot.slane %v4144, 2
      %v4497 = vsel %vm1961, %v4494, %v4496
      %v4498 = vrot.slane %v4149, 2
      %v4499 = vrot.slane %v4152, 2
      %v4500 = vsel %vm1961, %v4498, %v4499
      %v4501 = vrot.slane %v4155, 2
      %v4502 = vsel %vm1961, %v4499, %v4501
      %v4503 = vrot.slane %v4160, 2
      %v4504 = vrot.slane %v4163, 2
      %v4505 = vsel %vm1961, %v4503, %v4504
      %v4506 = vrot.slane %v4166, 2
      %v4507 = vsel %vm1961, %v4504, %v4506
      %v4508 = vrot.slane %v4171, 2
      %v4509 = vrot.slane %v4174, 2
      %v4510 = vsel %vm1961, %v4508, %v4509
      %v4511 = vrot.slane %v4177, 2
      %v4512 = vsel %vm1961, %v4509, %v4511
      %v4513 = vrot.slane %v4182, 2
      %v4514 = vrot.slane %v4185, 2
      %v4515 = vsel %vm1961, %v4513, %v4514
      %v4516 = vrot.slane %v4188, 2
      %v4517 = vsel %vm1961, %v4514, %v4516
      %v4518 = vrot.slane %v4193, 2
      %v4519 = vrot.slane %v4196, 2
      %v4520 = vsel %vm1961, %v4518, %v4519
      %v4521 = vrot.slane %v4199, 2
      %v4522 = vsel %vm1961, %v4519, %v4521
      %v4523 = vrot.slane %v4204, 2
      %v4524 = vrot.slane %v4207, 2
      %v4525 = vsel %vm1961, %v4523, %v4524
      %v4526 = vrot.slane %v4210, 2
      %v4527 = vsel %vm1961, %v4524, %v4526
      %v4528 = vrot.slane %v4215, 2
      %v4529 = vrot.slane %v4218, 2
      %v4530 = vsel %vm1961, %v4528, %v4529
      %v4531 = vrot.slane %v4221, 2
      %v4532 = vsel %vm1961, %v4529, %v4531
      %v4533 = vrot.slane %v4226, 2
      %v4534 = vrot.slane %v4229, 2
      %v4535 = vsel %vm1961, %v4533, %v4534
      %v4536 = vrot.slane %v4232, 2
      %v4537 = vsel %vm1961, %v4534, %v4536
      %v4586 = vadd.f32 %v4362, %v4458
      %v4587 = vadd.f32 %v4363, %v4460
      %v4588 = vadd.f32 %v4364, %v4462
      %v4589 = vadd.f32 %v4365, %v4463
      %v4590 = vadd.f32 %v4366, %v4465
      %v4591 = vadd.f32 %v4367, %v4467
      %v4592 = vadd.f32 %v4368, %v4468
      %v4593 = vadd.f32 %v4369, %v4470
      %v4594 = vadd.f32 %v4370, %v4472
      %v4595 = vadd.f32 %v4371, %v4473
      %v4596 = vadd.f32 %v4372, %v4475
      %v4597 = vadd.f32 %v4373, %v4477
      %v4598 = vadd.f32 %v4374, %v4478
      %v4599 = vadd.f32 %v4375, %v4480
      %v4600 = vadd.f32 %v4376, %v4482
      %v4601 = vadd.f32 %v4377, %v4483
      %v4602 = vadd.f32 %v4378, %v4485
      %v4603 = vadd.f32 %v4379, %v4487
      %v4604 = vadd.f32 %v4380, %v4488
      %v4605 = vadd.f32 %v4381, %v4490
      %v4606 = vadd.f32 %v4382, %v4492
      %v4607 = vadd.f32 %v4383, %v4493
      %v4608 = vadd.f32 %v4384, %v4495
      %v4609 = vadd.f32 %v4385, %v4497
      %v4610 = vadd.f32 %v4386, %v4498
      %v4611 = vadd.f32 %v4387, %v4500
      %v4612 = vadd.f32 %v4388, %v4502
      %v4613 = vadd.f32 %v4389, %v4503
      %v4614 = vadd.f32 %v4390, %v4505
      %v4615 = vadd.f32 %v4391, %v4507
      %v4616 = vadd.f32 %v4392, %v4508
      %v4617 = vadd.f32 %v4393, %v4510
      %v4618 = vadd.f32 %v4394, %v4512
      %v4619 = vadd.f32 %v4395, %v4513
      %v4620 = vadd.f32 %v4396, %v4515
      %v4621 = vadd.f32 %v4397, %v4517
      %v4622 = vadd.f32 %v4398, %v4518
      %v4623 = vadd.f32 %v4399, %v4520
      %v4624 = vadd.f32 %v4400, %v4522
      %v4625 = vadd.f32 %v4401, %v4523
      %v4626 = vadd.f32 %v4402, %v4525
      %v4627 = vadd.f32 %v4403, %v4527
      %v4628 = vadd.f32 %v4404, %v4528
      %v4629 = vadd.f32 %v4405, %v4530
      %v4630 = vadd.f32 %v4406, %v4532
      %v4631 = vadd.f32 %v4407, %v4533
      %v4632 = vadd.f32 %v4408, %v4535
      %v4633 = vadd.f32 %v4409, %v4537
      %v4634 = vperm.slane %v199, 0
      %v4635 = vadd.f32 %v4586, %v4634
      %v4636 = vadd.f32 %v4587, %v4634
      %v4637 = vadd.f32 %v4588, %v4634
      %v4638 = vadd.f32 %v4589, %v4634
      %v4639 = vadd.f32 %v4590, %v4634
      %v4640 = vadd.f32 %v4591, %v4634
      %v4641 = vadd.f32 %v4592, %v4634
      %v4642 = vadd.f32 %v4593, %v4634
      %v4643 = vadd.f32 %v4594, %v4634
      %v4644 = vadd.f32 %v4595, %v4634
      %v4645 = vadd.f32 %v4596, %v4634
      %v4646 = vadd.f32 %v4597, %v4634
      %v4647 = vadd.f32 %v4598, %v4634
      %v4648 = vadd.f32 %v4599, %v4634
      %v4649 = vadd.f32 %v4600, %v4634
      %v4650 = vadd.f32 %v4601, %v4634
      %v4651 = vadd.f32 %v4602, %v4634
      %v4652 = vadd.f32 %v4603, %v4634
      %v4653 = vadd.f32 %v4604, %v4634
      %v4654 = vadd.f32 %v4605, %v4634
      %v4655 = vadd.f32 %v4606, %v4634
      %v4656 = vadd.f32 %v4607, %v4634
      %v4657 = vadd.f32 %v4608, %v4634
      %v4658 = vadd.f32 %v4609, %v4634
      %v4659 = vadd.f32 %v4610, %v4634
      %v4660 = vadd.f32 %v4611, %v4634
      %v4661 = vadd.f32 %v4612, %v4634
      %v4662 = vadd.f32 %v4613, %v4634
      %v4663 = vadd.f32 %v4614, %v4634
      %v4664 = vadd.f32 %v4615, %v4634
      %v4665 = vadd.f32 %v4616, %v4634
      %v4666 = vadd.f32 %v4617, %v4634
      %v4667 = vadd.f32 %v4618, %v4634
      %v4668 = vadd.f32 %v4619, %v4634
      %v4669 = vadd.f32 %v4620, %v4634
      %v4670 = vadd.f32 %v4621, %v4634
      %v4671 = vadd.f32 %v4622, %v4634
      %v4672 = vadd.f32 %v4623, %v4634
      %v4673 = vadd.f32 %v4624, %v4634
      %v4674 = vadd.f32 %v4625, %v4634
      %v4675 = vadd.f32 %v4626, %v4634
      %v4676 = vadd.f32 %v4627, %v4634
      %v4677 = vadd.f32 %v4628, %v4634
      %v4678 = vadd.f32 %v4629, %v4634
      %v4679 = vadd.f32 %v4630, %v4634
      %v4680 = vadd.f32 %v4631, %v4634
      %v4681 = vadd.f32 %v4632, %v4634
      %v4682 = vadd.f32 %v4633, %v4634
      %v4715 = vrot.slane %v200, 1
      %v4716 = vrot.slane %v201, 1
      %v4717 = vsel %vm1768, %v4715, %v4716
      %v4718 = vrot.slane %v202, 1
      %v4719 = vrot.slane %v203, 1
      %v4720 = vsel %vm1768, %v4718, %v4719
      %v4721 = vrot.slane %v204, 1
      %v4722 = vrot.slane %v205, 1
      %v4723 = vsel %vm1768, %v4721, %v4722
      %v4724 = vrot.slane %v206, 1
      %v4725 = vrot.slane %v207, 1
      %v4726 = vsel %vm1768, %v4724, %v4725
      %v4727 = vrot.slane %v208, 1
      %v4728 = vrot.slane %v209, 1
      %v4729 = vsel %vm1768, %v4727, %v4728
      %v4730 = vrot.slane %v210, 1
      %v4731 = vrot.slane %v211, 1
      %v4732 = vsel %vm1768, %v4730, %v4731
      %v4733 = vrot.slane %v212, 1
      %v4734 = vrot.slane %v213, 1
      %v4735 = vsel %vm1768, %v4733, %v4734
      %v4736 = vrot.slane %v214, 1
      %v4737 = vrot.slane %v215, 1
      %v4738 = vsel %vm1768, %v4736, %v4737
      %v4739 = vrot.slane %v216, 1
      %v4740 = vrot.slane %v217, 1
      %v4741 = vsel %vm1768, %v4739, %v4740
      %v4742 = vrot.slane %v218, 1
      %v4743 = vrot.slane %v219, 1
      %v4744 = vsel %vm1768, %v4742, %v4743
      %v4745 = vrot.slane %v220, 1
      %v4746 = vrot.slane %v221, 1
      %v4747 = vsel %vm1768, %v4745, %v4746
      %v4748 = vrot.slane %v222, 1
      %v4749 = vrot.slane %v223, 1
      %v4750 = vsel %vm1768, %v4748, %v4749
      %v4751 = vrot.slane %v224, 1
      %v4752 = vrot.slane %v225, 1
      %v4753 = vsel %vm1768, %v4751, %v4752
      %v4754 = vrot.slane %v226, 1
      %v4755 = vrot.slane %v227, 1
      %v4756 = vsel %vm1768, %v4754, %v4755
      %v4757 = vrot.slane %v228, 1
      %v4758 = vrot.slane %v229, 1
      %v4759 = vsel %vm1768, %v4757, %v4758
      %v4760 = vrot.slane %v230, 1
      %v4761 = vrot.slane %v231, 1
      %v4762 = vsel %vm1768, %v4760, %v4761
      %v4811 = vadd.f32 %v4635, %v4715
      %v4812 = vadd.f32 %v4636, %v4717
      %v4813 = vadd.f32 %v4637, %v4716
      %v4814 = vadd.f32 %v4638, %v4718
      %v4815 = vadd.f32 %v4639, %v4720
      %v4816 = vadd.f32 %v4640, %v4719
      %v4817 = vadd.f32 %v4641, %v4721
      %v4818 = vadd.f32 %v4642, %v4723
      %v4819 = vadd.f32 %v4643, %v4722
      %v4820 = vadd.f32 %v4644, %v4724
      %v4821 = vadd.f32 %v4645, %v4726
      %v4822 = vadd.f32 %v4646, %v4725
      %v4823 = vadd.f32 %v4647, %v4727
      %v4824 = vadd.f32 %v4648, %v4729
      %v4825 = vadd.f32 %v4649, %v4728
      %v4826 = vadd.f32 %v4650, %v4730
      %v4827 = vadd.f32 %v4651, %v4732
      %v4828 = vadd.f32 %v4652, %v4731
      %v4829 = vadd.f32 %v4653, %v4733
      %v4830 = vadd.f32 %v4654, %v4735
      %v4831 = vadd.f32 %v4655, %v4734
      %v4832 = vadd.f32 %v4656, %v4736
      %v4833 = vadd.f32 %v4657, %v4738
      %v4834 = vadd.f32 %v4658, %v4737
      %v4835 = vadd.f32 %v4659, %v4739
      %v4836 = vadd.f32 %v4660, %v4741
      %v4837 = vadd.f32 %v4661, %v4740
      %v4838 = vadd.f32 %v4662, %v4742
      %v4839 = vadd.f32 %v4663, %v4744
      %v4840 = vadd.f32 %v4664, %v4743
      %v4841 = vadd.f32 %v4665, %v4745
      %v4842 = vadd.f32 %v4666, %v4747
      %v4843 = vadd.f32 %v4667, %v4746
      %v4844 = vadd.f32 %v4668, %v4748
      %v4845 = vadd.f32 %v4669, %v4750
      %v4846 = vadd.f32 %v4670, %v4749
      %v4847 = vadd.f32 %v4671, %v4751
      %v4848 = vadd.f32 %v4672, %v4753
      %v4849 = vadd.f32 %v4673, %v4752
      %v4850 = vadd.f32 %v4674, %v4754
      %v4851 = vadd.f32 %v4675, %v4756
      %v4852 = vadd.f32 %v4676, %v4755
      %v4853 = vadd.f32 %v4677, %v4757
      %v4854 = vadd.f32 %v4678, %v4759
      %v4855 = vadd.f32 %v4679, %v4758
      %v4856 = vadd.f32 %v4680, %v4760
      %v4857 = vadd.f32 %v4681, %v4762
      %v4858 = vadd.f32 %v4682, %v4761
      %v4859 = vmax.f32 %v4811, 0.0
      %v4860 = vmax.f32 %v4812, 0.0
      %v4861 = vmax.f32 %v4813, 0.0
      %v4862 = vmax.f32 %v4814, 0.0
      %v4863 = vmax.f32 %v4815, 0.0
      %v4864 = vmax.f32 %v4816, 0.0
      %v4865 = vmax.f32 %v4817, 0.0
      %v4866 = vmax.f32 %v4818, 0.0
      %v4867 = vmax.f32 %v4819, 0.0
      %v4868 = vmax.f32 %v4820, 0.0
      %v4869 = vmax.f32 %v4821, 0.0
      %v4870 = vmax.f32 %v4822, 0.0
      %v4871 = vmax.f32 %v4823, 0.0
      %v4872 = vmax.f32 %v4824, 0.0
      %v4873 = vmax.f32 %v4825, 0.0
      %v4874 = vmax.f32 %v4826, 0.0
      %v4875 = vmax.f32 %v4827, 0.0
      %v4876 = vmax.f32 %v4828, 0.0
      %v4877 = vmax.f32 %v4829, 0.0
      %v4878 = vmax.f32 %v4830, 0.0
      %v4879 = vmax.f32 %v4831, 0.0
      %v4880 = vmax.f32 %v4832, 0.0
      %v4881 = vmax.f32 %v4833, 0.0
      %v4882 = vmax.f32 %v4834, 0.0
      %v4883 = vmax.f32 %v4835, 0.0
      %v4884 = vmax.f32 %v4836, 0.0
      %v4885 = vmax.f32 %v4837, 0.0
      %v4886 = vmax.f32 %v4838, 0.0
      %v4887 = vmax.f32 %v4839, 0.0
      %v4888 = vmax.f32 %v4840, 0.0
      %v4889 = vmax.f32 %v4841, 0.0
      %v4890 = vmax.f32 %v4842, 0.0
      %v4891 = vmax.f32 %v4843, 0.0
      %v4892 = vmax.f32 %v4844, 0.0
      %v4893 = vmax.f32 %v4845, 0.0
      %v4894 = vmax.f32 %v4846, 0.0
      %v4895 = vmax.f32 %v4847, 0.0
      %v4896 = vmax.f32 %v4848, 0.0
      %v4897 = vmax.f32 %v4849, 0.0
      %v4898 = vmax.f32 %v4850, 0.0
      %v4899 = vmax.f32 %v4851, 0.0
      %v4900 = vmax.f32 %v4852, 0.0
      %v4901 = vmax.f32 %v4853, 0.0
      %v4902 = vmax.f32 %v4854, 0.0
      %v4903 = vmax.f32 %v4855, 0.0
      %v4904 = vmax.f32 %v4856, 0.0
      %v4905 = vmax.f32 %v4857, 0.0
      %v4906 = vmax.f32 %v4858, 0.0
      %vm4907 = vcmask 31751
      %4908 = vst.msk [vmem:[%s197 - $0x7] sm:$0x80] %vm4907, %v4859
      %4909 = vst.msk [vmem:[%s197 + $0x1] sm:$0xff] %vm232, %v4860
      %vm4910 = vcmask 30720
      %4911 = vst.msk [vmem:[%s197 + $0x9] sm:$0x7f] %vm4910, %v4861
      %4912 = vst.msk [vmem:[%s197 + $0x9] sm:$0x80] %vm4907, %v4862
      %4913 = vst.msk [vmem:[%s197 + $0x11] sm:$0xff] %vm232, %v4863
      %4914 = vst.msk [vmem:[%s197 + $0x19] sm:$0x7f] %vm4910, %v4864
      %4915 = vst.msk [vmem:[%s197 + $0x19] sm:$0x80] %vm4907, %v4865
      %4916 = vst.msk [vmem:[%s197 + $0x21] sm:$0xff] %vm232, %v4866
      %4917 = vst.msk [vmem:[%s197 + $0x29] sm:$0x7f] %vm4910, %v4867
      %4918 = vst.msk [vmem:[%s197 + $0x29] sm:$0x80] %vm4907, %v4868
      %4919 = vst.msk [vmem:[%s197 + $0x31] sm:$0xff] %vm232, %v4869
      %4920 = vst.msk [vmem:[%s197 + $0x39] sm:$0x7f] %vm4910, %v4870
      %4921 = vst.msk [vmem:[%s197 + $0x39] sm:$0x80] %vm4907, %v4871
      %4922 = vst.msk [vmem:[%s197 + $0x41] sm:$0xff] %vm232, %v4872
      %4923 = vst.msk [vmem:[%s197 + $0x49] sm:$0x7f] %vm4910, %v4873
      %4924 = vst.msk [vmem:[%s197 + $0x49] sm:$0x80] %vm4907, %v4874
      %4925 = vst.msk [vmem:[%s197 + $0x51] sm:$0xff] %vm232, %v4875
      %4926 = vst.msk [vmem:[%s197 + $0x59] sm:$0x7f] %vm4910, %v4876
      %4927 = vst.msk [vmem:[%s197 + $0x59] sm:$0x80] %vm4907, %v4877
      %4928 = vst.msk [vmem:[%s197 + $0x61] sm:$0xff] %vm232, %v4878
      %4929 = vst.msk [vmem:[%s197 + $0x69] sm:$0x7f] %vm4910, %v4879
      %4930 = vst.msk [vmem:[%s197 + $0x69] sm:$0x80] %vm4907, %v4880
      %4931 = vst.msk [vmem:[%s197 + $0x71] sm:$0xff] %vm232, %v4881
      %4932 = vst.msk [vmem:[%s197 + $0x79] sm:$0x7f] %vm4910, %v4882
      %4933 = vst.msk [vmem:[%s197 + $0x79] sm:$0x80] %vm4907, %v4883
      %4934 = vst.msk [vmem:[%s197 + $0x81] sm:$0xff] %vm232, %v4884
      %4935 = vst.msk [vmem:[%s197 + $0x89] sm:$0x7f] %vm4910, %v4885
      %4936 = vst.msk [vmem:[%s197 + $0x89] sm:$0x80] %vm4907, %v4886
      %4937 = vst.msk [vmem:[%s197 + $0x91] sm:$0xff] %vm232, %v4887
      %4938 = vst.msk [vmem:[%s197 + $0x99] sm:$0x7f] %vm4910, %v4888
      %4939 = vst.msk [vmem:[%s197 + $0x99] sm:$0x80] %vm4907, %v4889
      %4940 = vst.msk [vmem:[%s197 + $0xa1] sm:$0xff] %vm232, %v4890
      %4941 = vst.msk [vmem:[%s197 + $0xa9] sm:$0x7f] %vm4910, %v4891
      %4942 = vst.msk [vmem:[%s197 + $0xa9] sm:$0x80] %vm4907, %v4892
      %4943 = vst.msk [vmem:[%s197 + $0xb1] sm:$0xff] %vm232, %v4893
      %4944 = vst.msk [vmem:[%s197 + $0xb9] sm:$0x7f] %vm4910, %v4894
      %4945 = vst.msk [vmem:[%s197 + $0xb9] sm:$0x80] %vm4907, %v4895
      %4946 = vst.msk [vmem:[%s197 + $0xc1] sm:$0xff] %vm232, %v4896
      %4947 = vst.msk [vmem:[%s197 + $0xc9] sm:$0x7f] %vm4910, %v4897
      %4948 = vst.msk [vmem:[%s197 + $0xc9] sm:$0x80] %vm4907, %v4898
      %4949 = vst.msk [vmem:[%s197 + $0xd1] sm:$0xff] %vm232, %v4899
      %4950 = vst.msk [vmem:[%s197 + $0xd9] sm:$0x7f] %vm4910, %v4900
      %4951 = vst.msk [vmem:[%s197 + $0xd9] sm:$0x80] %vm4907, %v4901
      %4952 = vst.msk [vmem:[%s197 + $0xe1] sm:$0xff] %vm232, %v4902
      %4953 = vst.msk [vmem:[%s197 + $0xe9] sm:$0x7f] %vm4910, %v4903
      %4954 = vst.msk [vmem:[%s197 + $0xe9] sm:$0x80] %vm4907, %v4904
      %4955 = vst.msk [vmem:[%s197 + $0xf1] sm:$0xff] %vm232, %v4905
      %4956 = vst.msk [vmem:[%s197 + $0xf9] sm:$0x7f] %vm4910, %v4906
      %p4957 = scmp.lt.s32.totalorder %s15, 1
      %s4958 = scalar_select %p4957, %s15, 1
      %s4959 = smul.addr %s4958, 32
      %s4960 = smul.addr %s4959, 8
      %s4961 = scalar_lea.vmem %s4, %s4960
      // Predicated region
      $region37: #{_basic_block_forward_impl.1} parent=35 // pred_check
        %p4962 = pneg %p122
      $region38: #{_basic_block_forward_impl.1} parent=35 // pred_check_branch
        %4964 = sbr.rel (%p4962) target = $region40
      $region39: #{_basic_block_forward_impl.1} parent=35 // pred_region
        _
      $region40: #{_basic_block_forward_impl.1} parent=35 // pred_fallthru
        _
    $region36: #{_basic_block_forward_impl.1} parent=5 // pred_fallthru
      _
    %p4965 = scmp.le.s32.totalorder 2, %s10
    // Predicated region
    $region41: #{_basic_block_forward_impl.1} parent=5 // pred_check
      %p4966 = pneg %p4965
    $region42: #{_basic_block_forward_impl.1} parent=5 // pred_check_branch
      %4968 = sbr.rel (%p4966) target = $region44
    $region43: #{_basic_block_forward_impl.1} parent=5 // pred_region
      %s4969 = ssub.s32 %s10, 2
      // Predicated region
      $region45: #{_basic_block_forward_impl.1} parent=43 // pred_check
        %p4970 = pneg %p128
      $region46: #{_basic_block_forward_impl.1} parent=43 // pred_check_branch
        %4972 = sbr.rel (%p4970) target = $region48
      $region47: #{_basic_block_forward_impl.1} parent=43 // pred_region
        %p4973 = scmp.lt.s32.totalorder %s16, 1
        %s4974 = scalar_select %p4973, %s16, 1
        %s4975 = smul.addr %s4974, 32
        %s4976 = smul.addr %s4975, 8
        %s4977 = scalar_lea.vmem %s4, %s4976
      $region48: #{_basic_block_forward_impl.1} parent=43 // pred_fallthru
        _
    $region44: #{_basic_block_forward_impl.1} parent=5 // pred_fallthru
      _
  $region6: #{_basic_block_forward_impl.1} parent=0 // loop_footer
    %s14 = sadd.s32 1, %s10
  $region7: #{_basic_block_forward_impl.1} parent=0 // loop_footer_branch
    %9 = sbr.rel target = $region3
  $region8: #{_basic_block_forward_impl.1} parent=0 // loop_exit
    _

</llo_original>
